<compile_context>
chip_gen: v7x
topology: tpu7x:2x2x1
jax: 0.10.0
libtpu: 0.0.40
codegen_flags: <defaults>
</compile_context>

<pallas_src>
import functools
import math

import jax
import jax.numpy as jnp
import numpy as np
from jax import lax
from jax.experimental import pallas as pl
from jax.experimental.pallas import tpu as pltpu


# ---------------------------------------------------------------------------
# Host-side static helpers (relative-position bucketing, as in the PyTorch code)
# ---------------------------------------------------------------------------
def _make_log_bucket_position(relative_pos, bucket_size, max_position):
    relative_pos = np.asarray(relative_pos, dtype=np.int64)
    sign = np.sign(relative_pos)
    mid = bucket_size // 2
    abs_pos = np.where(
        (relative_pos < mid) & (relative_pos > -mid), mid - 1, np.abs(relative_pos)
    )
    log_pos = (
        np.ceil(
            np.log(abs_pos / mid) / math.log((max_position - 1) / mid) * (mid - 1)
        ).astype(np.int64)
        + mid
    )
    bucket_pos = np.where(abs_pos <= mid, relative_pos, log_pos * sign)
    return bucket_pos.astype(np.int64)


def _position_indices(seq_len, bucket_size, max_position):
    r = np.arange(max_position, dtype=np.int64)
    rel = r[:, None] - r[None, :]
    bucket = _make_log_bucket_position(rel, bucket_size, max_position)
    idx = bucket_size - 1 + bucket
    return idx[:seq_len, :seq_len]  # (S, S), values in [0, 2*bucket_size-2]


# ---------------------------------------------------------------------------
# The fused EncoderLayer kernel (one grid step == one batch element)
# ---------------------------------------------------------------------------
def _encoder_layer_kernel(
    # inputs
    x_ref, mask_ref, idx_ref, rel_ref,
    wq_ref, bq_ref, wk_ref, bk_ref, wv_ref, bv_ref, wo_ref, bo_ref,
    gamma_ref, beta_ref, w1a_ref, w1g_ref, w2_ref,
    # outputs
    o_ref,
    *, seq, num_heads, head_size, eps, scale, mxu_dtype,
):
    f32 = jnp.float32
    hidden = num_heads * head_size
    nrel = rel_ref.shape[0]

    def layer_norm(v):
        # centered (stable) form; all in f32
        mean = jnp.mean(v, axis=-1, keepdims=True)
        c = v - mean
        var = jnp.mean(c * c, axis=-1, keepdims=True)
        return c * lax.rsqrt(var + eps)

    def heads_first(t):
        # (rows, H) f32 -> (num_heads, rows, head_size), MXU dtype
        t = t.reshape(t.shape[0], num_heads, head_size)
        return jnp.transpose(t, (1, 0, 2)).astype(mxu_dtype)

    x = x_ref[0]                                        # (S, H) f32
    xn = layer_norm(x).astype(mxu_dtype)                # shared pre-LN (q == kv)

    wq = wq_ref[...]                                    # bf16 weights
    wk = wk_ref[...]
    q = jnp.dot(xn, wq, preferred_element_type=f32) + bq_ref[...]     # (S, H) f32
    k = jnp.dot(xn, wk, preferred_element_type=f32) + bk_ref[...]
    v = jnp.dot(xn, wv_ref[...], preferred_element_type=f32) + bv_ref[...]

    # relative-embedding projections fused into the same kernel (small R x H)
    rel = rel_ref[...]                                  # (R, H) bf16
    pos_q = jnp.dot(rel, wq, preferred_element_type=f32) + bq_ref[...]  # (R, H)
    pos_k = jnp.dot(rel, wk, preferred_element_type=f32) + bk_ref[...]  # (R, H)

    # fold the 1/sqrt(3*d) scale once: into q (content + c2p) and pos_q (p2c)
    qh = heads_first(q * scale)                         # (nh, S, d)
    kh = heads_first(k)                                 # (nh, S, d)
    vh = heads_first(v)                                 # (nh, S, d)
    pkh = heads_first(pos_k)                            # (nh, R, d)
    pqh = heads_first(pos_q * scale)                    # (nh, R, d)

    # head-batched MXU dots
    s_cc = jnp.einsum('hqd,hkd->hqk', qh, kh,
                      preferred_element_type=f32)       # (nh, S, S)
    c2p_all = jnp.einsum('hqd,hrd->hqr', qh, pkh,
                         preferred_element_type=f32)    # (nh, S, R)
    p2c_all = jnp.einsum('hkd,hrd->hkr', kh, pqh,
                         preferred_element_type=f32)    # (nh, S, R)

    # static bucket select over R: sel[q, k, r] = (idx[q, k] == r)
    idx = idx_ref[...]                                  # (S, S, 1) int32
    iota_r = lax.broadcasted_iota(jnp.int32, (seq, seq, nrel), 2)
    sel = (idx == iota_r).astype(f32)                   # (S, S, R)
    c2p = jnp.sum(c2p_all[:, :, None, :] * sel[None, :, :, :], axis=-1)  # (nh,S,S)
    p2c = jnp.sum(p2c_all[:, None, :, :] * sel[None, :, :, :], axis=-1)  # (nh,S,S)

    scores = s_cc + c2p + p2c                           # (nh, S, S) f32

    # masked softmax (finite fill, EUP reciprocal)
    maskrow = mask_ref[0]                               # (1, S) f32, 1.0 == masked
    scores = scores - maskrow[None, :, :] * 1e30
    m = jnp.max(scores, axis=-1, keepdims=True)
    e = jnp.exp(scores - m)
    denom = jnp.sum(e, axis=-1, keepdims=True)
    p = e * pl.reciprocal(denom, approx=True)
    p = p * (1.0 - maskrow)[None, :, :]                 # zero masked keys

    # context + output projection + post-LN (affine) + residual
    ctx = jnp.einsum('hqk,hkd->hqd', p.astype(mxu_dtype), vh,
                     preferred_element_type=f32)        # (nh, S, d)
    ctx = jnp.transpose(ctx, (1, 0, 2)).reshape(seq, hidden)   # (S, H), lane-dense
    attn = jnp.dot(ctx.astype(mxu_dtype), wo_ref[...],
                   preferred_element_type=f32) + bo_ref[...]
    attn = layer_norm(attn) * gamma_ref[...] + beta_ref[...]
    x1 = x + attn

    # feed-forward: LN -> Linear (value/gate halves) -> GeGLU(tanh) -> LN -> Linear
    xn2 = layer_norm(x1).astype(mxu_dtype)
    ha = jnp.dot(xn2, w1a_ref[...], preferred_element_type=f32)   # (S, I)
    hg = jnp.dot(xn2, w1g_ref[...], preferred_element_type=f32)   # (S, I)
    c = 0.7978845608028654  # sqrt(2/pi), tanh-approx GELU (matches approximate='tanh')
    gelu_g = 0.5 * hg * (1.0 + jnp.tanh(c * (hg + 0.044715 * hg * hg * hg)))
    u = ha * gelu_g
    un = layer_norm(u).astype(mxu_dtype)
    ffn = jnp.dot(un, w2_ref[...], preferred_element_type=f32)

    o_ref[0] = x1 + ffn


# ---------------------------------------------------------------------------
# Wrapper
# ---------------------------------------------------------------------------
def encoder_layer_forward(x, padding_mask, relative_embedding, params, *,
                          num_heads, position_bucket_size,
                          max_position_embeddings, layer_norm_eps=1e-7,
                          mxu_dtype=jnp.bfloat16):
    """x: (S, B, H) f32; padding_mask: (B, 1, 1, S) bool (True = masked);
    relative_embedding: (2*bucket-1, H) f32; params in PyTorch layout."""
    S, B, H = x.shape
    head_size = H // num_heads
    inter = params["w2"].shape[1]
    scale = 1.0 / math.sqrt(3 * head_size)
    R = relative_embedding.shape[0]

    # static relative-position bucket indices, kept as a tiny int32 tensor
    idx_np = _position_indices(S, position_bucket_size, max_position_embeddings)
    idx = jnp.asarray(idx_np.astype(np.int32)).reshape(S, S, 1)

    # batch-major layout; mask stays O(B*S)
    x_b = jnp.transpose(x, (1, 0, 2)).astype(jnp.float32)          # (B, S, H)
    mask_b = padding_mask.astype(jnp.float32).reshape(B, 1, S)     # (B, 1, S)

    cast = lambda w: w.astype(mxu_dtype)
    # weights transposed for right-multiplication (y = x @ W^T_torch == x @ w)
    wq = cast(params["wq"].T)
    wk = cast(params["wk"].T)
    wv = cast(params["wv"].T)
    wo = cast(params["wo"].T)
    b_q = params["bq"].reshape(1, H).astype(jnp.float32)
    b_k = params["bk"].reshape(1, H).astype(jnp.float32)
    b_v = params["bv"].reshape(1, H).astype(jnp.float32)
    b_o = params["bo"].reshape(1, H).astype(jnp.float32)
    gamma = params["gamma"].reshape(1, H).astype(jnp.float32)
    beta = params["beta"].reshape(1, H).astype(jnp.float32)
    w1a = cast(params["w1"][:inter, :].T)          # (H, I)  value half of GeGLU
    w1g = cast(params["w1"][inter:, :].T)          # (H, I)  gate half of GeGLU
    w2 = cast(params["w2"].T)                      # (I, H)
    rel = cast(relative_embedding)                 # (R, H)

    kernel = functools.partial(
        _encoder_layer_kernel, seq=S, num_heads=num_heads, head_size=head_size,
        eps=layer_norm_eps, scale=scale, mxu_dtype=mxu_dtype)

    def resident(arr):
        nd = arr.ndim
        return pl.BlockSpec(arr.shape, lambda b, _n=nd: (0,) * _n)

    in_specs = [
        pl.BlockSpec((1, S, H), lambda b: (b, 0, 0)),   # x
        pl.BlockSpec((1, 1, S), lambda b: (b, 0, 0)),   # padding mask row
        resident(idx), resident(rel),
        resident(wq), resident(b_q),
        resident(wk), resident(b_k),
        resident(wv), resident(b_v),
        resident(wo), resident(b_o),
        resident(gamma), resident(beta),
        resident(w1a), resident(w1g), resident(w2),
    ]

    y = pl.pallas_call(
        kernel,
        out_shape=jax.ShapeDtypeStruct((B, S, H), jnp.float32),
        grid=(B,),
        in_specs=in_specs,
        out_specs=pl.BlockSpec((1, S, H), lambda b: (b, 0, 0)),
        compiler_params=pltpu.CompilerParams(
            dimension_semantics=("parallel",),
            vmem_limit_bytes=32 * 1024 * 1024),
    )(x_b, mask_b, idx, rel,
      wq, b_q, wk, b_k, wv, b_v, wo, b_o,
      gamma, beta, w1a, w1g, w2)

    return jnp.transpose(y, (1, 0, 2))   # back to (S, B, H)


# ---------------------------------------------------------------------------
# NumPy (float64) reference mirroring the PyTorch forward exactly
# ---------------------------------------------------------------------------
def _reference_encoder_layer(x, padding_mask, rel_emb, params, *,
                             num_heads, position_indices, eps):
    x = np.asarray(x, dtype=np.float64)
    rel = np.asarray(rel_emb, dtype=np.float64)
    pm = np.asarray(padding_mask)                          # (B,1,1,S) bool
    p = {k: np.asarray(v, dtype=np.float64) for k, v in params.items()}
    S, B, H = x.shape
    d = H // num_heads
    scale = 1.0 / math.sqrt(3 * d)

    def ln(v, gamma=None, beta=None):
        mean = v.mean(-1, keepdims=True)
        var = ((v - mean) ** 2).mean(-1, keepdims=True)
        out = (v - mean) / np.sqrt(var + eps)
        if gamma is not None:
            out = out * gamma + beta
        return out

    xn = ln(x)
    q = xn @ p["wq"].T + p["bq"]
    k = xn @ p["wk"].T + p["bk"]
    v = xn @ p["wv"].T + p["bv"]
    pos_q = rel @ p["wq"].T + p["bq"]
    pos_k = rel @ p["wk"].T + p["bk"]
    idx = position_indices[:S, :S]
    qpos = pos_q[idx].reshape(S, S, num_heads, d)
    kpos = pos_k[idx].reshape(S, S, num_heads, d)

    q4 = q.reshape(S, B, num_heads, d).transpose(1, 2, 0, 3)
    k4 = k.reshape(S, B, num_heads, d).transpose(1, 2, 0, 3)
    v4 = v.reshape(S, B, num_heads, d).transpose(1, 2, 0, 3)

    scores = np.einsum("bhqd,bhkd->bhqk", q4, k4) * scale
    scores = scores + np.einsum("bhqd,qkhd->bhqk", q4, kpos * scale)
    scores = scores + np.einsum("bhkd,qkhd->bhqk", k4 * scale, qpos)

    scores = np.where(pm, -np.inf, scores)
    m = scores.max(-1, keepdims=True)
    e = np.exp(scores - m)
    probs = e / e.sum(-1, keepdims=True)
    probs = np.where(pm, 0.0, probs)

    ctx = np.einsum("bhqk,bhkd->bhqd", probs, v4)
    ctx = ctx.transpose(2, 0, 1, 3).reshape(S, B, H)
    attn = ctx @ p["wo"].T + p["bo"]
    attn = ln(attn, p["gamma"], p["beta"])
    x1 = x + attn

    xn2 = ln(x1)
    hcat = xn2 @ p["w1"].T
    inter = hcat.shape[-1] // 2
    a, g = hcat[..., :inter], hcat[..., inter:]
    gelu_g = 0.5 * g * (1.0 + np.tanh(
        math.sqrt(2.0 / math.pi) * (g + 0.044715 * g ** 3)))
    u = a * gelu_g
    un = ln(u)
    ffn = un @ p["w2"].T
    return x1 + ffn


# ---------------------------------------------------------------------------
# Self-test
# ---------------------------------------------------------------------------
if __name__ == "__main__":
    # small but lane-dense config: hidden = 128 fills all 128 lanes
    S, B = 8, 2
    H, num_heads = 128, 4
    intermediate = 256
    bucket, max_pos = 16, 64
    eps = 1e-7

    key = jax.random.PRNGKey(0)
    ks = jax.random.split(key, 16)
    std = math.sqrt(2.0 / (5.0 * H))

    def trunc(k, shape):
        return jax.random.truncated_normal(k, -2.0, 2.0, shape, jnp.float32) * std

    params = {
        "wq": trunc(ks[0], (H, H)),
        "wk": trunc(ks[1], (H, H)),
        "wv": trunc(ks[2], (H, H)),
        "wo": trunc(ks[3], (H, H)),
        "bq": 0.02 * jax.random.normal(ks[4], (H,), jnp.float32),
        "bk": 0.02 * jax.random.normal(ks[5], (H,), jnp.float32),
        "bv": 0.02 * jax.random.normal(ks[6], (H,), jnp.float32),
        "bo": 0.02 * jax.random.normal(ks[7], (H,), jnp.float32),
        "gamma": 1.0 + 0.1 * jax.random.normal(ks[8], (H,), jnp.float32),
        "beta": 0.02 * jax.random.normal(ks[9], (H,), jnp.float32),
        "w1": trunc(ks[10], (2 * intermediate, H)),
        "w2": trunc(ks[11], (H, intermediate)),
    }
    x = jax.random.normal(ks[12], (S, B, H), jnp.float32)
    relative_embedding = 0.02 * jax.random.normal(
        ks[13], (2 * bucket - 1, H), jnp.float32)

    pm_np = np.zeros((B, 1, 1, S), dtype=bool)
    pm_np[1, 0, 0, -2:] = True                       # pad last 2 keys of batch 1
    padding_mask = jnp.asarray(pm_np)

    y = encoder_layer_forward(
        x, padding_mask, relative_embedding, params,
        num_heads=num_heads, position_bucket_size=bucket,
        max_position_embeddings=max_pos, layer_norm_eps=eps)
    y = jax.block_until_ready(y)

    idx = _position_indices(S, bucket, max_pos)
    y_ref = _reference_encoder_layer(
        x, pm_np, relative_embedding, params,
        num_heads=num_heads, position_indices=idx, eps=eps)

    y_np = np.asarray(y, dtype=np.float64)
    assert y.shape == (S, B, H)
    # tolerance sized for bf16 MXU operands vs float64 reference
    assert np.allclose(y_np, y_ref, atol=4e-2, rtol=4e-2), (
        float(np.max(np.abs(y_np - y_ref))))

    print("KERNEL_OK")
</pallas_src>

<mosaic_0001>
module attributes {stable_mosaic.version = 11 : i64} {
  func.func @_encoder_layer_kernel(%arg0: i32, %arg1: memref<1x8x128xf32, #tpu.memory_space<vmem>>, %arg2: memref<1x1x8xf32, #tpu.memory_space<vmem>>, %arg3: memref<8x8x1xi32, #tpu.memory_space<vmem>>, %arg4: memref<31x128xbf16, #tpu.memory_space<vmem>>, %arg5: memref<128x128xbf16, #tpu.memory_space<vmem>>, %arg6: memref<1x128xf32, #tpu.memory_space<vmem>>, %arg7: memref<128x128xbf16, #tpu.memory_space<vmem>>, %arg8: memref<1x128xf32, #tpu.memory_space<vmem>>, %arg9: memref<128x128xbf16, #tpu.memory_space<vmem>>, %arg10: memref<1x128xf32, #tpu.memory_space<vmem>>, %arg11: memref<128x128xbf16, #tpu.memory_space<vmem>>, %arg12: memref<1x128xf32, #tpu.memory_space<vmem>>, %arg13: memref<1x128xf32, #tpu.memory_space<vmem>>, %arg14: memref<1x128xf32, #tpu.memory_space<vmem>>, %arg15: memref<128x256xbf16, #tpu.memory_space<vmem>>, %arg16: memref<128x256xbf16, #tpu.memory_space<vmem>>, %arg17: memref<256x128xbf16, #tpu.memory_space<vmem>>, %arg18: memref<1x8x128xf32, #tpu.memory_space<vmem>>) attributes {dimension_semantics = [#tpu.dimension_semantics<parallel>], iteration_bounds = array<i64: 2>, scalar_prefetch = 0 : i64, scratch_operands = 0 : i64, tpu.core_type = #tpu.core_type<tc>, window_params = [{transform_indices = @transform_0, window_bounds = array<i64: 1, 8, 128>}, {transform_indices = @transform_1, window_bounds = array<i64: 1, 1, 8>}, {pipeline_mode = #tpu.pipeline_mode<synchronous>, transform_indices = @transform_2, window_bounds = array<i64: 8, 8, 1>}, {pipeline_mode = #tpu.pipeline_mode<synchronous>, transform_indices = @transform_3, window_bounds = array<i64: 31, 128>}, {pipeline_mode = #tpu.pipeline_mode<synchronous>, transform_indices = @transform_4, window_bounds = array<i64: 128, 128>}, {pipeline_mode = #tpu.pipeline_mode<synchronous>, transform_indices = @transform_5, window_bounds = array<i64: 1, 128>}, {pipeline_mode = #tpu.pipeline_mode<synchronous>, transform_indices = @transform_6, window_bounds = array<i64: 128, 128>}, {pipeline_mode = #tpu.pipeline_mode<synchronous>, transform_indices = @transform_7, window_bounds = array<i64: 1, 128>}, {pipeline_mode = #tpu.pipeline_mode<synchronous>, transform_indices = @transform_8, window_bounds = array<i64: 128, 128>}, {pipeline_mode = #tpu.pipeline_mode<synchronous>, transform_indices = @transform_9, window_bounds = array<i64: 1, 128>}, {pipeline_mode = #tpu.pipeline_mode<synchronous>, transform_indices = @transform_10, window_bounds = array<i64: 128, 128>}, {pipeline_mode = #tpu.pipeline_mode<synchronous>, transform_indices = @transform_11, window_bounds = array<i64: 1, 128>}, {pipeline_mode = #tpu.pipeline_mode<synchronous>, transform_indices = @transform_12, window_bounds = array<i64: 1, 128>}, {pipeline_mode = #tpu.pipeline_mode<synchronous>, transform_indices = @transform_13, window_bounds = array<i64: 1, 128>}, {pipeline_mode = #tpu.pipeline_mode<synchronous>, transform_indices = @transform_14, window_bounds = array<i64: 128, 256>}, {pipeline_mode = #tpu.pipeline_mode<synchronous>, transform_indices = @transform_15, window_bounds = array<i64: 128, 256>}, {pipeline_mode = #tpu.pipeline_mode<synchronous>, transform_indices = @transform_16, window_bounds = array<i64: 256, 128>}, {transform_indices = @transform_17, window_bounds = array<i64: 1, 8, 128>}]} {
    %c0 = arith.constant 0 : index
    %c0_0 = arith.constant 0 : index
    %c0_1 = arith.constant 0 : index
    %0 = vector.load %arg1[%c0, %c0_0, %c0_1] : memref<1x8x128xf32, #tpu.memory_space<vmem>>, vector<1x8x128xf32>
    %1 = vector.shape_cast %0 : vector<1x8x128xf32> to vector<8x128xf32>
    %cst = arith.constant dense<0.000000e+00> : vector<8xf32>
    %2 = vector.multi_reduction <add>, %1, %cst [1] : vector<8x128xf32> to vector<8xf32>
    %3 = vector.shape_cast %2 : vector<8xf32> to vector<8x1xf32>
    %cst_2 = arith.constant 1.280000e+02 : f32
    %4 = vector.broadcast %cst_2 : f32 to vector<8x1xf32>
    %5 = arith.divf %3, %4 : vector<8x1xf32>
    %6 = vector.broadcast %5 : vector<8x1xf32> to vector<8x128xf32>
    %7 = arith.subf %1, %6 : vector<8x128xf32>
    %8 = arith.mulf %7, %7 : vector<8x128xf32>
    %cst_3 = arith.constant dense<0.000000e+00> : vector<8xf32>
    %9 = vector.multi_reduction <add>, %8, %cst_3 [1] : vector<8x128xf32> to vector<8xf32>
    %10 = vector.shape_cast %9 : vector<8xf32> to vector<8x1xf32>
    %cst_4 = arith.constant 1.280000e+02 : f32
    %11 = vector.broadcast %cst_4 : f32 to vector<8x1xf32>
    %12 = arith.divf %10, %11 : vector<8x1xf32>
    %cst_5 = arith.constant 1.000000e-07 : f32
    %13 = vector.broadcast %cst_5 : f32 to vector<8x1xf32>
    %14 = arith.addf %12, %13 : vector<8x1xf32>
    %15 = math.rsqrt %14 : vector<8x1xf32>
    %16 = vector.broadcast %15 : vector<8x1xf32> to vector<8x128xf32>
    %17 = arith.mulf %7, %16 : vector<8x128xf32>
    %18 = arith.truncf %17 : vector<8x128xf32> to vector<8x128xbf16>
    %c0_6 = arith.constant 0 : index
    %c0_7 = arith.constant 0 : index
    %19 = vector.load %arg5[%c0_6, %c0_7] : memref<128x128xbf16, #tpu.memory_space<vmem>>, vector<128x128xbf16>
    %c0_8 = arith.constant 0 : index
    %c0_9 = arith.constant 0 : index
    %20 = vector.load %arg7[%c0_8, %c0_9] : memref<128x128xbf16, #tpu.memory_space<vmem>>, vector<128x128xbf16>
    %cst_10 = arith.constant dense<0.000000e+00> : vector<8x128xf32>
    %21 = tpu.matmul %18, %19, %cst_10 {dimension_numbers = #tpu.dot_dimension_numbers<[1], [0], [0], [1], [0, 0, 1, 1], [], []>} : vector<8x128xbf16>, vector<128x128xbf16>, vector<8x128xf32> -> vector<8x128xf32>
    %c0_11 = arith.constant 0 : index
    %c0_12 = arith.constant 0 : index
    %22 = vector.load %arg6[%c0_11, %c0_12] : memref<1x128xf32, #tpu.memory_space<vmem>>, vector<1x128xf32>
    %23 = vector.broadcast %22 : vector<1x128xf32> to vector<8x128xf32>
    %24 = arith.addf %21, %23 : vector<8x128xf32>
    %cst_13 = arith.constant dense<0.000000e+00> : vector<8x128xf32>
    %25 = tpu.matmul %18, %20, %cst_13 {dimension_numbers = #tpu.dot_dimension_numbers<[1], [0], [0], [1], [0, 0, 1, 1], [], []>} : vector<8x128xbf16>, vector<128x128xbf16>, vector<8x128xf32> -> vector<8x128xf32>
    %c0_14 = arith.constant 0 : index
    %c0_15 = arith.constant 0 : index
    %26 = vector.load %arg8[%c0_14, %c0_15] : memref<1x128xf32, #tpu.memory_space<vmem>>, vector<1x128xf32>
    %27 = vector.broadcast %26 : vector<1x128xf32> to vector<8x128xf32>
    %28 = arith.addf %25, %27 : vector<8x128xf32>
    %c0_16 = arith.constant 0 : index
    %c0_17 = arith.constant 0 : index
    %29 = vector.load %arg9[%c0_16, %c0_17] : memref<128x128xbf16, #tpu.memory_space<vmem>>, vector<128x128xbf16>
    %cst_18 = arith.constant dense<0.000000e+00> : vector<8x128xf32>
    %30 = tpu.matmul %18, %29, %cst_18 {dimension_numbers = #tpu.dot_dimension_numbers<[1], [0], [0], [1], [0, 0, 1, 1], [], []>} : vector<8x128xbf16>, vector<128x128xbf16>, vector<8x128xf32> -> vector<8x128xf32>
    %c0_19 = arith.constant 0 : index
    %c0_20 = arith.constant 0 : index
    %31 = vector.load %arg10[%c0_19, %c0_20] : memref<1x128xf32, #tpu.memory_space<vmem>>, vector<1x128xf32>
    %32 = vector.broadcast %31 : vector<1x128xf32> to vector<8x128xf32>
    %33 = arith.addf %30, %32 : vector<8x128xf32>
    %c0_21 = arith.constant 0 : index
    %c0_22 = arith.constant 0 : index
    %34 = vector.load %arg4[%c0_21, %c0_22] : memref<31x128xbf16, #tpu.memory_space<vmem>>, vector<31x128xbf16>
    %cst_23 = arith.constant dense<0.000000e+00> : vector<31x128xf32>
    %35 = tpu.matmul %34, %19, %cst_23 {dimension_numbers = #tpu.dot_dimension_numbers<[1], [0], [0], [1], [0, 0, 1, 1], [], []>} : vector<31x128xbf16>, vector<128x128xbf16>, vector<31x128xf32> -> vector<31x128xf32>
    %c0_24 = arith.constant 0 : index
    %c0_25 = arith.constant 0 : index
    %36 = vector.load %arg6[%c0_24, %c0_25] : memref<1x128xf32, #tpu.memory_space<vmem>>, vector<1x128xf32>
    %37 = vector.broadcast %36 : vector<1x128xf32> to vector<31x128xf32>
    %38 = arith.addf %35, %37 : vector<31x128xf32>
    %cst_26 = arith.constant dense<0.000000e+00> : vector<31x128xf32>
    %39 = tpu.matmul %34, %20, %cst_26 {dimension_numbers = #tpu.dot_dimension_numbers<[1], [0], [0], [1], [0, 0, 1, 1], [], []>} : vector<31x128xbf16>, vector<128x128xbf16>, vector<31x128xf32> -> vector<31x128xf32>
    %c0_27 = arith.constant 0 : index
    %c0_28 = arith.constant 0 : index
    %40 = vector.load %arg8[%c0_27, %c0_28] : memref<1x128xf32, #tpu.memory_space<vmem>>, vector<1x128xf32>
    %41 = vector.broadcast %40 : vector<1x128xf32> to vector<31x128xf32>
    %42 = arith.addf %39, %41 : vector<31x128xf32>
    %cst_29 = arith.constant 0.102062076 : f32
    %43 = vector.broadcast %cst_29 : f32 to vector<8x128xf32>
    %44 = arith.mulf %24, %43 : vector<8x128xf32>
    %45 = vector.shape_cast %44 : vector<8x128xf32> to vector<8x4x32xf32>
    %46 = tpu.transpose %45, [1, 0, 2] : vector<8x4x32xf32> -> vector<4x8x32xf32>
    %47 = arith.truncf %46 : vector<4x8x32xf32> to vector<4x8x32xbf16>
    %48 = vector.shape_cast %28 : vector<8x128xf32> to vector<8x4x32xf32>
    %49 = tpu.transpose %48, [1, 0, 2] : vector<8x4x32xf32> -> vector<4x8x32xf32>
    %50 = arith.truncf %49 : vector<4x8x32xf32> to vector<4x8x32xbf16>
    %51 = vector.shape_cast %33 : vector<8x128xf32> to vector<8x4x32xf32>
    %52 = tpu.transpose %51, [1, 0, 2] : vector<8x4x32xf32> -> vector<4x8x32xf32>
    %53 = arith.truncf %52 : vector<4x8x32xf32> to vector<4x8x32xbf16>
    %54 = vector.shape_cast %42 : vector<31x128xf32> to vector<31x4x32xf32>
    %55 = tpu.transpose %54, [1, 0, 2] : vector<31x4x32xf32> -> vector<4x31x32xf32>
    %56 = arith.truncf %55 : vector<4x31x32xf32> to vector<4x31x32xbf16>
    %cst_30 = arith.constant 0.102062076 : f32
    %57 = vector.broadcast %cst_30 : f32 to vector<31x128xf32>
    %58 = arith.mulf %38, %57 : vector<31x128xf32>
    %59 = vector.shape_cast %58 : vector<31x128xf32> to vector<31x4x32xf32>
    %60 = tpu.transpose %59, [1, 0, 2] : vector<31x4x32xf32> -> vector<4x31x32xf32>
    %61 = arith.truncf %60 : vector<4x31x32xf32> to vector<4x31x32xbf16>
    "tpu.trace_start"() <{level = 10 : i32, message = "hqd,hkd->hqk"}> : () -> ()
    %cst_31 = arith.constant dense<0.000000e+00> : vector<4x8x8xf32>
    %62 = tpu.matmul %47, %50, %cst_31 {dimension_numbers = #tpu.dot_dimension_numbers<[2], [2], [1], [1], [0, 0, 0, 1, 1, 1], [0], [0]>} : vector<4x8x32xbf16>, vector<4x8x32xbf16>, vector<4x8x8xf32> -> vector<4x8x8xf32>
    "tpu.trace_stop"() : () -> ()
    "tpu.trace_start"() <{level = 10 : i32, message = "hqd,hrd->hqr"}> : () -> ()
    %cst_32 = arith.constant dense<0.000000e+00> : vector<4x8x31xf32>
    %63 = tpu.matmul %47, %56, %cst_32 {dimension_numbers = #tpu.dot_dimension_numbers<[2], [2], [1], [1], [0, 0, 0, 1, 1, 1], [0], [0]>} : vector<4x8x32xbf16>, vector<4x31x32xbf16>, vector<4x8x31xf32> -> vector<4x8x31xf32>
    "tpu.trace_stop"() : () -> ()
    "tpu.trace_start"() <{level = 10 : i32, message = "hkd,hrd->hkr"}> : () -> ()
    %cst_33 = arith.constant dense<0.000000e+00> : vector<4x8x31xf32>
    %64 = tpu.matmul %50, %61, %cst_33 {dimension_numbers = #tpu.dot_dimension_numbers<[2], [2], [1], [1], [0, 0, 0, 1, 1, 1], [0], [0]>} : vector<4x8x32xbf16>, vector<4x31x32xbf16>, vector<4x8x31xf32> -> vector<4x8x31xf32>
    "tpu.trace_stop"() : () -> ()
    %c0_34 = arith.constant 0 : index
    %c0_35 = arith.constant 0 : index
    %c0_36 = arith.constant 0 : index
    %65 = vector.load %arg3[%c0_34, %c0_35, %c0_36] : memref<8x8x1xi32, #tpu.memory_space<vmem>>, vector<8x8x1xi32>
    %66 = tpu.iota {dimensions = array<i32: 2>} : vector<8x8x31xi32>
    %67 = vector.broadcast %65 : vector<8x8x1xi32> to vector<8x8x31xi32>
    %68 = arith.cmpi eq, %67, %66 : vector<8x8x31xi32>
    %69 = arith.extui %68 : vector<8x8x31xi1> to vector<8x8x31xi32>
    %70 = arith.sitofp %69 : vector<8x8x31xi32> to vector<8x8x31xf32>
    %71 = vector.shape_cast %63 : vector<4x8x31xf32> to vector<4x8x1x31xf32>
    %72 = vector.shape_cast %70 : vector<8x8x31xf32> to vector<1x8x8x31xf32>
    %73 = vector.broadcast %71 : vector<4x8x1x31xf32> to vector<4x8x8x31xf32>
    %74 = vector.broadcast %72 : vector<1x8x8x31xf32> to vector<4x8x8x31xf32>
    %75 = arith.mulf %73, %74 : vector<4x8x8x31xf32>
    %cst_37 = arith.constant dense<0.000000e+00> : vector<4x8x8xf32>
    %76 = vector.multi_reduction <add>, %75, %cst_37 [3] : vector<4x8x8x31xf32> to vector<4x8x8xf32>
    %77 = vector.shape_cast %64 : vector<4x8x31xf32> to vector<4x1x8x31xf32>
    %78 = vector.shape_cast %70 : vector<8x8x31xf32> to vector<1x8x8x31xf32>
    %79 = vector.broadcast %77 : vector<4x1x8x31xf32> to vector<4x8x8x31xf32>
    %80 = vector.broadcast %78 : vector<1x8x8x31xf32> to vector<4x8x8x31xf32>
    %81 = arith.mulf %79, %80 : vector<4x8x8x31xf32>
    %cst_38 = arith.constant dense<0.000000e+00> : vector<4x8x8xf32>
    %82 = vector.multi_reduction <add>, %81, %cst_38 [3] : vector<4x8x8x31xf32> to vector<4x8x8xf32>
    %83 = arith.addf %62, %76 : vector<4x8x8xf32>
    %84 = arith.addf %83, %82 : vector<4x8x8xf32>
    %c0_39 = arith.constant 0 : index
    %c0_40 = arith.constant 0 : index
    %c0_41 = arith.constant 0 : index
    %85 = vector.load %arg2[%c0_39, %c0_40, %c0_41] : memref<1x1x8xf32, #tpu.memory_space<vmem>>, vector<1x1x8xf32>
    %86 = vector.shape_cast %85 : vector<1x1x8xf32> to vector<1x8xf32>
    %87 = vector.shape_cast %86 : vector<1x8xf32> to vector<1x1x8xf32>
    %cst_42 = arith.constant 1.000000e+30 : f32
    %88 = vector.broadcast %cst_42 : f32 to vector<1x1x8xf32>
    %89 = arith.mulf %87, %88 : vector<1x1x8xf32>
    %90 = vector.broadcast %89 : vector<1x1x8xf32> to vector<4x8x8xf32>
    %91 = arith.subf %84, %90 : vector<4x8x8xf32>
    %cst_43 = arith.constant dense<0xFF800000> : vector<4x8xf32>
    %92 = vector.multi_reduction <maximumf>, %91, %cst_43 [2] : vector<4x8x8xf32> to vector<4x8xf32>
    %93 = vector.shape_cast %92 : vector<4x8xf32> to vector<4x8x1xf32>
    %94 = vector.broadcast %93 : vector<4x8x1xf32> to vector<4x8x8xf32>
    %95 = arith.subf %91, %94 : vector<4x8x8xf32>
    %96 = math.exp %95 : vector<4x8x8xf32>
    %cst_44 = arith.constant dense<0.000000e+00> : vector<4x8xf32>
    %97 = vector.multi_reduction <add>, %96, %cst_44 [2] : vector<4x8x8xf32> to vector<4x8xf32>
    %98 = vector.shape_cast %97 : vector<4x8xf32> to vector<4x8x1xf32>
    %99 = tpu.reciprocal %98 {approx = true} : vector<4x8x1xf32> -> vector<4x8x1xf32>
    %100 = vector.broadcast %99 : vector<4x8x1xf32> to vector<4x8x8xf32>
    %101 = arith.mulf %96, %100 : vector<4x8x8xf32>
    %cst_45 = arith.constant 1.000000e+00 : f32
    %102 = vector.broadcast %cst_45 : f32 to vector<1x8xf32>
    %103 = arith.subf %102, %86 : vector<1x8xf32>
    %104 = vector.shape_cast %103 : vector<1x8xf32> to vector<1x1x8xf32>
    %105 = vector.broadcast %104 : vector<1x1x8xf32> to vector<4x8x8xf32>
    %106 = arith.mulf %101, %105 : vector<4x8x8xf32>
    %107 = arith.truncf %106 : vector<4x8x8xf32> to vector<4x8x8xbf16>
    "tpu.trace_start"() <{level = 10 : i32, message = "hqk,hkd->hqd"}> : () -> ()
    %cst_46 = arith.constant dense<0.000000e+00> : vector<4x8x32xf32>
    %108 = tpu.matmul %107, %53, %cst_46 {dimension_numbers = #tpu.dot_dimension_numbers<[2], [1], [1], [2], [0, 0, 0, 1, 1, 2], [0], [0]>} : vector<4x8x8xbf16>, vector<4x8x32xbf16>, vector<4x8x32xf32> -> vector<4x8x32xf32>
    "tpu.trace_stop"() : () -> ()
    %109 = tpu.transpose %108, [1, 0, 2] : vector<4x8x32xf32> -> vector<8x4x32xf32>
    %110 = vector.shape_cast %109 : vector<8x4x32xf32> to vector<8x128xf32>
    %111 = arith.truncf %110 : vector<8x128xf32> to vector<8x128xbf16>
    %c0_47 = arith.constant 0 : index
    %c0_48 = arith.constant 0 : index
    %112 = vector.load %arg11[%c0_47, %c0_48] : memref<128x128xbf16, #tpu.memory_space<vmem>>, vector<128x128xbf16>
    %cst_49 = arith.constant dense<0.000000e+00> : vector<8x128xf32>
    %113 = tpu.matmul %111, %112, %cst_49 {dimension_numbers = #tpu.dot_dimension_numbers<[1], [0], [0], [1], [0, 0, 1, 1], [], []>} : vector<8x128xbf16>, vector<128x128xbf16>, vector<8x128xf32> -> vector<8x128xf32>
    %c0_50 = arith.constant 0 : index
    %c0_51 = arith.constant 0 : index
    %114 = vector.load %arg12[%c0_50, %c0_51] : memref<1x128xf32, #tpu.memory_space<vmem>>, vector<1x128xf32>
    %115 = vector.broadcast %114 : vector<1x128xf32> to vector<8x128xf32>
    %116 = arith.addf %113, %115 : vector<8x128xf32>
    %cst_52 = arith.constant dense<0.000000e+00> : vector<8xf32>
    %117 = vector.multi_reduction <add>, %116, %cst_52 [1] : vector<8x128xf32> to vector<8xf32>
    %118 = vector.shape_cast %117 : vector<8xf32> to vector<8x1xf32>
    %cst_53 = arith.constant 1.280000e+02 : f32
    %119 = vector.broadcast %cst_53 : f32 to vector<8x1xf32>
    %120 = arith.divf %118, %119 : vector<8x1xf32>
    %121 = vector.broadcast %120 : vector<8x1xf32> to vector<8x128xf32>
    %122 = arith.subf %116, %121 : vector<8x128xf32>
    %123 = arith.mulf %122, %122 : vector<8x128xf32>
    %cst_54 = arith.constant dense<0.000000e+00> : vector<8xf32>
    %124 = vector.multi_reduction <add>, %123, %cst_54 [1] : vector<8x128xf32> to vector<8xf32>
    %125 = vector.shape_cast %124 : vector<8xf32> to vector<8x1xf32>
    %cst_55 = arith.constant 1.280000e+02 : f32
    %126 = vector.broadcast %cst_55 : f32 to vector<8x1xf32>
    %127 = arith.divf %125, %126 : vector<8x1xf32>
    %cst_56 = arith.constant 1.000000e-07 : f32
    %128 = vector.broadcast %cst_56 : f32 to vector<8x1xf32>
    %129 = arith.addf %127, %128 : vector<8x1xf32>
    %130 = math.rsqrt %129 : vector<8x1xf32>
    %131 = vector.broadcast %130 : vector<8x1xf32> to vector<8x128xf32>
    %132 = arith.mulf %122, %131 : vector<8x128xf32>
    %c0_57 = arith.constant 0 : index
    %c0_58 = arith.constant 0 : index
    %133 = vector.load %arg13[%c0_57, %c0_58] : memref<1x128xf32, #tpu.memory_space<vmem>>, vector<1x128xf32>
    %134 = vector.broadcast %133 : vector<1x128xf32> to vector<8x128xf32>
    %135 = arith.mulf %132, %134 : vector<8x128xf32>
    %c0_59 = arith.constant 0 : index
    %c0_60 = arith.constant 0 : index
    %136 = vector.load %arg14[%c0_59, %c0_60] : memref<1x128xf32, #tpu.memory_space<vmem>>, vector<1x128xf32>
    %137 = vector.broadcast %136 : vector<1x128xf32> to vector<8x128xf32>
    %138 = arith.addf %135, %137 : vector<8x128xf32>
    %139 = arith.addf %1, %138 : vector<8x128xf32>
    %cst_61 = arith.constant dense<0.000000e+00> : vector<8xf32>
    %140 = vector.multi_reduction <add>, %139, %cst_61 [1] : vector<8x128xf32> to vector<8xf32>
    %141 = vector.shape_cast %140 : vector<8xf32> to vector<8x1xf32>
    %cst_62 = arith.constant 1.280000e+02 : f32
    %142 = vector.broadcast %cst_62 : f32 to vector<8x1xf32>
    %143 = arith.divf %141, %142 : vector<8x1xf32>
    %144 = vector.broadcast %143 : vector<8x1xf32> to vector<8x128xf32>
    %145 = arith.subf %139, %144 : vector<8x128xf32>
    %146 = arith.mulf %145, %145 : vector<8x128xf32>
    %cst_63 = arith.constant dense<0.000000e+00> : vector<8xf32>
    %147 = vector.multi_reduction <add>, %146, %cst_63 [1] : vector<8x128xf32> to vector<8xf32>
    %148 = vector.shape_cast %147 : vector<8xf32> to vector<8x1xf32>
    %cst_64 = arith.constant 1.280000e+02 : f32
    %149 = vector.broadcast %cst_64 : f32 to vector<8x1xf32>
    %150 = arith.divf %148, %149 : vector<8x1xf32>
    %cst_65 = arith.constant 1.000000e-07 : f32
    %151 = vector.broadcast %cst_65 : f32 to vector<8x1xf32>
    %152 = arith.addf %150, %151 : vector<8x1xf32>
    %153 = math.rsqrt %152 : vector<8x1xf32>
    %154 = vector.broadcast %153 : vector<8x1xf32> to vector<8x128xf32>
    %155 = arith.mulf %145, %154 : vector<8x128xf32>
    %156 = arith.truncf %155 : vector<8x128xf32> to vector<8x128xbf16>
    %c0_66 = arith.constant 0 : index
    %c0_67 = arith.constant 0 : index
    %157 = vector.load %arg15[%c0_66, %c0_67] : memref<128x256xbf16, #tpu.memory_space<vmem>>, vector<128x256xbf16>
    %cst_68 = arith.constant dense<0.000000e+00> : vector<8x256xf32>
    %158 = tpu.matmul %156, %157, %cst_68 {dimension_numbers = #tpu.dot_dimension_numbers<[1], [0], [0], [1], [0, 0, 1, 1], [], []>} : vector<8x128xbf16>, vector<128x256xbf16>, vector<8x256xf32> -> vector<8x256xf32>
    %c0_69 = arith.constant 0 : index
    %c0_70 = arith.constant 0 : index
    %159 = vector.load %arg16[%c0_69, %c0_70] : memref<128x256xbf16, #tpu.memory_space<vmem>>, vector<128x256xbf16>
    %cst_71 = arith.constant dense<0.000000e+00> : vector<8x256xf32>
    %160 = tpu.matmul %156, %159, %cst_71 {dimension_numbers = #tpu.dot_dimension_numbers<[1], [0], [0], [1], [0, 0, 1, 1], [], []>} : vector<8x128xbf16>, vector<128x256xbf16>, vector<8x256xf32> -> vector<8x256xf32>
    %cst_72 = arith.constant 5.000000e-01 : f32
    %161 = vector.broadcast %cst_72 : f32 to vector<8x256xf32>
    %162 = arith.mulf %161, %160 : vector<8x256xf32>
    %cst_73 = arith.constant 4.471500e-02 : f32
    %163 = vector.broadcast %cst_73 : f32 to vector<8x256xf32>
    %164 = arith.mulf %163, %160 : vector<8x256xf32>
    %165 = arith.mulf %164, %160 : vector<8x256xf32>
    %166 = arith.mulf %165, %160 : vector<8x256xf32>
    %167 = arith.addf %160, %166 : vector<8x256xf32>
    %cst_74 = arith.constant 0.797884583 : f32
    %168 = vector.broadcast %cst_74 : f32 to vector<8x256xf32>
    %169 = arith.mulf %168, %167 : vector<8x256xf32>
    %170 = math.tanh %169 : vector<8x256xf32>
    %cst_75 = arith.constant 1.000000e+00 : f32
    %171 = vector.broadcast %cst_75 : f32 to vector<8x256xf32>
    %172 = arith.addf %171, %170 : vector<8x256xf32>
    %173 = arith.mulf %162, %172 : vector<8x256xf32>
    %174 = arith.mulf %158, %173 : vector<8x256xf32>
    %cst_76 = arith.constant dense<0.000000e+00> : vector<8xf32>
    %175 = vector.multi_reduction <add>, %174, %cst_76 [1] : vector<8x256xf32> to vector<8xf32>
    %176 = vector.shape_cast %175 : vector<8xf32> to vector<8x1xf32>
    %cst_77 = arith.constant 2.560000e+02 : f32
    %177 = vector.broadcast %cst_77 : f32 to vector<8x1xf32>
    %178 = arith.divf %176, %177 : vector<8x1xf32>
    %179 = vector.broadcast %178 : vector<8x1xf32> to vector<8x256xf32>
    %180 = arith.subf %174, %179 : vector<8x256xf32>
    %181 = arith.mulf %180, %180 : vector<8x256xf32>
    %cst_78 = arith.constant dense<0.000000e+00> : vector<8xf32>
    %182 = vector.multi_reduction <add>, %181, %cst_78 [1] : vector<8x256xf32> to vector<8xf32>
    %183 = vector.shape_cast %182 : vector<8xf32> to vector<8x1xf32>
    %cst_79 = arith.constant 2.560000e+02 : f32
    %184 = vector.broadcast %cst_79 : f32 to vector<8x1xf32>
    %185 = arith.divf %183, %184 : vector<8x1xf32>
    %cst_80 = arith.constant 1.000000e-07 : f32
    %186 = vector.broadcast %cst_80 : f32 to vector<8x1xf32>
    %187 = arith.addf %185, %186 : vector<8x1xf32>
    %188 = math.rsqrt %187 : vector<8x1xf32>
    %189 = vector.broadcast %188 : vector<8x1xf32> to vector<8x256xf32>
    %190 = arith.mulf %180, %189 : vector<8x256xf32>
    %191 = arith.truncf %190 : vector<8x256xf32> to vector<8x256xbf16>
    %c0_81 = arith.constant 0 : index
    %c0_82 = arith.constant 0 : index
    %192 = vector.load %arg17[%c0_81, %c0_82] : memref<256x128xbf16, #tpu.memory_space<vmem>>, vector<256x128xbf16>
    %cst_83 = arith.constant dense<0.000000e+00> : vector<8x128xf32>
    %193 = tpu.matmul %191, %192, %cst_83 {dimension_numbers = #tpu.dot_dimension_numbers<[1], [0], [0], [1], [0, 0, 1, 1], [], []>} : vector<8x256xbf16>, vector<256x128xbf16>, vector<8x128xf32> -> vector<8x128xf32>
    %194 = arith.addf %139, %193 : vector<8x128xf32>
    %c0_84 = arith.constant 0 : index
    %c0_85 = arith.constant 0 : index
    %c0_86 = arith.constant 0 : index
    %195 = vector.load %arg18[%c0_84, %c0_85, %c0_86] : memref<1x8x128xf32, #tpu.memory_space<vmem>>, vector<1x8x128xf32>
    %196 = vector.shape_cast %195 : vector<1x8x128xf32> to vector<8x128xf32>
    %197 = vector.shape_cast %194 : vector<8x128xf32> to vector<1x8x128xf32>
    tpu.vector_store %arg18[%c0_84, %c0_85, %c0_86], %197 {strides = array<i32>} : memref<1x8x128xf32, #tpu.memory_space<vmem>>, vector<1x8x128xf32>,
    return
  }
  func.func @transform_0(%arg0: i32) -> (i32, i32, i32) {
    %c0_i32 = arith.constant 0 : i32
    %c0_i32_0 = arith.constant 0 : i32
    %c0_i32_1 = arith.constant 0 : i32
    return %arg0, %c0_i32, %c0_i32_0 : i32, i32, i32
  }
  func.func @transform_1(%arg0: i32) -> (i32, i32, i32) {
    %c0_i32 = arith.constant 0 : i32
    %c0_i32_0 = arith.constant 0 : i32
    %c0_i32_1 = arith.constant 0 : i32
    return %arg0, %c0_i32, %c0_i32_0 : i32, i32, i32
  }
  func.func @transform_2(%arg0: i32) -> (i32, i32, i32) {
    %c0_i32 = arith.constant 0 : i32
    %c0_i32_0 = arith.constant 0 : i32
    %c0_i32_1 = arith.constant 0 : i32
    %c0_i32_2 = arith.constant 0 : i32
    return %c0_i32, %c0_i32_0, %c0_i32_1 : i32, i32, i32
  }
  func.func @transform_3(%arg0: i32) -> (i32, i32) {
    %c0_i32 = arith.constant 0 : i32
    %c0_i32_0 = arith.constant 0 : i32
    %c0_i32_1 = arith.constant 0 : i32
    return %c0_i32, %c0_i32_0 : i32, i32
  }
  func.func @transform_4(%arg0: i32) -> (i32, i32) {
    %c0_i32 = arith.constant 0 : i32
    %c0_i32_0 = arith.constant 0 : i32
    %c0_i32_1 = arith.constant 0 : i32
    return %c0_i32, %c0_i32_0 : i32, i32
  }
  func.func @transform_5(%arg0: i32) -> (i32, i32) {
    %c0_i32 = arith.constant 0 : i32
    %c0_i32_0 = arith.constant 0 : i32
    %c0_i32_1 = arith.constant 0 : i32
    return %c0_i32, %c0_i32_0 : i32, i32
  }
  func.func @transform_6(%arg0: i32) -> (i32, i32) {
    %c0_i32 = arith.constant 0 : i32
    %c0_i32_0 = arith.constant 0 : i32
    %c0_i32_1 = arith.constant 0 : i32
    return %c0_i32, %c0_i32_0 : i32, i32
  }
  func.func @transform_7(%arg0: i32) -> (i32, i32) {
    %c0_i32 = arith.constant 0 : i32
    %c0_i32_0 = arith.constant 0 : i32
    %c0_i32_1 = arith.constant 0 : i32
    return %c0_i32, %c0_i32_0 : i32, i32
  }
  func.func @transform_8(%arg0: i32) -> (i32, i32) {
    %c0_i32 = arith.constant 0 : i32
    %c0_i32_0 = arith.constant 0 : i32
    %c0_i32_1 = arith.constant 0 : i32
    return %c0_i32, %c0_i32_0 : i32, i32
  }
  func.func @transform_9(%arg0: i32) -> (i32, i32) {
    %c0_i32 = arith.constant 0 : i32
    %c0_i32_0 = arith.constant 0 : i32
    %c0_i32_1 = arith.constant 0 : i32
    return %c0_i32, %c0_i32_0 : i32, i32
  }
  func.func @transform_10(%arg0: i32) -> (i32, i32) {
    %c0_i32 = arith.constant 0 : i32
    %c0_i32_0 = arith.constant 0 : i32
    %c0_i32_1 = arith.constant 0 : i32
    return %c0_i32, %c0_i32_0 : i32, i32
  }
  func.func @transform_11(%arg0: i32) -> (i32, i32) {
    %c0_i32 = arith.constant 0 : i32
    %c0_i32_0 = arith.constant 0 : i32
    %c0_i32_1 = arith.constant 0 : i32
    return %c0_i32, %c0_i32_0 : i32, i32
  }
  func.func @transform_12(%arg0: i32) -> (i32, i32) {
    %c0_i32 = arith.constant 0 : i32
    %c0_i32_0 = arith.constant 0 : i32
    %c0_i32_1 = arith.constant 0 : i32
    return %c0_i32, %c0_i32_0 : i32, i32
  }
  func.func @transform_13(%arg0: i32) -> (i32, i32) {
    %c0_i32 = arith.constant 0 : i32
    %c0_i32_0 = arith.constant 0 : i32
    %c0_i32_1 = arith.constant 0 : i32
    return %c0_i32, %c0_i32_0 : i32, i32
  }
  func.func @transform_14(%arg0: i32) -> (i32, i32) {
    %c0_i32 = arith.constant 0 : i32
    %c0_i32_0 = arith.constant 0 : i32
    %c0_i32_1 = arith.constant 0 : i32
    return %c0_i32, %c0_i32_0 : i32, i32
  }
  func.func @transform_15(%arg0: i32) -> (i32, i32) {
    %c0_i32 = arith.constant 0 : i32
    %c0_i32_0 = arith.constant 0 : i32
    %c0_i32_1 = arith.constant 0 : i32
    return %c0_i32, %c0_i32_0 : i32, i32
  }
  func.func @transform_16(%arg0: i32) -> (i32, i32) {
    %c0_i32 = arith.constant 0 : i32
    %c0_i32_0 = arith.constant 0 : i32
    %c0_i32_1 = arith.constant 0 : i32
    return %c0_i32, %c0_i32_0 : i32, i32
  }
  func.func @transform_17(%arg0: i32) -> (i32, i32, i32) {
    %c0_i32 = arith.constant 0 : i32
    %c0_i32_0 = arith.constant 0 : i32
    %c0_i32_1 = arith.constant 0 : i32
    return %arg0, %c0_i32, %c0_i32_0 : i32, i32, i32
  }
}

</mosaic_0001>

<llo_original>
// kernel: tpu_custom_call.1
$region0: #{tpu_custom_call.1}
  #allocation0 [shape = 'u32[]', space=smem, size = 0x4, offset = 0x4, fixed_abs, tag = 'smem constant byte address 0x4 - core index']
  #allocation1 [shape = 'u32[144,128]{1,0:T(1,128)}', space=vmem, size = 0x12000, scoped, tag = 'internal scratch']
  %s0 = inlined_call_operand.hbm [shape: f32[2,8,128], index: 0, kind: input, shape index: {}]
  %s1 = inlined_call_operand.hbm [shape: f32[2,1,8], index: 1, kind: input, shape index: {}]
  %s2 = inlined_call_operand.vmem [shape: s32[8,8,1], index: 2, kind: input, shape index: {}]
  %s3 = inlined_call_operand.hbm [shape: bf16[31,128], index: 3, kind: input, shape index: {}]
  %s4 = inlined_call_operand.hbm [shape: bf16[128,128], index: 4, kind: input, shape index: {}]
  %s5 = inlined_call_operand.hbm [shape: f32[1,128], index: 5, kind: input, shape index: {}]
  %s6 = inlined_call_operand.hbm [shape: bf16[128,128], index: 6, kind: input, shape index: {}]
  %s7 = inlined_call_operand.hbm [shape: f32[1,128], index: 7, kind: input, shape index: {}]
  %s8 = inlined_call_operand.hbm [shape: bf16[128,128], index: 8, kind: input, shape index: {}]
  %s9 = inlined_call_operand.hbm [shape: f32[1,128], index: 9, kind: input, shape index: {}]
  %s10 = inlined_call_operand.hbm [shape: bf16[128,128], index: 10, kind: input, shape index: {}]
  %s11 = inlined_call_operand.hbm [shape: f32[1,128], index: 11, kind: input, shape index: {}]
  %s12 = inlined_call_operand.hbm [shape: f32[1,128], index: 12, kind: input, shape index: {}]
  %s13 = inlined_call_operand.hbm [shape: f32[1,128], index: 13, kind: input, shape index: {}]
  %s14 = inlined_call_operand.hbm [shape: bf16[128,256], index: 14, kind: input, shape index: {}]
  %s15 = inlined_call_operand.vmem [shape: bf16[128,256], index: 15, kind: input, shape index: {}]
  %s16 = inlined_call_operand.hbm [shape: bf16[256,128], index: 16, kind: input, shape index: {}]
  %s17 = inlined_call_operand.hbm [shape: f32[2,8,128], index: 17, kind: output, shape index: {}]
  %s18 = sld [smem:[#allocation0]]
  $region161: #{tpu_custom_call.1} parent=0
    _
  %s20 = ssub.s32 1, %s18
  %s21 = scalar_select 0, %s20, %s18
  $region1: #{tpu_custom_call.1} parent=0
    #allocation2 [shape = 'u8[8192]{0}', space=vmem, size = 0x2000, scoped, tag = 'input window, operand 0']
    #allocation3 [shape = 's32[2]{0}', space=sflag, size = 0x8, scoped, tag = 'scoped memory for tpu_custom_call.1']
    #allocation4 [shape = 's32[2]{0}', space=sflag, size = 0x8, scoped, tag = 'scoped memory for tpu_custom_call.1']
    #allocation5 [shape = 'u8[1024]{0}', space=vmem, size = 0x400, scoped, tag = 'input window, operand 1']
    #allocation6 [shape = 's32[2]{0}', space=sflag, size = 0x8, scoped, tag = 'scoped memory for tpu_custom_call.1']
    #allocation7 [shape = 'u8[8192]{0}', space=vmem, size = 0x2000, scoped, tag = 'input window, operand 3, single buffered']
    #allocation8 [shape = 'u8[32768]{0}', space=vmem, size = 0x8000, scoped, tag = 'input window, operand 4, single buffered']
    #allocation9 [shape = 's32[1]{0}', space=sflag, size = 0x4, scoped, tag = 'scoped memory for tpu_custom_call.1']
    #allocation10 [shape = 'u8[512]{0}', space=vmem, size = 0x400, scoped, tag = 'input window, operand 5, single buffered']
    #allocation11 [shape = 'u8[32768]{0}', space=vmem, size = 0x8000, scoped, tag = 'input window, operand 6, single buffered']
    #allocation12 [shape = 's32[1]{0}', space=sflag, size = 0x4, scoped, tag = 'scoped memory for tpu_custom_call.1']
    #allocation13 [shape = 'u8[512]{0}', space=vmem, size = 0x400, scoped, tag = 'input window, operand 7, single buffered']
    #allocation14 [shape = 'u8[32768]{0}', space=vmem, size = 0x8000, scoped, tag = 'input window, operand 8, single buffered']
    #allocation15 [shape = 's32[1]{0}', space=sflag, size = 0x4, scoped, tag = 'scoped memory for tpu_custom_call.1']
    #allocation16 [shape = 'u8[512]{0}', space=vmem, size = 0x400, scoped, tag = 'input window, operand 9, single buffered']
    #allocation17 [shape = 'u8[32768]{0}', space=vmem, size = 0x8000, scoped, tag = 'input window, operand 10, single buffered']
    #allocation18 [shape = 's32[1]{0}', space=sflag, size = 0x4, scoped, tag = 'scoped memory for tpu_custom_call.1']
    #allocation19 [shape = 'u8[512]{0}', space=vmem, size = 0x400, scoped, tag = 'input window, operand 11, single buffered']
    #allocation20 [shape = 'u8[512]{0}', space=vmem, size = 0x400, scoped, tag = 'input window, operand 12, single buffered']
    #allocation21 [shape = 's32[1]{0}', space=sflag, size = 0x4, scoped, tag = 'scoped memory for tpu_custom_call.1']
    #allocation22 [shape = 'u8[512]{0}', space=vmem, size = 0x400, scoped, tag = 'input window, operand 13, single buffered']
    #allocation23 [shape = 'u8[65536]{0}', space=vmem, size = 0x10000, scoped, tag = 'input window, operand 14, single buffered']
    #allocation24 [shape = 's32[1]{0}', space=sflag, size = 0x4, scoped, tag = 'scoped memory for tpu_custom_call.1']
    #allocation25 [shape = 'u8[65536]{0}', space=vmem, size = 0x10000, scoped, tag = 'input window, operand 16, single buffered']
    #allocation26 [shape = 'u8[8192]{0}', space=vmem, size = 0x2000, scoped, tag = 'output window, operand 0']
    %22 = vsyncpa [#allocation3], 0
    %s23 = scalar_lea.sflag [#allocation3], 1
    %24 = vsyncpa %s23, 0
    %25 = vsyncpa [#allocation6], 0
    %s26 = scalar_lea.sflag [#allocation6], 1
    %27 = vsyncpa %s26, 0
    %28 = vsyncpa [#allocation9], 0
    %29 = vsyncpa [#allocation12], 0
    %30 = vsyncpa [#allocation15], 0
    %31 = vsyncpa [#allocation18], 0
    %32 = vsyncpa [#allocation21], 0
    %33 = vsyncpa [#allocation24], 0
    %34 = vsyncpa [#allocation4], 0
    %s35 = scalar_lea.sflag [#allocation4], 1
    %36 = vsyncpa %s35, 0
    loop: start=0, step=1, limit=4
    $region2: #{tpu_custom_call.1} parent=1 // loop_pre_header
      _
    $region3: #{tpu_custom_call.1} parent=1 // loop_header
      %s38 = sphi 0, %s42
      %p39 = scmp.ge.s32.totalorder %s38, 4
      %s48 = sphi 0, %s50
      %s51 = sphi 0, %s48
      %s52 = sphi 0, %s51
      %s68 = sphi 0, %s52
      %s74 = sphi 0, %s76
      %s77 = sphi 0, %s74
      %s78 = sphi 0, %s77
      %s94 = sphi 0, %s78
      %s98 = sphi 0, %s98
      %s100 = sphi 0, %s98
      %s101 = sphi 0, %s100
      %s115 = sphi 0, %s101
      %s119 = sphi 0, %s119
      %s121 = sphi 0, %s119
      %s122 = sphi 0, %s121
      %s136 = sphi 0, %s122
      %s140 = sphi 0, %s140
      %s142 = sphi 0, %s140
      %s143 = sphi 0, %s142
      %s157 = sphi 0, %s143
      %s161 = sphi 0, %s161
      %s163 = sphi 0, %s161
      %s164 = sphi 0, %s163
      %s178 = sphi 0, %s164
      %s182 = sphi 0, %s182
      %s184 = sphi 0, %s182
      %s185 = sphi 0, %s184
      %s199 = sphi 0, %s185
      %s203 = sphi 0, %s203
      %s205 = sphi 0, %s203
      %s206 = sphi 0, %s205
      %s220 = sphi 0, %s206
      %s224 = sphi 0, %s224
      %s226 = sphi 0, %s224
      %s227 = sphi 0, %s226
      %s241 = sphi 0, %s227
      %s245 = sphi 0, %s245
      %s247 = sphi 0, %s245
      %s248 = sphi 0, %s247
      %s262 = sphi 0, %s248
      %s266 = sphi 0, %s266
      %s268 = sphi 0, %s266
      %s269 = sphi 0, %s268
      %s283 = sphi 0, %s269
      %s287 = sphi 0, %s287
      %s289 = sphi 0, %s287
      %s290 = sphi 0, %s289
      %s304 = sphi 0, %s290
      %s308 = sphi 0, %s308
      %s310 = sphi 0, %s308
      %s311 = sphi 0, %s310
      %s325 = sphi 0, %s311
      %s329 = sphi 0, %s329
      %s331 = sphi 0, %s329
      %s332 = sphi 0, %s331
      %s346 = sphi 0, %s332
      %s350 = sphi 0, %s350
      %s352 = sphi 0, %s350
      %s353 = sphi 0, %s352
      %s367 = sphi 0, %s353
      %s371 = sphi 0, %s371
      %s373 = sphi 0, %s371
      %s374 = sphi 0, %s373
      %s388 = sphi 0, %s374
      %s392 = sphi 0, %s392
      %s394 = sphi 0, %s392
      %s395 = sphi 0, %s394
      %s409 = sphi 0, %s395
      %s415 = sphi 0, %s417
      %s418 = sphi 0, %s415
      %s419 = sphi 0, %s418
      %s435 = sphi 0, %s419
    $region4: #{tpu_custom_call.1} parent=1 // loop_header_branch
      %41 = sbr.rel (%p39) target = $region8
    $region5: #{tpu_custom_call.1} parent=1 // loop_body
      %s43 = ssub.s32 %s38, 1
      %s44 = ssub.s32 %s38, 2
      %s45 = sadd.s32 %s38, 1
      %s46 = ssub.s32 %s38, %s45
      %p47 = scmp.eq.s32.totalorder %s46, 0
      %s49 = sadd.s32 %s48, 1
      %s50 = scalar_select %p47, %s48, %s49
      %p53 = pneg %p47
      %p54 = scmp.eq.s32.totalorder %s38, 1
      %p55 = por %p53, %p54
      %p56 = scmp.ne.s32.totalorder %s48, %s51
      %p57 = scmp.eq.s32.totalorder %s38, 0
      %p58 = por %p56, %p57
      %p59 = scmp.ne.s32.totalorder %s48, %s51
      %p60 = scmp.eq.s32.totalorder %s43, 1
      %p61 = por %p59, %p60
      %p62 = scmp.ne.s32.totalorder %s51, %s52
      %p63 = scmp.eq.s32.totalorder %s43, 0
      %p64 = por %p62, %p63
      %p65 = scmp.ne.s32.totalorder %s51, %s52
      %p66 = scmp.eq.s32.totalorder %s44, 1
      %p67 = por %p65, %p66
      %p69 = scmp.ne.s32.totalorder %s52, %s68
      %p70 = scmp.eq.s32.totalorder %s44, 0
      %p71 = por %p69, %p70
      %s72 = ssub.s32 %s38, %s45
      %p73 = scmp.eq.s32.totalorder %s72, 0
      %s75 = sadd.s32 %s74, 1
      %s76 = scalar_select %p73, %s74, %s75
      %p79 = pneg %p73
      %p80 = scmp.eq.s32.totalorder %s38, 1
      %p81 = por %p79, %p80
      %p82 = scmp.ne.s32.totalorder %s74, %s77
      %p83 = scmp.eq.s32.totalorder %s38, 0
      %p84 = por %p82, %p83
      %p85 = scmp.ne.s32.totalorder %s74, %s77
      %p86 = scmp.eq.s32.totalorder %s43, 1
      %p87 = por %p85, %p86
      %p88 = scmp.ne.s32.totalorder %s77, %s78
      %p89 = scmp.eq.s32.totalorder %s43, 0
      %p90 = por %p88, %p89
      %p91 = scmp.ne.s32.totalorder %s77, %s78
      %p92 = scmp.eq.s32.totalorder %s44, 1
      %p93 = por %p91, %p92
      %p95 = scmp.ne.s32.totalorder %s78, %s94
      %p96 = scmp.eq.s32.totalorder %s44, 0
      %p97 = por %p95, %p96
      %s99 = sadd.s32 %s98, 1
      %p102 = scmp.eq.s32.totalorder %s38, 1
      %p103 = scmp.ne.s32.totalorder %s98, %s100
      %p104 = scmp.eq.s32.totalorder %s38, 0
      %p105 = por %p103, %p104
      %p106 = scmp.ne.s32.totalorder %s98, %s100
      %p107 = scmp.eq.s32.totalorder %s43, 1
      %p108 = por %p106, %p107
      %p109 = scmp.ne.s32.totalorder %s100, %s101
      %p110 = scmp.eq.s32.totalorder %s43, 0
      %p111 = por %p109, %p110
      %p112 = scmp.ne.s32.totalorder %s100, %s101
      %p113 = scmp.eq.s32.totalorder %s44, 1
      %p114 = por %p112, %p113
      %p116 = scmp.ne.s32.totalorder %s101, %s115
      %p117 = scmp.eq.s32.totalorder %s44, 0
      %p118 = por %p116, %p117
      %s120 = sadd.s32 %s119, 1
      %p123 = scmp.eq.s32.totalorder %s38, 1
      %p124 = scmp.ne.s32.totalorder %s119, %s121
      %p125 = scmp.eq.s32.totalorder %s38, 0
      %p126 = por %p124, %p125
      %p127 = scmp.ne.s32.totalorder %s119, %s121
      %p128 = scmp.eq.s32.totalorder %s43, 1
      %p129 = por %p127, %p128
      %p130 = scmp.ne.s32.totalorder %s121, %s122
      %p131 = scmp.eq.s32.totalorder %s43, 0
      %p132 = por %p130, %p131
      %p133 = scmp.ne.s32.totalorder %s121, %s122
      %p134 = scmp.eq.s32.totalorder %s44, 1
      %p135 = por %p133, %p134
      %p137 = scmp.ne.s32.totalorder %s122, %s136
      %p138 = scmp.eq.s32.totalorder %s44, 0
      %p139 = por %p137, %p138
      %s141 = sadd.s32 %s140, 1
      %p144 = scmp.eq.s32.totalorder %s38, 1
      %p145 = scmp.ne.s32.totalorder %s140, %s142
      %p146 = scmp.eq.s32.totalorder %s38, 0
      %p147 = por %p145, %p146
      %p148 = scmp.ne.s32.totalorder %s140, %s142
      %p149 = scmp.eq.s32.totalorder %s43, 1
      %p150 = por %p148, %p149
      %p151 = scmp.ne.s32.totalorder %s142, %s143
      %p152 = scmp.eq.s32.totalorder %s43, 0
      %p153 = por %p151, %p152
      %p154 = scmp.ne.s32.totalorder %s142, %s143
      %p155 = scmp.eq.s32.totalorder %s44, 1
      %p156 = por %p154, %p155
      %p158 = scmp.ne.s32.totalorder %s143, %s157
      %p159 = scmp.eq.s32.totalorder %s44, 0
      %p160 = por %p158, %p159
      %s162 = sadd.s32 %s161, 1
      %p165 = scmp.eq.s32.totalorder %s38, 1
      %p166 = scmp.ne.s32.totalorder %s161, %s163
      %p167 = scmp.eq.s32.totalorder %s38, 0
      %p168 = por %p166, %p167
      %p169 = scmp.ne.s32.totalorder %s161, %s163
      %p170 = scmp.eq.s32.totalorder %s43, 1
      %p171 = por %p169, %p170
      %p172 = scmp.ne.s32.totalorder %s163, %s164
      %p173 = scmp.eq.s32.totalorder %s43, 0
      %p174 = por %p172, %p173
      %p175 = scmp.ne.s32.totalorder %s163, %s164
      %p176 = scmp.eq.s32.totalorder %s44, 1
      %p177 = por %p175, %p176
      %p179 = scmp.ne.s32.totalorder %s164, %s178
      %p180 = scmp.eq.s32.totalorder %s44, 0
      %p181 = por %p179, %p180
      %s183 = sadd.s32 %s182, 1
      %p186 = scmp.eq.s32.totalorder %s38, 1
      %p187 = scmp.ne.s32.totalorder %s182, %s184
      %p188 = scmp.eq.s32.totalorder %s38, 0
      %p189 = por %p187, %p188
      %p190 = scmp.ne.s32.totalorder %s182, %s184
      %p191 = scmp.eq.s32.totalorder %s43, 1
      %p192 = por %p190, %p191
      %p193 = scmp.ne.s32.totalorder %s184, %s185
      %p194 = scmp.eq.s32.totalorder %s43, 0
      %p195 = por %p193, %p194
      %p196 = scmp.ne.s32.totalorder %s184, %s185
      %p197 = scmp.eq.s32.totalorder %s44, 1
      %p198 = por %p196, %p197
      %p200 = scmp.ne.s32.totalorder %s185, %s199
      %p201 = scmp.eq.s32.totalorder %s44, 0
      %p202 = por %p200, %p201
      %s204 = sadd.s32 %s203, 1
      %p207 = scmp.eq.s32.totalorder %s38, 1
      %p208 = scmp.ne.s32.totalorder %s203, %s205
      %p209 = scmp.eq.s32.totalorder %s38, 0
      %p210 = por %p208, %p209
      %p211 = scmp.ne.s32.totalorder %s203, %s205
      %p212 = scmp.eq.s32.totalorder %s43, 1
      %p213 = por %p211, %p212
      %p214 = scmp.ne.s32.totalorder %s205, %s206
      %p215 = scmp.eq.s32.totalorder %s43, 0
      %p216 = por %p214, %p215
      %p217 = scmp.ne.s32.totalorder %s205, %s206
      %p218 = scmp.eq.s32.totalorder %s44, 1
      %p219 = por %p217, %p218
      %p221 = scmp.ne.s32.totalorder %s206, %s220
      %p222 = scmp.eq.s32.totalorder %s44, 0
      %p223 = por %p221, %p222
      %s225 = sadd.s32 %s224, 1
      %p228 = scmp.eq.s32.totalorder %s38, 1
      %p229 = scmp.ne.s32.totalorder %s224, %s226
      %p230 = scmp.eq.s32.totalorder %s38, 0
      %p231 = por %p229, %p230
      %p232 = scmp.ne.s32.totalorder %s224, %s226
      %p233 = scmp.eq.s32.totalorder %s43, 1
      %p234 = por %p232, %p233
      %p235 = scmp.ne.s32.totalorder %s226, %s227
      %p236 = scmp.eq.s32.totalorder %s43, 0
      %p237 = por %p235, %p236
      %p238 = scmp.ne.s32.totalorder %s226, %s227
      %p239 = scmp.eq.s32.totalorder %s44, 1
      %p240 = por %p238, %p239
      %p242 = scmp.ne.s32.totalorder %s227, %s241
      %p243 = scmp.eq.s32.totalorder %s44, 0
      %p244 = por %p242, %p243
      %s246 = sadd.s32 %s245, 1
      %p249 = scmp.eq.s32.totalorder %s38, 1
      %p250 = scmp.ne.s32.totalorder %s245, %s247
      %p251 = scmp.eq.s32.totalorder %s38, 0
      %p252 = por %p250, %p251
      %p253 = scmp.ne.s32.totalorder %s245, %s247
      %p254 = scmp.eq.s32.totalorder %s43, 1
      %p255 = por %p253, %p254
      %p256 = scmp.ne.s32.totalorder %s247, %s248
      %p257 = scmp.eq.s32.totalorder %s43, 0
      %p258 = por %p256, %p257
      %p259 = scmp.ne.s32.totalorder %s247, %s248
      %p260 = scmp.eq.s32.totalorder %s44, 1
      %p261 = por %p259, %p260
      %p263 = scmp.ne.s32.totalorder %s248, %s262
      %p264 = scmp.eq.s32.totalorder %s44, 0
      %p265 = por %p263, %p264
      %s267 = sadd.s32 %s266, 1
      %p270 = scmp.eq.s32.totalorder %s38, 1
      %p271 = scmp.ne.s32.totalorder %s266, %s268
      %p272 = scmp.eq.s32.totalorder %s38, 0
      %p273 = por %p271, %p272
      %p274 = scmp.ne.s32.totalorder %s266, %s268
      %p275 = scmp.eq.s32.totalorder %s43, 1
      %p276 = por %p274, %p275
      %p277 = scmp.ne.s32.totalorder %s268, %s269
      %p278 = scmp.eq.s32.totalorder %s43, 0
      %p279 = por %p277, %p278
      %p280 = scmp.ne.s32.totalorder %s268, %s269
      %p281 = scmp.eq.s32.totalorder %s44, 1
      %p282 = por %p280, %p281
      %p284 = scmp.ne.s32.totalorder %s269, %s283
      %p285 = scmp.eq.s32.totalorder %s44, 0
      %p286 = por %p284, %p285
      %s288 = sadd.s32 %s287, 1
      %p291 = scmp.eq.s32.totalorder %s38, 1
      %p292 = scmp.ne.s32.totalorder %s287, %s289
      %p293 = scmp.eq.s32.totalorder %s38, 0
      %p294 = por %p292, %p293
      %p295 = scmp.ne.s32.totalorder %s287, %s289
      %p296 = scmp.eq.s32.totalorder %s43, 1
      %p297 = por %p295, %p296
      %p298 = scmp.ne.s32.totalorder %s289, %s290
      %p299 = scmp.eq.s32.totalorder %s43, 0
      %p300 = por %p298, %p299
      %p301 = scmp.ne.s32.totalorder %s289, %s290
      %p302 = scmp.eq.s32.totalorder %s44, 1
      %p303 = por %p301, %p302
      %p305 = scmp.ne.s32.totalorder %s290, %s304
      %p306 = scmp.eq.s32.totalorder %s44, 0
      %p307 = por %p305, %p306
      %s309 = sadd.s32 %s308, 1
      %p312 = scmp.eq.s32.totalorder %s38, 1
      %p313 = scmp.ne.s32.totalorder %s308, %s310
      %p314 = scmp.eq.s32.totalorder %s38, 0
      %p315 = por %p313, %p314
      %p316 = scmp.ne.s32.totalorder %s308, %s310
      %p317 = scmp.eq.s32.totalorder %s43, 1
      %p318 = por %p316, %p317
      %p319 = scmp.ne.s32.totalorder %s310, %s311
      %p320 = scmp.eq.s32.totalorder %s43, 0
      %p321 = por %p319, %p320
      %p322 = scmp.ne.s32.totalorder %s310, %s311
      %p323 = scmp.eq.s32.totalorder %s44, 1
      %p324 = por %p322, %p323
      %p326 = scmp.ne.s32.totalorder %s311, %s325
      %p327 = scmp.eq.s32.totalorder %s44, 0
      %p328 = por %p326, %p327
      %s330 = sadd.s32 %s329, 1
      %p333 = scmp.eq.s32.totalorder %s38, 1
      %p334 = scmp.ne.s32.totalorder %s329, %s331
      %p335 = scmp.eq.s32.totalorder %s38, 0
      %p336 = por %p334, %p335
      %p337 = scmp.ne.s32.totalorder %s329, %s331
      %p338 = scmp.eq.s32.totalorder %s43, 1
      %p339 = por %p337, %p338
      %p340 = scmp.ne.s32.totalorder %s331, %s332
      %p341 = scmp.eq.s32.totalorder %s43, 0
      %p342 = por %p340, %p341
      %p343 = scmp.ne.s32.totalorder %s331, %s332
      %p344 = scmp.eq.s32.totalorder %s44, 1
      %p345 = por %p343, %p344
      %p347 = scmp.ne.s32.totalorder %s332, %s346
      %p348 = scmp.eq.s32.totalorder %s44, 0
      %p349 = por %p347, %p348
      %s351 = sadd.s32 %s350, 1
      %p354 = scmp.eq.s32.totalorder %s38, 1
      %p355 = scmp.ne.s32.totalorder %s350, %s352
      %p356 = scmp.eq.s32.totalorder %s38, 0
      %p357 = por %p355, %p356
      %p358 = scmp.ne.s32.totalorder %s350, %s352
      %p359 = scmp.eq.s32.totalorder %s43, 1
      %p360 = por %p358, %p359
      %p361 = scmp.ne.s32.totalorder %s352, %s353
      %p362 = scmp.eq.s32.totalorder %s43, 0
      %p363 = por %p361, %p362
      %p364 = scmp.ne.s32.totalorder %s352, %s353
      %p365 = scmp.eq.s32.totalorder %s44, 1
      %p366 = por %p364, %p365
      %p368 = scmp.ne.s32.totalorder %s353, %s367
      %p369 = scmp.eq.s32.totalorder %s44, 0
      %p370 = por %p368, %p369
      %s372 = sadd.s32 %s371, 1
      %p375 = scmp.eq.s32.totalorder %s38, 1
      %p376 = scmp.ne.s32.totalorder %s371, %s373
      %p377 = scmp.eq.s32.totalorder %s38, 0
      %p378 = por %p376, %p377
      %p379 = scmp.ne.s32.totalorder %s371, %s373
      %p380 = scmp.eq.s32.totalorder %s43, 1
      %p381 = por %p379, %p380
      %p382 = scmp.ne.s32.totalorder %s373, %s374
      %p383 = scmp.eq.s32.totalorder %s43, 0
      %p384 = por %p382, %p383
      %p385 = scmp.ne.s32.totalorder %s373, %s374
      %p386 = scmp.eq.s32.totalorder %s44, 1
      %p387 = por %p385, %p386
      %p389 = scmp.ne.s32.totalorder %s374, %s388
      %p390 = scmp.eq.s32.totalorder %s44, 0
      %p391 = por %p389, %p390
      %s393 = sadd.s32 %s392, 1
      %p396 = scmp.eq.s32.totalorder %s38, 1
      %p397 = scmp.ne.s32.totalorder %s392, %s394
      %p398 = scmp.eq.s32.totalorder %s38, 0
      %p399 = por %p397, %p398
      %p400 = scmp.ne.s32.totalorder %s392, %s394
      %p401 = scmp.eq.s32.totalorder %s43, 1
      %p402 = por %p400, %p401
      %p403 = scmp.ne.s32.totalorder %s394, %s395
      %p404 = scmp.eq.s32.totalorder %s43, 0
      %p405 = por %p403, %p404
      %p406 = scmp.ne.s32.totalorder %s394, %s395
      %p407 = scmp.eq.s32.totalorder %s44, 1
      %p408 = por %p406, %p407
      %p410 = scmp.ne.s32.totalorder %s395, %s409
      %p411 = scmp.eq.s32.totalorder %s44, 0
      %p412 = por %p410, %p411
      %s413 = ssub.s32 %s38, %s45
      %p414 = scmp.eq.s32.totalorder %s413, 0
      %s416 = sadd.s32 %s415, 1
      %s417 = scalar_select %p414, %s415, %s416
      %p420 = pneg %p414
      %p421 = scmp.eq.s32.totalorder %s38, 1
      %p422 = por %p420, %p421
      %p423 = scmp.ne.s32.totalorder %s415, %s418
      %p424 = scmp.eq.s32.totalorder %s38, 0
      %p425 = por %p423, %p424
      %p426 = scmp.ne.s32.totalorder %s415, %s418
      %p427 = scmp.eq.s32.totalorder %s43, 1
      %p428 = por %p426, %p427
      %p429 = scmp.ne.s32.totalorder %s418, %s419
      %p430 = scmp.eq.s32.totalorder %s43, 0
      %p431 = por %p429, %p430
      %p432 = scmp.ne.s32.totalorder %s418, %s419
      %p433 = scmp.eq.s32.totalorder %s44, 1
      %p434 = por %p432, %p433
      %p436 = scmp.ne.s32.totalorder %s419, %s435
      %p437 = scmp.eq.s32.totalorder %s44, 0
      %p438 = por %p436, %p437
      %p439 = scmp.le.s32.totalorder 1, %s38
      %p440 = scmp.lt.s32.totalorder %s38, 3
      %p441 = pnand %p439, %p440
      %p442 = pneg %p441
      // Predicated region
      $region9: #{tpu_custom_call.1} parent=5 // pred_check
        _
      $region10: #{tpu_custom_call.1} parent=5 // pred_check_branch
        %444 = sbr.rel (%p441) target = $region12
      $region11: #{tpu_custom_call.1} parent=5 // pred_region
        %s445 = ssub.s32 %s38, 1
        // Predicated region
        $region13: #{tpu_custom_call.1} parent=11 // pred_check
          %p446 = pneg %p111
        $region14: #{tpu_custom_call.1} parent=11 // pred_check_branch
          %448 = sbr.rel (%p446) target = $region16
        $region15: #{tpu_custom_call.1} parent=11 // pred_region
          _
        $region16: #{tpu_custom_call.1} parent=11 // pred_fallthru
          _
        // Predicated region
        $region17: #{tpu_custom_call.1} parent=11 // pred_check
          %p449 = pneg %p132
        $region18: #{tpu_custom_call.1} parent=11 // pred_check_branch
          %451 = sbr.rel (%p449) target = $region20
        $region19: #{tpu_custom_call.1} parent=11 // pred_region
          %s453 = ssub.s32 256, 256
          %454 = vsyncadd [#allocation6], %s453
          %s455 = sshll.u32 [#allocation7], 4
          %s456 = int_to_ptr.vmem [resolvable:$true] %s455
          %461 = dma.hbm_to_vmem [thread:$0]  %s3, 256, %s456, [#allocation6], 64, 64, 4
        $region20: #{tpu_custom_call.1} parent=11 // pred_fallthru
          _
        // Predicated region
        $region21: #{tpu_custom_call.1} parent=11 // pred_check
          %p462 = pneg %p153
        $region22: #{tpu_custom_call.1} parent=11 // pred_check_branch
          %464 = sbr.rel (%p462) target = $region24
        $region23: #{tpu_custom_call.1} parent=11 // pred_region
          %s466 = ssub.s32 1024, 1024
          %467 = vsyncadd [#allocation9], %s466
          %s468 = sshll.u32 [#allocation8], 4
          %s469 = int_to_ptr.vmem [resolvable:$true] %s468
          %474 = dma.hbm_to_vmem [thread:$0]  %s4, 1024, %s469, [#allocation9], 64, 64, 4
        $region24: #{tpu_custom_call.1} parent=11 // pred_fallthru
          _
        // Predicated region
        $region25: #{tpu_custom_call.1} parent=11 // pred_check
          %p475 = pneg %p174
        $region26: #{tpu_custom_call.1} parent=11 // pred_check_branch
          %477 = sbr.rel (%p475) target = $region28
        $region27: #{tpu_custom_call.1} parent=11 // pred_region
          %s479 = ssub.s32 16, 16
          %480 = vsyncadd [#allocation9], %s479
          %s482 = sshll.u32 [#allocation10], 4
          %s483 = int_to_ptr.vmem [resolvable:$true] %s482
          %485 = dma.hbm_to_vmem [thread:$0]  %s5, 16, %s483, [#allocation9]
        $region28: #{tpu_custom_call.1} parent=11 // pred_fallthru
          _
        // Predicated region
        $region29: #{tpu_custom_call.1} parent=11 // pred_check
          %p486 = pneg %p195
        $region30: #{tpu_custom_call.1} parent=11 // pred_check_branch
          %488 = sbr.rel (%p486) target = $region32
        $region31: #{tpu_custom_call.1} parent=11 // pred_region
          %s490 = ssub.s32 1024, 1024
          %491 = vsyncadd [#allocation12], %s490
          %s492 = sshll.u32 [#allocation11], 4
          %s493 = int_to_ptr.vmem [resolvable:$true] %s492
          %498 = dma.hbm_to_vmem [thread:$0]  %s6, 1024, %s493, [#allocation12], 64, 64, 4
        $region32: #{tpu_custom_call.1} parent=11 // pred_fallthru
          _
        // Predicated region
        $region33: #{tpu_custom_call.1} parent=11 // pred_check
          %p499 = pneg %p216
        $region34: #{tpu_custom_call.1} parent=11 // pred_check_branch
          %501 = sbr.rel (%p499) target = $region36
        $region35: #{tpu_custom_call.1} parent=11 // pred_region
          %s503 = ssub.s32 16, 16
          %504 = vsyncadd [#allocation12], %s503
          %s506 = sshll.u32 [#allocation13], 4
          %s507 = int_to_ptr.vmem [resolvable:$true] %s506
          %509 = dma.hbm_to_vmem [thread:$0]  %s7, 16, %s507, [#allocation12]
        $region36: #{tpu_custom_call.1} parent=11 // pred_fallthru
          _
        // Predicated region
        $region37: #{tpu_custom_call.1} parent=11 // pred_check
          %p510 = pneg %p237
        $region38: #{tpu_custom_call.1} parent=11 // pred_check_branch
          %512 = sbr.rel (%p510) target = $region40
        $region39: #{tpu_custom_call.1} parent=11 // pred_region
          %s514 = ssub.s32 1024, 1024
          %515 = vsyncadd [#allocation15], %s514
          %s516 = sshll.u32 [#allocation14], 4
          %s517 = int_to_ptr.vmem [resolvable:$true] %s516
          %522 = dma.hbm_to_vmem [thread:$0]  %s8, 1024, %s517, [#allocation15], 64, 64, 4
        $region40: #{tpu_custom_call.1} parent=11 // pred_fallthru
          _
        // Predicated region
        $region41: #{tpu_custom_call.1} parent=11 // pred_check
          %p523 = pneg %p258
        $region42: #{tpu_custom_call.1} parent=11 // pred_check_branch
          %525 = sbr.rel (%p523) target = $region44
        $region43: #{tpu_custom_call.1} parent=11 // pred_region
          %s527 = ssub.s32 16, 16
          %528 = vsyncadd [#allocation15], %s527
          %s530 = sshll.u32 [#allocation16], 4
          %s531 = int_to_ptr.vmem [resolvable:$true] %s530
          %533 = dma.hbm_to_vmem [thread:$0]  %s9, 16, %s531, [#allocation15]
        $region44: #{tpu_custom_call.1} parent=11 // pred_fallthru
          _
        // Predicated region
        $region45: #{tpu_custom_call.1} parent=11 // pred_check
          %p534 = pneg %p279
        $region46: #{tpu_custom_call.1} parent=11 // pred_check_branch
          %536 = sbr.rel (%p534) target = $region48
        $region47: #{tpu_custom_call.1} parent=11 // pred_region
          %s538 = ssub.s32 1024, 1024
          %539 = vsyncadd [#allocation18], %s538
          %s540 = sshll.u32 [#allocation17], 4
          %s541 = int_to_ptr.vmem [resolvable:$true] %s540
          %546 = dma.hbm_to_vmem [thread:$0]  %s10, 1024, %s541, [#allocation18], 64, 64, 4
        $region48: #{tpu_custom_call.1} parent=11 // pred_fallthru
          _
        // Predicated region
        $region49: #{tpu_custom_call.1} parent=11 // pred_check
          %p547 = pneg %p300
        $region50: #{tpu_custom_call.1} parent=11 // pred_check_branch
          %549 = sbr.rel (%p547) target = $region52
        $region51: #{tpu_custom_call.1} parent=11 // pred_region
          %s551 = ssub.s32 16, 16
          %552 = vsyncadd [#allocation18], %s551
          %s554 = sshll.u32 [#allocation19], 4
          %s555 = int_to_ptr.vmem [resolvable:$true] %s554
          %557 = dma.hbm_to_vmem [thread:$0]  %s11, 16, %s555, [#allocation18]
        $region52: #{tpu_custom_call.1} parent=11 // pred_fallthru
          _
        // Predicated region
        $region53: #{tpu_custom_call.1} parent=11 // pred_check
          %p558 = pneg %p321
        $region54: #{tpu_custom_call.1} parent=11 // pred_check_branch
          %560 = sbr.rel (%p558) target = $region56
        $region55: #{tpu_custom_call.1} parent=11 // pred_region
          %s562 = ssub.s32 16, 16
          %563 = vsyncadd [#allocation21], %s562
          %s565 = sshll.u32 [#allocation20], 4
          %s566 = int_to_ptr.vmem [resolvable:$true] %s565
          %568 = dma.hbm_to_vmem [thread:$0]  %s12, 16, %s566, [#allocation21]
        $region56: #{tpu_custom_call.1} parent=11 // pred_fallthru
          _
        // Predicated region
        $region57: #{tpu_custom_call.1} parent=11 // pred_check
          %p569 = pneg %p342
        $region58: #{tpu_custom_call.1} parent=11 // pred_check_branch
          %571 = sbr.rel (%p569) target = $region60
        $region59: #{tpu_custom_call.1} parent=11 // pred_region
          %s573 = ssub.s32 16, 16
          %574 = vsyncadd [#allocation21], %s573
          %s576 = sshll.u32 [#allocation22], 4
          %s577 = int_to_ptr.vmem [resolvable:$true] %s576
          %579 = dma.hbm_to_vmem [thread:$0]  %s13, 16, %s577, [#allocation21]
        $region60: #{tpu_custom_call.1} parent=11 // pred_fallthru
          _
        // Predicated region
        $region61: #{tpu_custom_call.1} parent=11 // pred_check
          %p580 = pneg %p363
        $region62: #{tpu_custom_call.1} parent=11 // pred_check_branch
          %582 = sbr.rel (%p580) target = $region64
        $region63: #{tpu_custom_call.1} parent=11 // pred_region
          %s584 = ssub.s32 2048, 2048
          %585 = vsyncadd [#allocation24], %s584
          %s586 = sshll.u32 [#allocation23], 4
          %s587 = int_to_ptr.vmem [resolvable:$true] %s586
          %592 = dma.hbm_to_vmem [thread:$0]  %s14, 2048, %s587, [#allocation24], 128, 128, 8
        $region64: #{tpu_custom_call.1} parent=11 // pred_fallthru
          _
        // Predicated region
        $region65: #{tpu_custom_call.1} parent=11 // pred_check
          %p593 = pneg %p384
        $region66: #{tpu_custom_call.1} parent=11 // pred_check_branch
          %595 = sbr.rel (%p593) target = $region68
        $region67: #{tpu_custom_call.1} parent=11 // pred_region
          _
        $region68: #{tpu_custom_call.1} parent=11 // pred_fallthru
          _
        // Predicated region
        $region69: #{tpu_custom_call.1} parent=11 // pred_check
          %p596 = pneg %p405
        $region70: #{tpu_custom_call.1} parent=11 // pred_check_branch
          %598 = sbr.rel (%p596) target = $region72
        $region71: #{tpu_custom_call.1} parent=11 // pred_region
          %s600 = ssub.s32 2048, 2048
          %601 = vsyncadd [#allocation24], %s600
          %s602 = sshll.u32 [#allocation25], 4
          %s603 = int_to_ptr.vmem [resolvable:$true] %s602
          %608 = dma.hbm_to_vmem [thread:$0]  %s16, 2048, %s603, [#allocation24], 64, 64, 4
        $region72: #{tpu_custom_call.1} parent=11 // pred_fallthru
          _
      $region12: #{tpu_custom_call.1} parent=5 // pred_fallthru
        _
      %p609 = scmp.lt.s32.totalorder %s38, 2
      // Predicated region
      $region73: #{tpu_custom_call.1} parent=5 // pred_check
        %p610 = pneg %p609
      $region74: #{tpu_custom_call.1} parent=5 // pred_check_branch
        %612 = sbr.rel (%p610) target = $region76
      $region75: #{tpu_custom_call.1} parent=5 // pred_region
        // Predicated region
        $region77: #{tpu_custom_call.1} parent=75 // pred_check
          %p613 = pneg %p58
        $region78: #{tpu_custom_call.1} parent=75 // pred_check_branch
          %615 = sbr.rel (%p613) target = $region80
        $region79: #{tpu_custom_call.1} parent=75 // pred_region
          %s616 = sand.u32 %s48, 1
          %s617 = scalar_lea.sflag [#allocation3], %s616
          %s618 = sand.u32 %s48, 1
          %s619 = smul.addr %s618, 8
          %s620 = scalar_lea.vmem [#allocation2], %s619
          %s622 = ssub.s32 128, 128
          %623 = vsyncadd %s617, %s622
          %s624 = smul.addr %s38, 128
          %s625 = scalar_lea.hbm %s0, %s624
          %s627 = sshll.u32 %s620, 4
          %s628 = int_to_ptr.vmem [resolvable:$true] %s627
          %630 = dma.hbm_to_vmem [thread:$0]  %s625, 128, %s628, %s617
        $region80: #{tpu_custom_call.1} parent=75 // pred_fallthru
          _
        // Predicated region
        $region81: #{tpu_custom_call.1} parent=75 // pred_check
          %p631 = pneg %p84
        $region82: #{tpu_custom_call.1} parent=75 // pred_check_branch
          %633 = sbr.rel (%p631) target = $region84
        $region83: #{tpu_custom_call.1} parent=75 // pred_region
          %s634 = sand.u32 %s38, 1
          %s635 = scalar_lea.sflag [#allocation6], %s634
          %s636 = sand.u32 %s74, 1
          %s637 = scalar_lea.vmem [#allocation5], %s636
          %s639 = ssub.s32 16, 16
          %640 = vsyncadd %s635, %s639
          %s641 = smul.addr %s38, 16
          %s642 = scalar_lea.hbm %s1, %s641
          %s644 = sshll.u32 %s637, 4
          %s645 = int_to_ptr.vmem [resolvable:$true] %s644
          %647 = dma.hbm_to_vmem [thread:$0]  %s642, 16, %s645, %s635
        $region84: #{tpu_custom_call.1} parent=75 // pred_fallthru
          _
      $region76: #{tpu_custom_call.1} parent=5 // pred_fallthru
        _
      %p648 = scmp.le.s32.totalorder 1, %s38
      %p649 = scmp.lt.s32.totalorder %s38, 3
      %p650 = pnand %p648, %p649
      %p651 = pneg %p650
      // Predicated region
      $region85: #{tpu_custom_call.1} parent=5 // pred_check
        _
      $region86: #{tpu_custom_call.1} parent=5 // pred_check_branch
        %653 = sbr.rel (%p650) target = $region88
      $region87: #{tpu_custom_call.1} parent=5 // pred_region
        %s654 = ssub.s32 %s38, 1
        %s655 = sand.u32 %s51, 1
        %s656 = scalar_lea.sflag [#allocation3], %s655
        %s657 = sand.u32 %s51, 1
        %s658 = smul.addr %s657, 8
        %s659 = scalar_lea.vmem [#allocation2], %s658
        // Predicated region
        $region89: #{tpu_custom_call.1} parent=87 // pred_check
          %p660 = pneg %p64
        $region90: #{tpu_custom_call.1} parent=87 // pred_check_branch
          %662 = sbr.rel (%p660) target = $region92
        $region91: #{tpu_custom_call.1} parent=87 // pred_region
          %663 = dma.done %s656, 128
        $region92: #{tpu_custom_call.1} parent=87 // pred_fallthru
          _
        %s664 = sand.u32 %s43, 1
        %s665 = scalar_lea.sflag [#allocation6], %s664
        %s666 = sand.u32 %s77, 1
        %s667 = scalar_lea.vmem [#allocation5], %s666
        // Predicated region
        $region93: #{tpu_custom_call.1} parent=87 // pred_check
          %p668 = pneg %p90
        $region94: #{tpu_custom_call.1} parent=87 // pred_check_branch
          %670 = sbr.rel (%p668) target = $region96
        $region95: #{tpu_custom_call.1} parent=87 // pred_region
          %671 = dma.done %s665, 16
        $region96: #{tpu_custom_call.1} parent=87 // pred_fallthru
          _
        // Predicated region
        $region97: #{tpu_custom_call.1} parent=87 // pred_check
          %p672 = pneg %p132
        $region98: #{tpu_custom_call.1} parent=87 // pred_check_branch
          %674 = sbr.rel (%p672) target = $region100
        $region99: #{tpu_custom_call.1} parent=87 // pred_region
          %675 = dma.done [#allocation6], 256
        $region100: #{tpu_custom_call.1} parent=87 // pred_fallthru
          _
        // Predicated region
        $region101: #{tpu_custom_call.1} parent=87 // pred_check
          %p676 = pneg %p153
        $region102: #{tpu_custom_call.1} parent=87 // pred_check_branch
          %678 = sbr.rel (%p676) target = $region104
        $region103: #{tpu_custom_call.1} parent=87 // pred_region
          %679 = dma.done [#allocation9], 1024
        $region104: #{tpu_custom_call.1} parent=87 // pred_fallthru
          _
        // Predicated region
        $region105: #{tpu_custom_call.1} parent=87 // pred_check
          %p680 = pneg %p174
        $region106: #{tpu_custom_call.1} parent=87 // pred_check_branch
          %682 = sbr.rel (%p680) target = $region108
        $region107: #{tpu_custom_call.1} parent=87 // pred_region
          %683 = dma.done [#allocation9], 16
        $region108: #{tpu_custom_call.1} parent=87 // pred_fallthru
          _
        // Predicated region
        $region109: #{tpu_custom_call.1} parent=87 // pred_check
          %p684 = pneg %p195
        $region110: #{tpu_custom_call.1} parent=87 // pred_check_branch
          %686 = sbr.rel (%p684) target = $region112
        $region111: #{tpu_custom_call.1} parent=87 // pred_region
          %687 = dma.done [#allocation12], 1024
        $region112: #{tpu_custom_call.1} parent=87 // pred_fallthru
          _
        // Predicated region
        $region113: #{tpu_custom_call.1} parent=87 // pred_check
          %p688 = pneg %p216
        $region114: #{tpu_custom_call.1} parent=87 // pred_check_branch
          %690 = sbr.rel (%p688) target = $region116
        $region115: #{tpu_custom_call.1} parent=87 // pred_region
          %691 = dma.done [#allocation12], 16
        $region116: #{tpu_custom_call.1} parent=87 // pred_fallthru
          _
        // Predicated region
        $region117: #{tpu_custom_call.1} parent=87 // pred_check
          %p692 = pneg %p237
        $region118: #{tpu_custom_call.1} parent=87 // pred_check_branch
          %694 = sbr.rel (%p692) target = $region120
        $region119: #{tpu_custom_call.1} parent=87 // pred_region
          %695 = dma.done [#allocation15], 1024
        $region120: #{tpu_custom_call.1} parent=87 // pred_fallthru
          _
        // Predicated region
        $region121: #{tpu_custom_call.1} parent=87 // pred_check
          %p696 = pneg %p258
        $region122: #{tpu_custom_call.1} parent=87 // pred_check_branch
          %698 = sbr.rel (%p696) target = $region124
        $region123: #{tpu_custom_call.1} parent=87 // pred_region
          %699 = dma.done [#allocation15], 16
        $region124: #{tpu_custom_call.1} parent=87 // pred_fallthru
          _
        // Predicated region
        $region125: #{tpu_custom_call.1} parent=87 // pred_check
          %p700 = pneg %p279
        $region126: #{tpu_custom_call.1} parent=87 // pred_check_branch
          %702 = sbr.rel (%p700) target = $region128
        $region127: #{tpu_custom_call.1} parent=87 // pred_region
          %703 = dma.done [#allocation18], 1024
        $region128: #{tpu_custom_call.1} parent=87 // pred_fallthru
          _
        // Predicated region
        $region129: #{tpu_custom_call.1} parent=87 // pred_check
          %p704 = pneg %p300
        $region130: #{tpu_custom_call.1} parent=87 // pred_check_branch
          %706 = sbr.rel (%p704) target = $region132
        $region131: #{tpu_custom_call.1} parent=87 // pred_region
          %707 = dma.done [#allocation18], 16
        $region132: #{tpu_custom_call.1} parent=87 // pred_fallthru
          _
        // Predicated region
        $region133: #{tpu_custom_call.1} parent=87 // pred_check
          %p708 = pneg %p321
        $region134: #{tpu_custom_call.1} parent=87 // pred_check_branch
          %710 = sbr.rel (%p708) target = $region136
        $region135: #{tpu_custom_call.1} parent=87 // pred_region
          %711 = dma.done [#allocation21], 16
        $region136: #{tpu_custom_call.1} parent=87 // pred_fallthru
          _
        // Predicated region
        $region137: #{tpu_custom_call.1} parent=87 // pred_check
          %p712 = pneg %p342
        $region138: #{tpu_custom_call.1} parent=87 // pred_check_branch
          %714 = sbr.rel (%p712) target = $region140
        $region139: #{tpu_custom_call.1} parent=87 // pred_region
          %715 = dma.done [#allocation21], 16
        $region140: #{tpu_custom_call.1} parent=87 // pred_fallthru
          _
        // Predicated region
        $region141: #{tpu_custom_call.1} parent=87 // pred_check
          %p716 = pneg %p363
        $region142: #{tpu_custom_call.1} parent=87 // pred_check_branch
          %718 = sbr.rel (%p716) target = $region144
        $region143: #{tpu_custom_call.1} parent=87 // pred_region
          %719 = dma.done [#allocation24], 2048
        $region144: #{tpu_custom_call.1} parent=87 // pred_fallthru
          _
        // Predicated region
        $region145: #{tpu_custom_call.1} parent=87 // pred_check
          %p720 = pneg %p405
        $region146: #{tpu_custom_call.1} parent=87 // pred_check_branch
          %722 = sbr.rel (%p720) target = $region148
        $region147: #{tpu_custom_call.1} parent=87 // pred_region
          %723 = dma.done [#allocation24], 2048
        $region148: #{tpu_custom_call.1} parent=87 // pred_fallthru
          _
        %s724 = sand.u32 %s51, 1
        %s725 = scalar_lea.sflag [#allocation3], %s724
        %s726 = sand.u32 %s51, 1
        %s727 = smul.addr %s726, 8
        %s728 = scalar_lea.vmem [#allocation2], %s727
        %p729 = pneg %p64
        %p730 = pneg %p61
        %s731 = sand.u32 %s43, 1
        %s732 = scalar_lea.sflag [#allocation6], %s731
        %s733 = sand.u32 %s77, 1
        %s734 = scalar_lea.vmem [#allocation5], %s733
        %p735 = pneg %p90
        %p736 = pneg %p87
        %p737 = pneg %p111
        %p738 = pneg %p108
        %p739 = pneg %p132
        %p740 = pneg %p129
        %p741 = pneg %p153
        %p742 = pneg %p150
        %p743 = pneg %p174
        %p744 = pneg %p171
        %p745 = pneg %p195
        %p746 = pneg %p192
        %p747 = pneg %p216
        %p748 = pneg %p213
        %p749 = pneg %p237
        %p750 = pneg %p234
        %p751 = pneg %p258
        %p752 = pneg %p255
        %p753 = pneg %p279
        %p754 = pneg %p276
        %p755 = pneg %p300
        %p756 = pneg %p297
        %p757 = pneg %p321
        %p758 = pneg %p318
        %p759 = pneg %p342
        %p760 = pneg %p339
        %p761 = pneg %p363
        %p762 = pneg %p360
        %p763 = pneg %p384
        %p764 = pneg %p381
        %p765 = pneg %p405
        %p766 = pneg %p402
        %p767 = pneg %p431
        %p768 = pneg %p428
        %s769 = sand.u32 %s418, 1
        %s770 = scalar_lea.sflag [#allocation4], %s769
        %s771 = sand.u32 %s418, 1
        %s772 = smul.addr %s771, 8
        %s773 = scalar_lea.vmem [#allocation26], %s772
        %v775 = vld [vmem:[%s659] sm:$0xff]
        %776 = vadd.xlane.f32.xlu0 %v775
        %v777 = vpop.xlane.xlu0 %776
        %v778 = vrcp.pop 128.0
        %v779 = vmul.f32 %v777, %v778
        %v780 = vsub.f32 %v775, %v779
        %v781 = vmul.f32 %v780, %v780
        %782 = vadd.xlane.f32.xlu0 %v781
        %v783 = vpop.xlane.xlu0 %782
        %v784 = vmul.f32 %v783, %v778
        %v785 = vadd.f32 %v784, 1e-07
        %v786 = vrsqrt.pop %v785
        %v787 = vmul.f32 %v780, %v786
        %v788 = vpack.c.bf16 %v787, %v787
        %v789 = vld [vmem:[#allocation8] sm:$0xf]
        %v790 = vld [vmem:[#allocation8 + $0x4] sm:$0xf]
        %v791 = vld [vmem:[#allocation8 + $0x8] sm:$0xf]
        %v792 = vld [vmem:[#allocation8 + $0xc] sm:$0xf]
        %v793 = vld [vmem:[#allocation8 + $0x10] sm:$0xf]
        %v794 = vld [vmem:[#allocation8 + $0x14] sm:$0xf]
        %v795 = vld [vmem:[#allocation8 + $0x18] sm:$0xf]
        %v796 = vld [vmem:[#allocation8 + $0x1c] sm:$0xf]
        %v797 = vld [vmem:[#allocation8 + $0x20] sm:$0xf]
        %v798 = vld [vmem:[#allocation8 + $0x24] sm:$0xf]
        %v799 = vld [vmem:[#allocation8 + $0x28] sm:$0xf]
        %v800 = vld [vmem:[#allocation8 + $0x2c] sm:$0xf]
        %v801 = vld [vmem:[#allocation8 + $0x30] sm:$0xf]
        %v802 = vld [vmem:[#allocation8 + $0x34] sm:$0xf]
        %v803 = vld [vmem:[#allocation8 + $0x38] sm:$0xf]
        %v804 = vld [vmem:[#allocation8 + $0x3c] sm:$0xf]
        %v805 = vld [vmem:[#allocation11] sm:$0xf]
        %v806 = vld [vmem:[#allocation11 + $0x4] sm:$0xf]
        %v807 = vld [vmem:[#allocation11 + $0x8] sm:$0xf]
        %v808 = vld [vmem:[#allocation11 + $0xc] sm:$0xf]
        %v809 = vld [vmem:[#allocation11 + $0x10] sm:$0xf]
        %v810 = vld [vmem:[#allocation11 + $0x14] sm:$0xf]
        %v811 = vld [vmem:[#allocation11 + $0x18] sm:$0xf]
        %v812 = vld [vmem:[#allocation11 + $0x1c] sm:$0xf]
        %v813 = vld [vmem:[#allocation11 + $0x20] sm:$0xf]
        %v814 = vld [vmem:[#allocation11 + $0x24] sm:$0xf]
        %v815 = vld [vmem:[#allocation11 + $0x28] sm:$0xf]
        %v816 = vld [vmem:[#allocation11 + $0x2c] sm:$0xf]
        %v817 = vld [vmem:[#allocation11 + $0x30] sm:$0xf]
        %v818 = vld [vmem:[#allocation11 + $0x34] sm:$0xf]
        %v819 = vld [vmem:[#allocation11 + $0x38] sm:$0xf]
        %v820 = vld [vmem:[#allocation11 + $0x3c] sm:$0xf]
        %v821 = vld [vmem:[#allocation10] sm:$0x1]
        %v823 = vlaneseq
        %v824 = vshrl.u32 %v823, 7
        %v825 = vsub.s32 0, %v824
        %v826 = vrot.slane %v821, %v825
        %v844 = vunpack.c.l.b16 %v789
        %v845 = vunpack.c.l.b16 %v790
        %v846 = vunpack.c.l.b16 %v791
        %v847 = vunpack.c.l.b16 %v792
        %v848 = vunpack.c.l.b16 %v793
        %v849 = vunpack.c.l.b16 %v794
        %v850 = vunpack.c.l.b16 %v795
        %v851 = vunpack.c.l.b16 %v796
        %v852 = vunpack.c.l.b16 %v797
        %v853 = vunpack.c.l.b16 %v798
        %v854 = vunpack.c.l.b16 %v799
        %v855 = vunpack.c.l.b16 %v800
        %v856 = vunpack.c.l.b16 %v801
        %v857 = vunpack.c.l.b16 %v802
        %v858 = vunpack.c.l.b16 %v803
        %v859 = vunpack.c.l.b16 %v804
        %v860 = vpack.c.b16 %v845, %v844
        %v861 = vpack.c.b16 %v847, %v846
        %v862 = vpack.c.b16 %v849, %v848
        %v863 = vpack.c.b16 %v851, %v850
        %v864 = vpack.c.b16 %v853, %v852
        %v865 = vpack.c.b16 %v855, %v854
        %v866 = vpack.c.b16 %v857, %v856
        %v867 = vpack.c.b16 %v859, %v858
        %876 = vmatprep.subr.bf16.mxu0 0
        %877 = vmatpush1.bf16.msra.mxu0 %v860
        %878 = vmatprep.subr.bf16.mxu0 0
        %879 = vmatpush1.bf16.msra.mxu0 %v861
        %880 = vmatprep.subr.bf16.mxu0 0
        %881 = vmatpush1.bf16.msra.mxu0 %v862
        %882 = vmatprep.subr.bf16.mxu0 0
        %883 = vmatpush1.bf16.msra.mxu0 %v863
        %884 = vmatprep.subr.bf16.mxu0 0
        %885 = vmatpush1.bf16.msra.mxu0 %v864
        %886 = vmatprep.subr.bf16.mxu0 0
        %887 = vmatpush1.bf16.msra.mxu0 %v865
        %888 = vmatprep.subr.bf16.mxu0 0
        %889 = vmatpush1.bf16.msra.mxu0 %v866
        %890 = vmatprep.subr.bf16.mxu0 0
        %891 = vmatpush1.bf16.msra.mxu0 %v867
        %892 = vmatprep.subr.bf16.mxu0 0
        %893 = vmatpush1.bf16.msra.mxu0 0
        %894 = vmatprep.subr.bf16.mxu0 0
        %895 = vmatpush1.bf16.msra.mxu0 0
        %896 = vmatprep.subr.bf16.mxu0 0
        %897 = vmatpush1.bf16.msra.mxu0 0
        %898 = vmatprep.subr.bf16.mxu0 0
        %899 = vmatpush1.bf16.msra.mxu0 0
        %900 = vmatprep.subr.bf16.mxu0 0
        %901 = vmatpush1.bf16.msra.mxu0 0
        %902 = vmatprep.subr.bf16.mxu0 0
        %903 = vmatpush1.bf16.msra.mxu0 0
        %904 = vmatprep.subr.bf16.mxu0 0
        %905 = vmatpush1.bf16.msra.mxu0 0
        %906 = vmatprep.subr.bf16.mxu0 0
        %907 = vmatpush1.bf16.msra.mxu0 0
        %908 = vmatprep.mubr.bf16.mxu0 0
        %909 = vmatmul.mubr.bf16.gmra.mrb[0].mxu0 %v788
        %v910 = vpop.f32.mrb[0].mxu0
        %v911 = vadd.f32 %v826, %v910
        %v912 = vpop.f32.mrb[0].mxu0
        %v913 = vpop.f32.mrb[0].mxu0
        %v914 = vpop.f32.mrb[0].mxu0
        %915 = vdwg.mxu0
        %v916 = vld [vmem:[#allocation13] sm:$0x1]
        %v918 = vlaneseq
        %v919 = vshrl.u32 %v918, 7
        %v920 = vsub.s32 0, %v919
        %v921 = vrot.slane %v916, %v920
        %v939 = vunpack.c.l.b16 %v805
        %v940 = vunpack.c.l.b16 %v806
        %v941 = vunpack.c.l.b16 %v807
        %v942 = vunpack.c.l.b16 %v808
        %v943 = vunpack.c.l.b16 %v809
        %v944 = vunpack.c.l.b16 %v810
        %v945 = vunpack.c.l.b16 %v811
        %v946 = vunpack.c.l.b16 %v812
        %v947 = vunpack.c.l.b16 %v813
        %v948 = vunpack.c.l.b16 %v814
        %v949 = vunpack.c.l.b16 %v815
        %v950 = vunpack.c.l.b16 %v816
        %v951 = vunpack.c.l.b16 %v817
        %v952 = vunpack.c.l.b16 %v818
        %v953 = vunpack.c.l.b16 %v819
        %v954 = vunpack.c.l.b16 %v820
        %v955 = vpack.c.b16 %v940, %v939
        %v956 = vpack.c.b16 %v942, %v941
        %v957 = vpack.c.b16 %v944, %v943
        %v958 = vpack.c.b16 %v946, %v945
        %v959 = vpack.c.b16 %v948, %v947
        %v960 = vpack.c.b16 %v950, %v949
        %v961 = vpack.c.b16 %v952, %v951
        %v962 = vpack.c.b16 %v954, %v953
        %971 = vmatprep.subr.bf16.mxu0 0
        %972 = vmatpush1.bf16.msra.mxu0 %v955
        %973 = vmatprep.subr.bf16.mxu0 0
        %974 = vmatpush1.bf16.msra.mxu0 %v956
        %975 = vmatprep.subr.bf16.mxu0 0
        %976 = vmatpush1.bf16.msra.mxu0 %v957
        %977 = vmatprep.subr.bf16.mxu0 0
        %978 = vmatpush1.bf16.msra.mxu0 %v958
        %979 = vmatprep.subr.bf16.mxu0 0
        %980 = vmatpush1.bf16.msra.mxu0 %v959
        %981 = vmatprep.subr.bf16.mxu0 0
        %982 = vmatpush1.bf16.msra.mxu0 %v960
        %983 = vmatprep.subr.bf16.mxu0 0
        %984 = vmatpush1.bf16.msra.mxu0 %v961
        %985 = vmatprep.subr.bf16.mxu0 0
        %986 = vmatpush1.bf16.msra.mxu0 %v962
        %987 = vmatprep.subr.bf16.mxu0 0
        %988 = vmatpush1.bf16.msra.mxu0 0
        %989 = vmatprep.subr.bf16.mxu0 0
        %990 = vmatpush1.bf16.msra.mxu0 0
        %991 = vmatprep.subr.bf16.mxu0 0
        %992 = vmatpush1.bf16.msra.mxu0 0
        %993 = vmatprep.subr.bf16.mxu0 0
        %994 = vmatpush1.bf16.msra.mxu0 0
        %995 = vmatprep.subr.bf16.mxu0 0
        %996 = vmatpush1.bf16.msra.mxu0 0
        %997 = vmatprep.subr.bf16.mxu0 0
        %998 = vmatpush1.bf16.msra.mxu0 0
        %999 = vmatprep.subr.bf16.mxu0 0
        %1000 = vmatpush1.bf16.msra.mxu0 0
        %1001 = vmatprep.subr.bf16.mxu0 0
        %1002 = vmatpush1.bf16.msra.mxu0 0
        %1003 = vmatprep.mubr.bf16.mxu0 0
        %1004 = vmatmul.mubr.bf16.gmra.mrb[0].mxu0 %v788
        %v1005 = vpop.f32.mrb[0].mxu0
        %v1006 = vadd.f32 %v921, %v1005
        %v1007 = vpop.f32.mrb[0].mxu0
        %v1008 = vpop.f32.mrb[0].mxu0
        %v1009 = vpop.f32.mrb[0].mxu0
        %1010 = vdwg.mxu0
        %v1011 = vld [vmem:[#allocation14] sm:$0xf]
        %v1012 = vld [vmem:[#allocation14 + $0x4] sm:$0xf]
        %v1013 = vld [vmem:[#allocation14 + $0x8] sm:$0xf]
        %v1014 = vld [vmem:[#allocation14 + $0xc] sm:$0xf]
        %v1015 = vld [vmem:[#allocation14 + $0x10] sm:$0xf]
        %v1016 = vld [vmem:[#allocation14 + $0x14] sm:$0xf]
        %v1017 = vld [vmem:[#allocation14 + $0x18] sm:$0xf]
        %v1018 = vld [vmem:[#allocation14 + $0x1c] sm:$0xf]
        %v1019 = vld [vmem:[#allocation14 + $0x20] sm:$0xf]
        %v1020 = vld [vmem:[#allocation14 + $0x24] sm:$0xf]
        %v1021 = vld [vmem:[#allocation14 + $0x28] sm:$0xf]
        %v1022 = vld [vmem:[#allocation14 + $0x2c] sm:$0xf]
        %v1023 = vld [vmem:[#allocation14 + $0x30] sm:$0xf]
        %v1024 = vld [vmem:[#allocation14 + $0x34] sm:$0xf]
        %v1025 = vld [vmem:[#allocation14 + $0x38] sm:$0xf]
        %v1026 = vld [vmem:[#allocation14 + $0x3c] sm:$0xf]
        %v1027 = vld [vmem:[#allocation16] sm:$0x1]
        %v1029 = vlaneseq
        %v1030 = vshrl.u32 %v1029, 7
        %v1031 = vsub.s32 0, %v1030
        %v1032 = vrot.slane %v1027, %v1031
        %v1050 = vunpack.c.l.b16 %v1011
        %v1051 = vunpack.c.l.b16 %v1012
        %v1052 = vunpack.c.l.b16 %v1013
        %v1053 = vunpack.c.l.b16 %v1014
        %v1054 = vunpack.c.l.b16 %v1015
        %v1055 = vunpack.c.l.b16 %v1016
        %v1056 = vunpack.c.l.b16 %v1017
        %v1057 = vunpack.c.l.b16 %v1018
        %v1058 = vunpack.c.l.b16 %v1019
        %v1059 = vunpack.c.l.b16 %v1020
        %v1060 = vunpack.c.l.b16 %v1021
        %v1061 = vunpack.c.l.b16 %v1022
        %v1062 = vunpack.c.l.b16 %v1023
        %v1063 = vunpack.c.l.b16 %v1024
        %v1064 = vunpack.c.l.b16 %v1025
        %v1065 = vunpack.c.l.b16 %v1026
        %v1066 = vpack.c.b16 %v1051, %v1050
        %v1067 = vpack.c.b16 %v1053, %v1052
        %v1068 = vpack.c.b16 %v1055, %v1054
        %v1069 = vpack.c.b16 %v1057, %v1056
        %v1070 = vpack.c.b16 %v1059, %v1058
        %v1071 = vpack.c.b16 %v1061, %v1060
        %v1072 = vpack.c.b16 %v1063, %v1062
        %v1073 = vpack.c.b16 %v1065, %v1064
        %1082 = vmatprep.subr.bf16.mxu0 0
        %1083 = vmatpush1.bf16.msra.mxu0 %v1066
        %1084 = vmatprep.subr.bf16.mxu0 0
        %1085 = vmatpush1.bf16.msra.mxu0 %v1067
        %1086 = vmatprep.subr.bf16.mxu0 0
        %1087 = vmatpush1.bf16.msra.mxu0 %v1068
        %1088 = vmatprep.subr.bf16.mxu0 0
        %1089 = vmatpush1.bf16.msra.mxu0 %v1069
        %1090 = vmatprep.subr.bf16.mxu0 0
        %1091 = vmatpush1.bf16.msra.mxu0 %v1070
        %1092 = vmatprep.subr.bf16.mxu0 0
        %1093 = vmatpush1.bf16.msra.mxu0 %v1071
        %1094 = vmatprep.subr.bf16.mxu0 0
        %1095 = vmatpush1.bf16.msra.mxu0 %v1072
        %1096 = vmatprep.subr.bf16.mxu0 0
        %1097 = vmatpush1.bf16.msra.mxu0 %v1073
        %1098 = vmatprep.subr.bf16.mxu0 0
        %1099 = vmatpush1.bf16.msra.mxu0 0
        %1100 = vmatprep.subr.bf16.mxu0 0
        %1101 = vmatpush1.bf16.msra.mxu0 0
        %1102 = vmatprep.subr.bf16.mxu0 0
        %1103 = vmatpush1.bf16.msra.mxu0 0
        %1104 = vmatprep.subr.bf16.mxu0 0
        %1105 = vmatpush1.bf16.msra.mxu0 0
        %1106 = vmatprep.subr.bf16.mxu0 0
        %1107 = vmatpush1.bf16.msra.mxu0 0
        %1108 = vmatprep.subr.bf16.mxu0 0
        %1109 = vmatpush1.bf16.msra.mxu0 0
        %1110 = vmatprep.subr.bf16.mxu0 0
        %1111 = vmatpush1.bf16.msra.mxu0 0
        %1112 = vmatprep.subr.bf16.mxu0 0
        %1113 = vmatpush1.bf16.msra.mxu0 0
        %1114 = vmatprep.mubr.bf16.mxu0 0
        %1115 = vmatmul.mubr.bf16.gmra.mrb[0].mxu0 %v788
        %v1116 = vpop.f32.mrb[0].mxu0
        %v1117 = vadd.f32 %v1032, %v1116
        %v1118 = vpop.f32.mrb[0].mxu0
        %v1119 = vpop.f32.mrb[0].mxu0
        %v1120 = vpop.f32.mrb[0].mxu0
        %1121 = vdwg.mxu0
        %v1122 = vld [vmem:[#allocation7] sm:$0xf]
        %v1123 = vld [vmem:[#allocation7 + $0x4] sm:$0xf]
        %v1124 = vld [vmem:[#allocation7 + $0x8] sm:$0xf]
        %v1125 = vld [vmem:[#allocation7 + $0xc] sm:$0xf]
        %v1130 = vunpack.c.l.b16 %v1122
        %v1131 = vunpack.c.l.b16 %v1123
        %v1132 = vunpack.c.l.b16 %v1124
        %v1133 = vunpack.c.l.b16 %v1125
        %v1134 = vpack.c.b16 %v1131, %v1130
        %v1135 = vpack.c.b16 %v1133, %v1132
        %1138 = vmatprep.subr.bf16.mxu0 0
        %1139 = vmatpush1.bf16.msra.mxu0 %v860
        %1140 = vmatprep.subr.bf16.mxu0 0
        %1141 = vmatpush1.bf16.msra.mxu0 %v861
        %1142 = vmatprep.subr.bf16.mxu0 0
        %1143 = vmatpush1.bf16.msra.mxu0 %v862
        %1144 = vmatprep.subr.bf16.mxu0 0
        %1145 = vmatpush1.bf16.msra.mxu0 %v863
        %1146 = vmatprep.subr.bf16.mxu0 0
        %1147 = vmatpush1.bf16.msra.mxu0 %v864
        %1148 = vmatprep.subr.bf16.mxu0 0
        %1149 = vmatpush1.bf16.msra.mxu0 %v865
        %1150 = vmatprep.subr.bf16.mxu0 0
        %1151 = vmatpush1.bf16.msra.mxu0 %v866
        %1152 = vmatprep.subr.bf16.mxu0 0
        %1153 = vmatpush1.bf16.msra.mxu0 %v867
        %1154 = vmatprep.subr.bf16.mxu0 0
        %1155 = vmatpush1.bf16.msra.mxu0 0
        %1156 = vmatprep.subr.bf16.mxu0 0
        %1157 = vmatpush1.bf16.msra.mxu0 0
        %1158 = vmatprep.subr.bf16.mxu0 0
        %1159 = vmatpush1.bf16.msra.mxu0 0
        %1160 = vmatprep.subr.bf16.mxu0 0
        %1161 = vmatpush1.bf16.msra.mxu0 0
        %1162 = vmatprep.subr.bf16.mxu0 0
        %1163 = vmatpush1.bf16.msra.mxu0 0
        %1164 = vmatprep.subr.bf16.mxu0 0
        %1165 = vmatpush1.bf16.msra.mxu0 0
        %1166 = vmatprep.subr.bf16.mxu0 0
        %1167 = vmatpush1.bf16.msra.mxu0 0
        %1168 = vmatprep.subr.bf16.mxu0 0
        %1169 = vmatpush1.bf16.msra.mxu0 0
        %1170 = vmatprep.mubr.bf16.mxu0 0
        %1171 = vmatmul.mubr.bf16.gmra.mrb[0].mxu0 %v1134
        %v1172 = vpop.f32.mrb[0].mxu0
        %v1173 = vadd.f32 %v826, %v1172
        %v1174 = vpop.f32.mrb[0].mxu0
        %v1175 = vpop.f32.mrb[0].mxu0
        %v1176 = vadd.f32 %v826, %v1175
        %v1177 = vpop.f32.mrb[0].mxu0
        %1178 = vmatprep.mubr.bf16.mxu0 0
        %1179 = vmatmul.mubr.bf16.gmra.mrb[0].mxu0 %v1135
        %v1180 = vpop.f32.mrb[0].mxu0
        %v1181 = vadd.f32 %v826, %v1180
        %v1182 = vpop.f32.mrb[0].mxu0
        %v1183 = vpop.f32.mrb[0].mxu0
        %v1184 = vadd.f32 %v826, %v1183
        %v1185 = vpop.f32.mrb[0].mxu0
        %1186 = vdwg.mxu0
        %1187 = vmatprep.subr.bf16.mxu0 0
        %1188 = vmatpush1.bf16.msra.mxu0 %v955
        %1189 = vmatprep.subr.bf16.mxu0 0
        %1190 = vmatpush1.bf16.msra.mxu0 %v956
        %1191 = vmatprep.subr.bf16.mxu0 0
        %1192 = vmatpush1.bf16.msra.mxu0 %v957
        %1193 = vmatprep.subr.bf16.mxu0 0
        %1194 = vmatpush1.bf16.msra.mxu0 %v958
        %1195 = vmatprep.subr.bf16.mxu0 0
        %1196 = vmatpush1.bf16.msra.mxu0 %v959
        %1197 = vmatprep.subr.bf16.mxu0 0
        %1198 = vmatpush1.bf16.msra.mxu0 %v960
        %1199 = vmatprep.subr.bf16.mxu0 0
        %1200 = vmatpush1.bf16.msra.mxu0 %v961
        %1201 = vmatprep.subr.bf16.mxu0 0
        %1202 = vmatpush1.bf16.msra.mxu0 %v962
        %1203 = vmatprep.subr.bf16.mxu0 0
        %1204 = vmatpush1.bf16.msra.mxu0 0
        %1205 = vmatprep.subr.bf16.mxu0 0
        %1206 = vmatpush1.bf16.msra.mxu0 0
        %1207 = vmatprep.subr.bf16.mxu0 0
        %1208 = vmatpush1.bf16.msra.mxu0 0
        %1209 = vmatprep.subr.bf16.mxu0 0
        %1210 = vmatpush1.bf16.msra.mxu0 0
        %1211 = vmatprep.subr.bf16.mxu0 0
        %1212 = vmatpush1.bf16.msra.mxu0 0
        %1213 = vmatprep.subr.bf16.mxu0 0
        %1214 = vmatpush1.bf16.msra.mxu0 0
        %1215 = vmatprep.subr.bf16.mxu0 0
        %1216 = vmatpush1.bf16.msra.mxu0 0
        %1217 = vmatprep.subr.bf16.mxu0 0
        %1218 = vmatpush1.bf16.msra.mxu0 0
        %1219 = vmatprep.mubr.bf16.mxu0 0
        %1220 = vmatmul.mubr.bf16.gmra.mrb[0].mxu0 %v1134
        %v1221 = vpop.f32.mrb[0].mxu0
        %v1222 = vadd.f32 %v921, %v1221
        %v1223 = vpop.f32.mrb[0].mxu0
        %v1224 = vpop.f32.mrb[0].mxu0
        %v1225 = vadd.f32 %v921, %v1224
        %v1226 = vpop.f32.mrb[0].mxu0
        %1227 = vmatprep.mubr.bf16.mxu0 0
        %1228 = vmatmul.mubr.bf16.gmra.mrb[0].mxu0 %v1135
        %v1229 = vpop.f32.mrb[0].mxu0
        %v1230 = vadd.f32 %v921, %v1229
        %v1231 = vpop.f32.mrb[0].mxu0
        %v1232 = vpop.f32.mrb[0].mxu0
        %v1233 = vadd.f32 %v921, %v1232
        %v1234 = vpop.f32.mrb[0].mxu0
        %1235 = vdwg.mxu0
        %v1236 = vmul.f32 %v911, 0.10206208
        %1238 = vrot.lane.b32.xlu0 %v1236, 96
        %v1239 = vpop.permute.xlu0 %1238
        %1241 = vrot.lane.b32.xlu0 %v1236, 64
        %v1242 = vpop.permute.xlu0 %1241
        %1244 = vrot.lane.b32.xlu0 %v1236, 32
        %v1245 = vpop.permute.xlu0 %1244
        %v1247 = vcombine.low %v1236, %v1242
        %v1248 = vcombine.high %v1236, %v1242
        %v1250 = vunpack.c.l.s4 1983009808
        %v1251 = vunpack.c.0.s8 %v1250
        %v1252 = vlaneseq
        %v1253 = vshrl.u32 %v1252, 7
        %v1254 = vsub.s32 %v1251, %v1253
        %v1255 = vrot.slane %v1247, %v1254
        %v1257 = vunpack.c.l.s4 1983009808
        %v1258 = vunpack.c.0.s8 %v1257
        %v1259 = vlaneseq
        %v1260 = vshrl.u32 %v1259, 7
        %v1261 = vsub.s32 %v1258, %v1260
        %v1262 = vrot.slane %v1248, %v1261
        %v1263 = vcombine.low %v1239, %v1245
        %v1264 = vcombine.high %v1239, %v1245
        %v1266 = vunpack.c.l.s4 1983009808
        %v1267 = vunpack.c.0.s8 %v1266
        %v1268 = vlaneseq
        %v1269 = vshrl.u32 %v1268, 7
        %v1270 = vsub.s32 %v1267, %v1269
        %v1271 = vrot.slane %v1263, %v1270
        %v1273 = vunpack.c.l.s4 1983009808
        %v1274 = vunpack.c.0.s8 %v1273
        %v1275 = vlaneseq
        %v1276 = vshrl.u32 %v1275, 7
        %v1277 = vsub.s32 %v1274, %v1276
        %v1278 = vrot.slane %v1264, %v1277
        %v1279 = vcombine.low %v1255, %v1271
        %v1280 = vcombine.high %v1255, %v1271
        %v1282 = vunpack.c.l.s4 1934713408
        %v1283 = vunpack.c.0.s8 %v1282
        %v1284 = vlaneseq
        %v1285 = vshrl.u32 %v1284, 7
        %v1286 = vsub.s32 %v1283, %v1285
        %v1287 = vrot.slane %v1279, %v1286
        %v1289 = vunpack.c.l.s4 1934713408
        %v1290 = vunpack.c.0.s8 %v1289
        %v1291 = vlaneseq
        %v1292 = vshrl.u32 %v1291, 7
        %v1293 = vsub.s32 %v1290, %v1292
        %v1294 = vrot.slane %v1280, %v1293
        %v1295 = vcombine.low %v1262, %v1278
        %v1296 = vcombine.high %v1262, %v1278
        %v1298 = vunpack.c.l.s4 1934713408
        %v1299 = vunpack.c.0.s8 %v1298
        %v1300 = vlaneseq
        %v1301 = vshrl.u32 %v1300, 7
        %v1302 = vsub.s32 %v1299, %v1301
        %v1303 = vrot.slane %v1295, %v1302
        %v1305 = vunpack.c.l.s4 1934713408
        %v1306 = vunpack.c.0.s8 %v1305
        %v1307 = vlaneseq
        %v1308 = vshrl.u32 %v1307, 7
        %v1309 = vsub.s32 %v1306, %v1308
        %v1310 = vrot.slane %v1296, %v1309
        %v1311 = vcombine.high %v1287, 0.0
        %v1312 = vcombine.high %v1294, 0.0
        %v1313 = vcombine.high %v1303, 0.0
        %v1314 = vcombine.high %v1310, 0.0
        %v1315 = vcombine.low %v1287, %v1294
        %v1317 = vunpack.c.l.s4 1983009808
        %v1318 = vunpack.c.0.s8 %v1317
        %v1319 = vlaneseq
        %v1320 = vshrl.u32 %v1319, 7
        %v1321 = vsub.s32 %v1318, %v1320
        %v1322 = vrot.slane %v1315, %v1321
        %v1323 = vcombine.low %v1311, %v1312
        %v1325 = vunpack.c.l.s4 1983009808
        %v1326 = vunpack.c.0.s8 %v1325
        %v1327 = vlaneseq
        %v1328 = vshrl.u32 %v1327, 7
        %v1329 = vsub.s32 %v1326, %v1328
        %v1330 = vrot.slane %v1323, %v1329
        %v1331 = vcombine.low %v1303, %v1310
        %v1333 = vunpack.c.l.s4 1983009808
        %v1334 = vunpack.c.0.s8 %v1333
        %v1335 = vlaneseq
        %v1336 = vshrl.u32 %v1335, 7
        %v1337 = vsub.s32 %v1334, %v1336
        %v1338 = vrot.slane %v1331, %v1337
        %v1339 = vcombine.low %v1313, %v1314
        %v1341 = vunpack.c.l.s4 1983009808
        %v1342 = vunpack.c.0.s8 %v1341
        %v1343 = vlaneseq
        %v1344 = vshrl.u32 %v1343, 7
        %v1345 = vsub.s32 %v1342, %v1344
        %v1346 = vrot.slane %v1339, %v1345
        %v1347 = vcombine.low %v1322, %v1330
        %v1348 = vcombine.high %v1322, %v1330
        %v1350 = vunpack.c.l.s4 1934713408
        %v1351 = vunpack.c.0.s8 %v1350
        %v1352 = vlaneseq
        %v1353 = vshrl.u32 %v1352, 7
        %v1354 = vsub.s32 %v1351, %v1353
        %v1355 = vrot.slane %v1347, %v1354
        %v1357 = vunpack.c.l.s4 1934713408
        %v1358 = vunpack.c.0.s8 %v1357
        %v1359 = vlaneseq
        %v1360 = vshrl.u32 %v1359, 7
        %v1361 = vsub.s32 %v1358, %v1360
        %v1362 = vrot.slane %v1348, %v1361
        %v1363 = vcombine.low %v1338, %v1346
        %v1364 = vcombine.high %v1338, %v1346
        %v1366 = vunpack.c.l.s4 1934713408
        %v1367 = vunpack.c.0.s8 %v1366
        %v1368 = vlaneseq
        %v1369 = vshrl.u32 %v1368, 7
        %v1370 = vsub.s32 %v1367, %v1369
        %v1371 = vrot.slane %v1363, %v1370
        %v1373 = vunpack.c.l.s4 1934713408
        %v1374 = vunpack.c.0.s8 %v1373
        %v1375 = vlaneseq
        %v1376 = vshrl.u32 %v1375, 7
        %v1377 = vsub.s32 %v1374, %v1376
        %v1378 = vrot.slane %v1364, %v1377
        %v1379 = vcombine.low %v1355, %v1371
        %v1380 = vcombine.high %v1355, %v1371
        %v1381 = vcombine.low %v1362, %v1378
        %v1382 = vcombine.high %v1362, %v1378
        %v1383 = vpack.c.bf16 %v1379, %v1379
        %v1384 = vpack.c.bf16 %v1380, %v1380
        %v1385 = vpack.c.bf16 %v1381, %v1381
        %v1386 = vpack.c.bf16 %v1382, %v1382
        %1388 = vrot.lane.b32.xlu0 %v1006, 96
        %v1389 = vpop.permute.xlu0 %1388
        %1391 = vrot.lane.b32.xlu0 %v1006, 64
        %v1392 = vpop.permute.xlu0 %1391
        %1394 = vrot.lane.b32.xlu0 %v1006, 32
        %v1395 = vpop.permute.xlu0 %1394
        %v1397 = vcombine.low %v1006, %v1392
        %v1398 = vcombine.high %v1006, %v1392
        %v1400 = vunpack.c.l.s4 1983009808
        %v1401 = vunpack.c.0.s8 %v1400
        %v1402 = vlaneseq
        %v1403 = vshrl.u32 %v1402, 7
        %v1404 = vsub.s32 %v1401, %v1403
        %v1405 = vrot.slane %v1397, %v1404
        %v1407 = vunpack.c.l.s4 1983009808
        %v1408 = vunpack.c.0.s8 %v1407
        %v1409 = vlaneseq
        %v1410 = vshrl.u32 %v1409, 7
        %v1411 = vsub.s32 %v1408, %v1410
        %v1412 = vrot.slane %v1398, %v1411
        %v1413 = vcombine.low %v1389, %v1395
        %v1414 = vcombine.high %v1389, %v1395
        %v1416 = vunpack.c.l.s4 1983009808
        %v1417 = vunpack.c.0.s8 %v1416
        %v1418 = vlaneseq
        %v1419 = vshrl.u32 %v1418, 7
        %v1420 = vsub.s32 %v1417, %v1419
        %v1421 = vrot.slane %v1413, %v1420
        %v1423 = vunpack.c.l.s4 1983009808
        %v1424 = vunpack.c.0.s8 %v1423
        %v1425 = vlaneseq
        %v1426 = vshrl.u32 %v1425, 7
        %v1427 = vsub.s32 %v1424, %v1426
        %v1428 = vrot.slane %v1414, %v1427
        %v1429 = vcombine.low %v1405, %v1421
        %v1430 = vcombine.high %v1405, %v1421
        %v1432 = vunpack.c.l.s4 1934713408
        %v1433 = vunpack.c.0.s8 %v1432
        %v1434 = vlaneseq
        %v1435 = vshrl.u32 %v1434, 7
        %v1436 = vsub.s32 %v1433, %v1435
        %v1437 = vrot.slane %v1429, %v1436
        %v1439 = vunpack.c.l.s4 1934713408
        %v1440 = vunpack.c.0.s8 %v1439
        %v1441 = vlaneseq
        %v1442 = vshrl.u32 %v1441, 7
        %v1443 = vsub.s32 %v1440, %v1442
        %v1444 = vrot.slane %v1430, %v1443
        %v1445 = vcombine.low %v1412, %v1428
        %v1446 = vcombine.high %v1412, %v1428
        %v1448 = vunpack.c.l.s4 1934713408
        %v1449 = vunpack.c.0.s8 %v1448
        %v1450 = vlaneseq
        %v1451 = vshrl.u32 %v1450, 7
        %v1452 = vsub.s32 %v1449, %v1451
        %v1453 = vrot.slane %v1445, %v1452
        %v1455 = vunpack.c.l.s4 1934713408
        %v1456 = vunpack.c.0.s8 %v1455
        %v1457 = vlaneseq
        %v1458 = vshrl.u32 %v1457, 7
        %v1459 = vsub.s32 %v1456, %v1458
        %v1460 = vrot.slane %v1446, %v1459
        %v1461 = vcombine.high %v1437, 0.0
        %v1462 = vcombine.high %v1444, 0.0
        %v1463 = vcombine.high %v1453, 0.0
        %v1464 = vcombine.high %v1460, 0.0
        %v1465 = vcombine.low %v1437, %v1444
        %v1467 = vunpack.c.l.s4 1983009808
        %v1468 = vunpack.c.0.s8 %v1467
        %v1469 = vlaneseq
        %v1470 = vshrl.u32 %v1469, 7
        %v1471 = vsub.s32 %v1468, %v1470
        %v1472 = vrot.slane %v1465, %v1471
        %v1473 = vcombine.low %v1461, %v1462
        %v1475 = vunpack.c.l.s4 1983009808
        %v1476 = vunpack.c.0.s8 %v1475
        %v1477 = vlaneseq
        %v1478 = vshrl.u32 %v1477, 7
        %v1479 = vsub.s32 %v1476, %v1478
        %v1480 = vrot.slane %v1473, %v1479
        %v1481 = vcombine.low %v1453, %v1460
        %v1483 = vunpack.c.l.s4 1983009808
        %v1484 = vunpack.c.0.s8 %v1483
        %v1485 = vlaneseq
        %v1486 = vshrl.u32 %v1485, 7
        %v1487 = vsub.s32 %v1484, %v1486
        %v1488 = vrot.slane %v1481, %v1487
        %v1489 = vcombine.low %v1463, %v1464
        %v1491 = vunpack.c.l.s4 1983009808
        %v1492 = vunpack.c.0.s8 %v1491
        %v1493 = vlaneseq
        %v1494 = vshrl.u32 %v1493, 7
        %v1495 = vsub.s32 %v1492, %v1494
        %v1496 = vrot.slane %v1489, %v1495
        %v1497 = vcombine.low %v1472, %v1480
        %v1498 = vcombine.high %v1472, %v1480
        %v1500 = vunpack.c.l.s4 1934713408
        %v1501 = vunpack.c.0.s8 %v1500
        %v1502 = vlaneseq
        %v1503 = vshrl.u32 %v1502, 7
        %v1504 = vsub.s32 %v1501, %v1503
        %v1505 = vrot.slane %v1497, %v1504
        %v1507 = vunpack.c.l.s4 1934713408
        %v1508 = vunpack.c.0.s8 %v1507
        %v1509 = vlaneseq
        %v1510 = vshrl.u32 %v1509, 7
        %v1511 = vsub.s32 %v1508, %v1510
        %v1512 = vrot.slane %v1498, %v1511
        %v1513 = vcombine.low %v1488, %v1496
        %v1514 = vcombine.high %v1488, %v1496
        %v1516 = vunpack.c.l.s4 1934713408
        %v1517 = vunpack.c.0.s8 %v1516
        %v1518 = vlaneseq
        %v1519 = vshrl.u32 %v1518, 7
        %v1520 = vsub.s32 %v1517, %v1519
        %v1521 = vrot.slane %v1513, %v1520
        %v1523 = vunpack.c.l.s4 1934713408
        %v1524 = vunpack.c.0.s8 %v1523
        %v1525 = vlaneseq
        %v1526 = vshrl.u32 %v1525, 7
        %v1527 = vsub.s32 %v1524, %v1526
        %v1528 = vrot.slane %v1514, %v1527
        %v1529 = vcombine.low %v1505, %v1521
        %v1530 = vcombine.high %v1505, %v1521
        %v1531 = vcombine.low %v1512, %v1528
        %v1532 = vcombine.high %v1512, %v1528
        %v1533 = vpack.c.bf16 %v1529, %v1529
        %v1534 = vpack.c.bf16 %v1530, %v1530
        %v1535 = vpack.c.bf16 %v1531, %v1531
        %v1536 = vpack.c.bf16 %v1532, %v1532
        %1538 = vrot.lane.b32.xlu0 %v1117, 96
        %v1539 = vpop.permute.xlu0 %1538
        %1541 = vrot.lane.b32.xlu0 %v1117, 64
        %v1542 = vpop.permute.xlu0 %1541
        %1544 = vrot.lane.b32.xlu0 %v1117, 32
        %v1545 = vpop.permute.xlu0 %1544
        %v1547 = vcombine.low %v1117, %v1542
        %v1548 = vcombine.high %v1117, %v1542
        %v1550 = vunpack.c.l.s4 1983009808
        %v1551 = vunpack.c.0.s8 %v1550
        %v1552 = vlaneseq
        %v1553 = vshrl.u32 %v1552, 7
        %v1554 = vsub.s32 %v1551, %v1553
        %v1555 = vrot.slane %v1547, %v1554
        %v1557 = vunpack.c.l.s4 1983009808
        %v1558 = vunpack.c.0.s8 %v1557
        %v1559 = vlaneseq
        %v1560 = vshrl.u32 %v1559, 7
        %v1561 = vsub.s32 %v1558, %v1560
        %v1562 = vrot.slane %v1548, %v1561
        %v1563 = vcombine.low %v1539, %v1545
        %v1564 = vcombine.high %v1539, %v1545
        %v1566 = vunpack.c.l.s4 1983009808
        %v1567 = vunpack.c.0.s8 %v1566
        %v1568 = vlaneseq
        %v1569 = vshrl.u32 %v1568, 7
        %v1570 = vsub.s32 %v1567, %v1569
        %v1571 = vrot.slane %v1563, %v1570
        %v1573 = vunpack.c.l.s4 1983009808
        %v1574 = vunpack.c.0.s8 %v1573
        %v1575 = vlaneseq
        %v1576 = vshrl.u32 %v1575, 7
        %v1577 = vsub.s32 %v1574, %v1576
        %v1578 = vrot.slane %v1564, %v1577
        %v1579 = vcombine.low %v1555, %v1571
        %v1580 = vcombine.high %v1555, %v1571
        %v1582 = vunpack.c.l.s4 1934713408
        %v1583 = vunpack.c.0.s8 %v1582
        %v1584 = vlaneseq
        %v1585 = vshrl.u32 %v1584, 7
        %v1586 = vsub.s32 %v1583, %v1585
        %v1587 = vrot.slane %v1579, %v1586
        %v1589 = vunpack.c.l.s4 1934713408
        %v1590 = vunpack.c.0.s8 %v1589
        %v1591 = vlaneseq
        %v1592 = vshrl.u32 %v1591, 7
        %v1593 = vsub.s32 %v1590, %v1592
        %v1594 = vrot.slane %v1580, %v1593
        %v1595 = vcombine.low %v1562, %v1578
        %v1596 = vcombine.high %v1562, %v1578
        %v1598 = vunpack.c.l.s4 1934713408
        %v1599 = vunpack.c.0.s8 %v1598
        %v1600 = vlaneseq
        %v1601 = vshrl.u32 %v1600, 7
        %v1602 = vsub.s32 %v1599, %v1601
        %v1603 = vrot.slane %v1595, %v1602
        %v1605 = vunpack.c.l.s4 1934713408
        %v1606 = vunpack.c.0.s8 %v1605
        %v1607 = vlaneseq
        %v1608 = vshrl.u32 %v1607, 7
        %v1609 = vsub.s32 %v1606, %v1608
        %v1610 = vrot.slane %v1596, %v1609
        %v1611 = vcombine.high %v1587, 0.0
        %v1612 = vcombine.high %v1594, 0.0
        %v1613 = vcombine.high %v1603, 0.0
        %v1614 = vcombine.high %v1610, 0.0
        %v1615 = vcombine.low %v1587, %v1594
        %v1617 = vunpack.c.l.s4 1983009808
        %v1618 = vunpack.c.0.s8 %v1617
        %v1619 = vlaneseq
        %v1620 = vshrl.u32 %v1619, 7
        %v1621 = vsub.s32 %v1618, %v1620
        %v1622 = vrot.slane %v1615, %v1621
        %v1623 = vcombine.low %v1611, %v1612
        %v1625 = vunpack.c.l.s4 1983009808
        %v1626 = vunpack.c.0.s8 %v1625
        %v1627 = vlaneseq
        %v1628 = vshrl.u32 %v1627, 7
        %v1629 = vsub.s32 %v1626, %v1628
        %v1630 = vrot.slane %v1623, %v1629
        %v1631 = vcombine.low %v1603, %v1610
        %v1633 = vunpack.c.l.s4 1983009808
        %v1634 = vunpack.c.0.s8 %v1633
        %v1635 = vlaneseq
        %v1636 = vshrl.u32 %v1635, 7
        %v1637 = vsub.s32 %v1634, %v1636
        %v1638 = vrot.slane %v1631, %v1637
        %v1639 = vcombine.low %v1613, %v1614
        %v1641 = vunpack.c.l.s4 1983009808
        %v1642 = vunpack.c.0.s8 %v1641
        %v1643 = vlaneseq
        %v1644 = vshrl.u32 %v1643, 7
        %v1645 = vsub.s32 %v1642, %v1644
        %v1646 = vrot.slane %v1639, %v1645
        %v1647 = vcombine.low %v1622, %v1630
        %v1648 = vcombine.high %v1622, %v1630
        %v1650 = vunpack.c.l.s4 1934713408
        %v1651 = vunpack.c.0.s8 %v1650
        %v1652 = vlaneseq
        %v1653 = vshrl.u32 %v1652, 7
        %v1654 = vsub.s32 %v1651, %v1653
        %v1655 = vrot.slane %v1647, %v1654
        %v1657 = vunpack.c.l.s4 1934713408
        %v1658 = vunpack.c.0.s8 %v1657
        %v1659 = vlaneseq
        %v1660 = vshrl.u32 %v1659, 7
        %v1661 = vsub.s32 %v1658, %v1660
        %v1662 = vrot.slane %v1648, %v1661
        %v1663 = vcombine.low %v1638, %v1646
        %v1664 = vcombine.high %v1638, %v1646
        %v1666 = vunpack.c.l.s4 1934713408
        %v1667 = vunpack.c.0.s8 %v1666
        %v1668 = vlaneseq
        %v1669 = vshrl.u32 %v1668, 7
        %v1670 = vsub.s32 %v1667, %v1669
        %v1671 = vrot.slane %v1663, %v1670
        %v1673 = vunpack.c.l.s4 1934713408
        %v1674 = vunpack.c.0.s8 %v1673
        %v1675 = vlaneseq
        %v1676 = vshrl.u32 %v1675, 7
        %v1677 = vsub.s32 %v1674, %v1676
        %v1678 = vrot.slane %v1664, %v1677
        %v1679 = vcombine.low %v1655, %v1671
        %v1680 = vcombine.high %v1655, %v1671
        %v1681 = vcombine.low %v1662, %v1678
        %v1682 = vcombine.high %v1662, %v1678
        %v1683 = vpack.c.bf16 %v1679, %v1679
        %v1684 = vpack.c.bf16 %v1680, %v1680
        %v1685 = vpack.c.bf16 %v1681, %v1681
        %v1686 = vpack.c.bf16 %v1682, %v1682
        %1691 = vrot.lane.b32.xlu0 %v1222, 96
        %v1692 = vpop.permute.xlu0 %1691
        %1693 = vrot.lane.b32.xlu0 %v1225, 96
        %v1694 = vpop.permute.xlu0 %1693
        %1695 = vrot.lane.b32.xlu0 %v1230, 96
        %v1696 = vpop.permute.xlu0 %1695
        %1697 = vrot.lane.b32.xlu0 %v1233, 96
        %v1698 = vpop.permute.xlu0 %1697
        %1703 = vrot.lane.b32.xlu0 %v1222, 64
        %v1704 = vpop.permute.xlu0 %1703
        %1705 = vrot.lane.b32.xlu0 %v1225, 64
        %v1706 = vpop.permute.xlu0 %1705
        %1707 = vrot.lane.b32.xlu0 %v1230, 64
        %v1708 = vpop.permute.xlu0 %1707
        %1709 = vrot.lane.b32.xlu0 %v1233, 64
        %v1710 = vpop.permute.xlu0 %1709
        %1715 = vrot.lane.b32.xlu0 %v1222, 32
        %v1716 = vpop.permute.xlu0 %1715
        %1717 = vrot.lane.b32.xlu0 %v1225, 32
        %v1718 = vpop.permute.xlu0 %1717
        %1719 = vrot.lane.b32.xlu0 %v1230, 32
        %v1720 = vpop.permute.xlu0 %1719
        %1721 = vrot.lane.b32.xlu0 %v1233, 32
        %v1722 = vpop.permute.xlu0 %1721
        %v1727 = vcombine.low %v1222, %v1704
        %v1728 = vcombine.high %v1222, %v1704
        %v1730 = vunpack.c.l.s4 1983009808
        %v1731 = vunpack.c.0.s8 %v1730
        %v1732 = vlaneseq
        %v1733 = vshrl.u32 %v1732, 7
        %v1734 = vsub.s32 %v1731, %v1733
        %v1735 = vrot.slane %v1727, %v1734
        %v1737 = vunpack.c.l.s4 1983009808
        %v1738 = vunpack.c.0.s8 %v1737
        %v1739 = vlaneseq
        %v1740 = vshrl.u32 %v1739, 7
        %v1741 = vsub.s32 %v1738, %v1740
        %v1742 = vrot.slane %v1728, %v1741
        %v1743 = vcombine.low %v1692, %v1716
        %v1744 = vcombine.high %v1692, %v1716
        %v1746 = vunpack.c.l.s4 1983009808
        %v1747 = vunpack.c.0.s8 %v1746
        %v1748 = vlaneseq
        %v1749 = vshrl.u32 %v1748, 7
        %v1750 = vsub.s32 %v1747, %v1749
        %v1751 = vrot.slane %v1743, %v1750
        %v1753 = vunpack.c.l.s4 1983009808
        %v1754 = vunpack.c.0.s8 %v1753
        %v1755 = vlaneseq
        %v1756 = vshrl.u32 %v1755, 7
        %v1757 = vsub.s32 %v1754, %v1756
        %v1758 = vrot.slane %v1744, %v1757
        %v1759 = vcombine.low %v1735, %v1751
        %v1760 = vcombine.high %v1735, %v1751
        %v1762 = vunpack.c.l.s4 1934713408
        %v1763 = vunpack.c.0.s8 %v1762
        %v1764 = vlaneseq
        %v1765 = vshrl.u32 %v1764, 7
        %v1766 = vsub.s32 %v1763, %v1765
        %v1767 = vrot.slane %v1759, %v1766
        %v1769 = vunpack.c.l.s4 1934713408
        %v1770 = vunpack.c.0.s8 %v1769
        %v1771 = vlaneseq
        %v1772 = vshrl.u32 %v1771, 7
        %v1773 = vsub.s32 %v1770, %v1772
        %v1774 = vrot.slane %v1760, %v1773
        %v1775 = vcombine.low %v1742, %v1758
        %v1776 = vcombine.high %v1742, %v1758
        %v1778 = vunpack.c.l.s4 1934713408
        %v1779 = vunpack.c.0.s8 %v1778
        %v1780 = vlaneseq
        %v1781 = vshrl.u32 %v1780, 7
        %v1782 = vsub.s32 %v1779, %v1781
        %v1783 = vrot.slane %v1775, %v1782
        %v1785 = vunpack.c.l.s4 1934713408
        %v1786 = vunpack.c.0.s8 %v1785
        %v1787 = vlaneseq
        %v1788 = vshrl.u32 %v1787, 7
        %v1789 = vsub.s32 %v1786, %v1788
        %v1790 = vrot.slane %v1776, %v1789
        %v1791 = vcombine.high %v1767, 0.0
        %v1792 = vcombine.high %v1774, 0.0
        %v1793 = vcombine.high %v1783, 0.0
        %v1794 = vcombine.high %v1790, 0.0
        %v1795 = vcombine.low %v1225, %v1706
        %v1796 = vcombine.high %v1225, %v1706
        %v1798 = vunpack.c.l.s4 1983009808
        %v1799 = vunpack.c.0.s8 %v1798
        %v1800 = vlaneseq
        %v1801 = vshrl.u32 %v1800, 7
        %v1802 = vsub.s32 %v1799, %v1801
        %v1803 = vrot.slane %v1795, %v1802
        %v1805 = vunpack.c.l.s4 1983009808
        %v1806 = vunpack.c.0.s8 %v1805
        %v1807 = vlaneseq
        %v1808 = vshrl.u32 %v1807, 7
        %v1809 = vsub.s32 %v1806, %v1808
        %v1810 = vrot.slane %v1796, %v1809
        %v1811 = vcombine.low %v1694, %v1718
        %v1812 = vcombine.high %v1694, %v1718
        %v1814 = vunpack.c.l.s4 1983009808
        %v1815 = vunpack.c.0.s8 %v1814
        %v1816 = vlaneseq
        %v1817 = vshrl.u32 %v1816, 7
        %v1818 = vsub.s32 %v1815, %v1817
        %v1819 = vrot.slane %v1811, %v1818
        %v1821 = vunpack.c.l.s4 1983009808
        %v1822 = vunpack.c.0.s8 %v1821
        %v1823 = vlaneseq
        %v1824 = vshrl.u32 %v1823, 7
        %v1825 = vsub.s32 %v1822, %v1824
        %v1826 = vrot.slane %v1812, %v1825
        %v1827 = vcombine.low %v1803, %v1819
        %v1828 = vcombine.high %v1803, %v1819
        %v1830 = vunpack.c.l.s4 1934713408
        %v1831 = vunpack.c.0.s8 %v1830
        %v1832 = vlaneseq
        %v1833 = vshrl.u32 %v1832, 7
        %v1834 = vsub.s32 %v1831, %v1833
        %v1835 = vrot.slane %v1827, %v1834
        %v1837 = vunpack.c.l.s4 1934713408
        %v1838 = vunpack.c.0.s8 %v1837
        %v1839 = vlaneseq
        %v1840 = vshrl.u32 %v1839, 7
        %v1841 = vsub.s32 %v1838, %v1840
        %v1842 = vrot.slane %v1828, %v1841
        %v1843 = vcombine.low %v1810, %v1826
        %v1844 = vcombine.high %v1810, %v1826
        %v1846 = vunpack.c.l.s4 1934713408
        %v1847 = vunpack.c.0.s8 %v1846
        %v1848 = vlaneseq
        %v1849 = vshrl.u32 %v1848, 7
        %v1850 = vsub.s32 %v1847, %v1849
        %v1851 = vrot.slane %v1843, %v1850
        %v1853 = vunpack.c.l.s4 1934713408
        %v1854 = vunpack.c.0.s8 %v1853
        %v1855 = vlaneseq
        %v1856 = vshrl.u32 %v1855, 7
        %v1857 = vsub.s32 %v1854, %v1856
        %v1858 = vrot.slane %v1844, %v1857
        %v1859 = vcombine.high %v1835, 0.0
        %v1860 = vcombine.high %v1842, 0.0
        %v1861 = vcombine.high %v1851, 0.0
        %v1862 = vcombine.high %v1858, 0.0
        %v1863 = vcombine.low %v1230, %v1708
        %v1864 = vcombine.high %v1230, %v1708
        %v1866 = vunpack.c.l.s4 1983009808
        %v1867 = vunpack.c.0.s8 %v1866
        %v1868 = vlaneseq
        %v1869 = vshrl.u32 %v1868, 7
        %v1870 = vsub.s32 %v1867, %v1869
        %v1871 = vrot.slane %v1863, %v1870
        %v1873 = vunpack.c.l.s4 1983009808
        %v1874 = vunpack.c.0.s8 %v1873
        %v1875 = vlaneseq
        %v1876 = vshrl.u32 %v1875, 7
        %v1877 = vsub.s32 %v1874, %v1876
        %v1878 = vrot.slane %v1864, %v1877
        %v1879 = vcombine.low %v1696, %v1720
        %v1880 = vcombine.high %v1696, %v1720
        %v1882 = vunpack.c.l.s4 1983009808
        %v1883 = vunpack.c.0.s8 %v1882
        %v1884 = vlaneseq
        %v1885 = vshrl.u32 %v1884, 7
        %v1886 = vsub.s32 %v1883, %v1885
        %v1887 = vrot.slane %v1879, %v1886
        %v1889 = vunpack.c.l.s4 1983009808
        %v1890 = vunpack.c.0.s8 %v1889
        %v1891 = vlaneseq
        %v1892 = vshrl.u32 %v1891, 7
        %v1893 = vsub.s32 %v1890, %v1892
        %v1894 = vrot.slane %v1880, %v1893
        %v1895 = vcombine.low %v1871, %v1887
        %v1896 = vcombine.high %v1871, %v1887
        %v1898 = vunpack.c.l.s4 1934713408
        %v1899 = vunpack.c.0.s8 %v1898
        %v1900 = vlaneseq
        %v1901 = vshrl.u32 %v1900, 7
        %v1902 = vsub.s32 %v1899, %v1901
        %v1903 = vrot.slane %v1895, %v1902
        %v1905 = vunpack.c.l.s4 1934713408
        %v1906 = vunpack.c.0.s8 %v1905
        %v1907 = vlaneseq
        %v1908 = vshrl.u32 %v1907, 7
        %v1909 = vsub.s32 %v1906, %v1908
        %v1910 = vrot.slane %v1896, %v1909
        %v1911 = vcombine.low %v1878, %v1894
        %v1912 = vcombine.high %v1878, %v1894
        %v1914 = vunpack.c.l.s4 1934713408
        %v1915 = vunpack.c.0.s8 %v1914
        %v1916 = vlaneseq
        %v1917 = vshrl.u32 %v1916, 7
        %v1918 = vsub.s32 %v1915, %v1917
        %v1919 = vrot.slane %v1911, %v1918
        %v1921 = vunpack.c.l.s4 1934713408
        %v1922 = vunpack.c.0.s8 %v1921
        %v1923 = vlaneseq
        %v1924 = vshrl.u32 %v1923, 7
        %v1925 = vsub.s32 %v1922, %v1924
        %v1926 = vrot.slane %v1912, %v1925
        %v1927 = vcombine.high %v1903, 0.0
        %v1928 = vcombine.high %v1910, 0.0
        %v1929 = vcombine.high %v1919, 0.0
        %v1930 = vcombine.high %v1926, 0.0
        %v1931 = vcombine.low %v1233, %v1710
        %v1932 = vcombine.high %v1233, %v1710
        %v1934 = vunpack.c.l.s4 1983009808
        %v1935 = vunpack.c.0.s8 %v1934
        %v1936 = vlaneseq
        %v1937 = vshrl.u32 %v1936, 7
        %v1938 = vsub.s32 %v1935, %v1937
        %v1939 = vrot.slane %v1931, %v1938
        %v1941 = vunpack.c.l.s4 1983009808
        %v1942 = vunpack.c.0.s8 %v1941
        %v1943 = vlaneseq
        %v1944 = vshrl.u32 %v1943, 7
        %v1945 = vsub.s32 %v1942, %v1944
        %v1946 = vrot.slane %v1932, %v1945
        %v1947 = vcombine.low %v1698, %v1722
        %v1948 = vcombine.high %v1698, %v1722
        %v1950 = vunpack.c.l.s4 1983009808
        %v1951 = vunpack.c.0.s8 %v1950
        %v1952 = vlaneseq
        %v1953 = vshrl.u32 %v1952, 7
        %v1954 = vsub.s32 %v1951, %v1953
        %v1955 = vrot.slane %v1947, %v1954
        %v1957 = vunpack.c.l.s4 1983009808
        %v1958 = vunpack.c.0.s8 %v1957
        %v1959 = vlaneseq
        %v1960 = vshrl.u32 %v1959, 7
        %v1961 = vsub.s32 %v1958, %v1960
        %v1962 = vrot.slane %v1948, %v1961
        %v1963 = vcombine.low %v1939, %v1955
        %v1964 = vcombine.high %v1939, %v1955
        %v1966 = vunpack.c.l.s4 1934713408
        %v1967 = vunpack.c.0.s8 %v1966
        %v1968 = vlaneseq
        %v1969 = vshrl.u32 %v1968, 7
        %v1970 = vsub.s32 %v1967, %v1969
        %v1971 = vrot.slane %v1963, %v1970
        %v1973 = vunpack.c.l.s4 1934713408
        %v1974 = vunpack.c.0.s8 %v1973
        %v1975 = vlaneseq
        %v1976 = vshrl.u32 %v1975, 7
        %v1977 = vsub.s32 %v1974, %v1976
        %v1978 = vrot.slane %v1964, %v1977
        %v1979 = vcombine.low %v1946, %v1962
        %v1980 = vcombine.high %v1946, %v1962
        %v1982 = vunpack.c.l.s4 1934713408
        %v1983 = vunpack.c.0.s8 %v1982
        %v1984 = vlaneseq
        %v1985 = vshrl.u32 %v1984, 7
        %v1986 = vsub.s32 %v1983, %v1985
        %v1987 = vrot.slane %v1979, %v1986
        %v1988 = vcombine.high %v1971, 0.0
        %v1989 = vcombine.high %v1978, 0.0
        %v1991 = vunpack.c.l.s4 1934713408
        %v1992 = vunpack.c.0.s8 %v1991
        %v1993 = vlaneseq
        %v1994 = vshrl.u32 %v1993, 7
        %v1995 = vsub.s32 %v1992, %v1994
        %v1996 = vrot.slane %v1980, %v1995
        %v1997 = vcombine.low %v1767, %v1774
        %v1999 = vunpack.c.l.s4 1983009808
        %v2000 = vunpack.c.0.s8 %v1999
        %v2001 = vlaneseq
        %v2002 = vshrl.u32 %v2001, 7
        %v2003 = vsub.s32 %v2000, %v2002
        %v2004 = vrot.slane %v1997, %v2003
        %v2005 = vcombine.low %v1791, %v1792
        %v2007 = vunpack.c.l.s4 1983009808
        %v2008 = vunpack.c.0.s8 %v2007
        %v2009 = vlaneseq
        %v2010 = vshrl.u32 %v2009, 7
        %v2011 = vsub.s32 %v2008, %v2010
        %v2012 = vrot.slane %v2005, %v2011
        %v2013 = vcombine.low %v1783, %v1790
        %v2015 = vunpack.c.l.s4 1983009808
        %v2016 = vunpack.c.0.s8 %v2015
        %v2017 = vlaneseq
        %v2018 = vshrl.u32 %v2017, 7
        %v2019 = vsub.s32 %v2016, %v2018
        %v2020 = vrot.slane %v2013, %v2019
        %v2021 = vcombine.low %v1793, %v1794
        %v2023 = vunpack.c.l.s4 1983009808
        %v2024 = vunpack.c.0.s8 %v2023
        %v2025 = vlaneseq
        %v2026 = vshrl.u32 %v2025, 7
        %v2027 = vsub.s32 %v2024, %v2026
        %v2028 = vrot.slane %v2021, %v2027
        %v2029 = vcombine.low %v2004, %v2012
        %v2030 = vcombine.high %v2004, %v2012
        %v2032 = vunpack.c.l.s4 1934713408
        %v2033 = vunpack.c.0.s8 %v2032
        %v2034 = vlaneseq
        %v2035 = vshrl.u32 %v2034, 7
        %v2036 = vsub.s32 %v2033, %v2035
        %v2037 = vrot.slane %v2029, %v2036
        %v2039 = vunpack.c.l.s4 1934713408
        %v2040 = vunpack.c.0.s8 %v2039
        %v2041 = vlaneseq
        %v2042 = vshrl.u32 %v2041, 7
        %v2043 = vsub.s32 %v2040, %v2042
        %v2044 = vrot.slane %v2030, %v2043
        %v2045 = vcombine.low %v2020, %v2028
        %v2046 = vcombine.high %v2020, %v2028
        %v2048 = vunpack.c.l.s4 1934713408
        %v2049 = vunpack.c.0.s8 %v2048
        %v2050 = vlaneseq
        %v2051 = vshrl.u32 %v2050, 7
        %v2052 = vsub.s32 %v2049, %v2051
        %v2053 = vrot.slane %v2045, %v2052
        %v2055 = vunpack.c.l.s4 1934713408
        %v2056 = vunpack.c.0.s8 %v2055
        %v2057 = vlaneseq
        %v2058 = vshrl.u32 %v2057, 7
        %v2059 = vsub.s32 %v2056, %v2058
        %v2060 = vrot.slane %v2046, %v2059
        %v2061 = vcombine.low %v2037, %v2053
        %v2062 = vcombine.high %v2037, %v2053
        %v2063 = vcombine.low %v2044, %v2060
        %v2064 = vcombine.high %v2044, %v2060
        %v2065 = vcombine.low %v1835, %v1842
        %v2067 = vunpack.c.l.s4 1983009808
        %v2068 = vunpack.c.0.s8 %v2067
        %v2069 = vlaneseq
        %v2070 = vshrl.u32 %v2069, 7
        %v2071 = vsub.s32 %v2068, %v2070
        %v2072 = vrot.slane %v2065, %v2071
        %v2073 = vcombine.low %v1859, %v1860
        %v2075 = vunpack.c.l.s4 1983009808
        %v2076 = vunpack.c.0.s8 %v2075
        %v2077 = vlaneseq
        %v2078 = vshrl.u32 %v2077, 7
        %v2079 = vsub.s32 %v2076, %v2078
        %v2080 = vrot.slane %v2073, %v2079
        %v2081 = vcombine.low %v1851, %v1858
        %v2083 = vunpack.c.l.s4 1983009808
        %v2084 = vunpack.c.0.s8 %v2083
        %v2085 = vlaneseq
        %v2086 = vshrl.u32 %v2085, 7
        %v2087 = vsub.s32 %v2084, %v2086
        %v2088 = vrot.slane %v2081, %v2087
        %v2089 = vcombine.low %v1861, %v1862
        %v2091 = vunpack.c.l.s4 1983009808
        %v2092 = vunpack.c.0.s8 %v2091
        %v2093 = vlaneseq
        %v2094 = vshrl.u32 %v2093, 7
        %v2095 = vsub.s32 %v2092, %v2094
        %v2096 = vrot.slane %v2089, %v2095
        %v2097 = vcombine.low %v2072, %v2080
        %v2098 = vcombine.high %v2072, %v2080
        %v2100 = vunpack.c.l.s4 1934713408
        %v2101 = vunpack.c.0.s8 %v2100
        %v2102 = vlaneseq
        %v2103 = vshrl.u32 %v2102, 7
        %v2104 = vsub.s32 %v2101, %v2103
        %v2105 = vrot.slane %v2097, %v2104
        %v2107 = vunpack.c.l.s4 1934713408
        %v2108 = vunpack.c.0.s8 %v2107
        %v2109 = vlaneseq
        %v2110 = vshrl.u32 %v2109, 7
        %v2111 = vsub.s32 %v2108, %v2110
        %v2112 = vrot.slane %v2098, %v2111
        %v2113 = vcombine.low %v2088, %v2096
        %v2114 = vcombine.high %v2088, %v2096
        %v2116 = vunpack.c.l.s4 1934713408
        %v2117 = vunpack.c.0.s8 %v2116
        %v2118 = vlaneseq
        %v2119 = vshrl.u32 %v2118, 7
        %v2120 = vsub.s32 %v2117, %v2119
        %v2121 = vrot.slane %v2113, %v2120
        %v2123 = vunpack.c.l.s4 1934713408
        %v2124 = vunpack.c.0.s8 %v2123
        %v2125 = vlaneseq
        %v2126 = vshrl.u32 %v2125, 7
        %v2127 = vsub.s32 %v2124, %v2126
        %v2128 = vrot.slane %v2114, %v2127
        %v2129 = vcombine.low %v2105, %v2121
        %v2130 = vcombine.high %v2105, %v2121
        %v2131 = vcombine.low %v2112, %v2128
        %v2132 = vcombine.high %v2112, %v2128
        %v2133 = vcombine.low %v1903, %v1910
        %v2135 = vunpack.c.l.s4 1983009808
        %v2136 = vunpack.c.0.s8 %v2135
        %v2137 = vlaneseq
        %v2138 = vshrl.u32 %v2137, 7
        %v2139 = vsub.s32 %v2136, %v2138
        %v2140 = vrot.slane %v2133, %v2139
        %v2141 = vcombine.low %v1927, %v1928
        %v2143 = vunpack.c.l.s4 1983009808
        %v2144 = vunpack.c.0.s8 %v2143
        %v2145 = vlaneseq
        %v2146 = vshrl.u32 %v2145, 7
        %v2147 = vsub.s32 %v2144, %v2146
        %v2148 = vrot.slane %v2141, %v2147
        %v2149 = vcombine.low %v1919, %v1926
        %v2151 = vunpack.c.l.s4 1983009808
        %v2152 = vunpack.c.0.s8 %v2151
        %v2153 = vlaneseq
        %v2154 = vshrl.u32 %v2153, 7
        %v2155 = vsub.s32 %v2152, %v2154
        %v2156 = vrot.slane %v2149, %v2155
        %v2157 = vcombine.low %v1929, %v1930
        %v2159 = vunpack.c.l.s4 1983009808
        %v2160 = vunpack.c.0.s8 %v2159
        %v2161 = vlaneseq
        %v2162 = vshrl.u32 %v2161, 7
        %v2163 = vsub.s32 %v2160, %v2162
        %v2164 = vrot.slane %v2157, %v2163
        %v2165 = vcombine.low %v2140, %v2148
        %v2166 = vcombine.high %v2140, %v2148
        %v2168 = vunpack.c.l.s4 1934713408
        %v2169 = vunpack.c.0.s8 %v2168
        %v2170 = vlaneseq
        %v2171 = vshrl.u32 %v2170, 7
        %v2172 = vsub.s32 %v2169, %v2171
        %v2173 = vrot.slane %v2165, %v2172
        %v2175 = vunpack.c.l.s4 1934713408
        %v2176 = vunpack.c.0.s8 %v2175
        %v2177 = vlaneseq
        %v2178 = vshrl.u32 %v2177, 7
        %v2179 = vsub.s32 %v2176, %v2178
        %v2180 = vrot.slane %v2166, %v2179
        %v2181 = vcombine.low %v2156, %v2164
        %v2182 = vcombine.high %v2156, %v2164
        %v2184 = vunpack.c.l.s4 1934713408
        %v2185 = vunpack.c.0.s8 %v2184
        %v2186 = vlaneseq
        %v2187 = vshrl.u32 %v2186, 7
        %v2188 = vsub.s32 %v2185, %v2187
        %v2189 = vrot.slane %v2181, %v2188
        %v2191 = vunpack.c.l.s4 1934713408
        %v2192 = vunpack.c.0.s8 %v2191
        %v2193 = vlaneseq
        %v2194 = vshrl.u32 %v2193, 7
        %v2195 = vsub.s32 %v2192, %v2194
        %v2196 = vrot.slane %v2182, %v2195
        %v2197 = vcombine.low %v2173, %v2189
        %v2198 = vcombine.high %v2173, %v2189
        %v2199 = vcombine.low %v2180, %v2196
        %v2200 = vcombine.high %v2180, %v2196
        %v2201 = vcombine.low %v1971, %v1978
        %v2203 = vunpack.c.l.s4 1983009808
        %v2204 = vunpack.c.0.s8 %v2203
        %v2205 = vlaneseq
        %v2206 = vshrl.u32 %v2205, 7
        %v2207 = vsub.s32 %v2204, %v2206
        %v2208 = vrot.slane %v2201, %v2207
        %v2209 = vcombine.low %v1988, %v1989
        %v2211 = vunpack.c.l.s4 1983009808
        %v2212 = vunpack.c.0.s8 %v2211
        %v2213 = vlaneseq
        %v2214 = vshrl.u32 %v2213, 7
        %v2215 = vsub.s32 %v2212, %v2214
        %v2216 = vrot.slane %v2209, %v2215
        %v2217 = vcombine.low %v1987, %v1996
        %v2219 = vunpack.c.l.s4 1983009808
        %v2220 = vunpack.c.0.s8 %v2219
        %v2221 = vlaneseq
        %v2222 = vshrl.u32 %v2221, 7
        %v2223 = vsub.s32 %v2220, %v2222
        %v2224 = vrot.slane %v2217, %v2223
        %v2225 = vcombine.high %v1987, 0.0
        %v2227 = vunpack.c.l.s4 1983009808
        %v2228 = vunpack.c.0.s8 %v2227
        %v2229 = vlaneseq
        %v2230 = vshrl.u32 %v2229, 7
        %v2231 = vsub.s32 %v2228, %v2230
        %v2232 = vrot.slane %v2225, %v2231
        %v2233 = vcombine.low %v2208, %v2216
        %v2234 = vcombine.high %v2208, %v2216
        %v2236 = vunpack.c.l.s4 1934713408
        %v2237 = vunpack.c.0.s8 %v2236
        %v2238 = vlaneseq
        %v2239 = vshrl.u32 %v2238, 7
        %v2240 = vsub.s32 %v2237, %v2239
        %v2241 = vrot.slane %v2233, %v2240
        %v2243 = vunpack.c.l.s4 1934713408
        %v2244 = vunpack.c.0.s8 %v2243
        %v2245 = vlaneseq
        %v2246 = vshrl.u32 %v2245, 7
        %v2247 = vsub.s32 %v2244, %v2246
        %v2248 = vrot.slane %v2234, %v2247
        %v2249 = vcombine.low %v2224, %v2232
        %v2250 = vcombine.high %v2224, %v2232
        %v2252 = vunpack.c.l.s4 1934713408
        %v2253 = vunpack.c.0.s8 %v2252
        %v2254 = vlaneseq
        %v2255 = vshrl.u32 %v2254, 7
        %v2256 = vsub.s32 %v2253, %v2255
        %v2257 = vrot.slane %v2249, %v2256
        %v2259 = vunpack.c.l.s4 1934713408
        %v2260 = vunpack.c.0.s8 %v2259
        %v2261 = vlaneseq
        %v2262 = vshrl.u32 %v2261, 7
        %v2263 = vsub.s32 %v2260, %v2262
        %v2264 = vrot.slane %v2250, %v2263
        %v2265 = vcombine.low %v2241, %v2257
        %v2266 = vcombine.high %v2241, %v2257
        %v2267 = vcombine.low %v2248, %v2264
        %v2268 = vcombine.high %v2248, %v2264
        %v2269 = vpack.c.bf16 %v2129, %v2061
        %v2270 = vpack.c.bf16 %v2265, %v2197
        %v2271 = vpack.c.bf16 %v2130, %v2062
        %v2272 = vpack.c.bf16 %v2266, %v2198
        %v2273 = vpack.c.bf16 %v2131, %v2063
        %v2274 = vpack.c.bf16 %v2267, %v2199
        %v2275 = vpack.c.bf16 %v2132, %v2064
        %v2276 = vpack.c.bf16 %v2268, %v2200
        %v2277 = vmul.f32 %v1173, 0.10206208
        %v2278 = vmul.f32 %v1176, 0.10206208
        %v2279 = vmul.f32 %v1181, 0.10206208
        %v2280 = vmul.f32 %v1184, 0.10206208
        %2285 = vrot.lane.b32.xlu0 %v2277, 96
        %v2286 = vpop.permute.xlu0 %2285
        %2287 = vrot.lane.b32.xlu0 %v2278, 96
        %v2288 = vpop.permute.xlu0 %2287
        %2289 = vrot.lane.b32.xlu0 %v2279, 96
        %v2290 = vpop.permute.xlu0 %2289
        %2291 = vrot.lane.b32.xlu0 %v2280, 96
        %v2292 = vpop.permute.xlu0 %2291
        %2297 = vrot.lane.b32.xlu0 %v2277, 64
        %v2298 = vpop.permute.xlu0 %2297
        %2299 = vrot.lane.b32.xlu0 %v2278, 64
        %v2300 = vpop.permute.xlu0 %2299
        %2301 = vrot.lane.b32.xlu0 %v2279, 64
        %v2302 = vpop.permute.xlu0 %2301
        %2303 = vrot.lane.b32.xlu0 %v2280, 64
        %v2304 = vpop.permute.xlu0 %2303
        %2309 = vrot.lane.b32.xlu0 %v2277, 32
        %v2310 = vpop.permute.xlu0 %2309
        %2311 = vrot.lane.b32.xlu0 %v2278, 32
        %v2312 = vpop.permute.xlu0 %2311
        %2313 = vrot.lane.b32.xlu0 %v2279, 32
        %v2314 = vpop.permute.xlu0 %2313
        %2315 = vrot.lane.b32.xlu0 %v2280, 32
        %v2316 = vpop.permute.xlu0 %2315
        %v2321 = vcombine.low %v2277, %v2298
        %v2322 = vcombine.high %v2277, %v2298
        %v2324 = vunpack.c.l.s4 1983009808
        %v2325 = vunpack.c.0.s8 %v2324
        %v2326 = vlaneseq
        %v2327 = vshrl.u32 %v2326, 7
        %v2328 = vsub.s32 %v2325, %v2327
        %v2329 = vrot.slane %v2321, %v2328
        %v2331 = vunpack.c.l.s4 1983009808
        %v2332 = vunpack.c.0.s8 %v2331
        %v2333 = vlaneseq
        %v2334 = vshrl.u32 %v2333, 7
        %v2335 = vsub.s32 %v2332, %v2334
        %v2336 = vrot.slane %v2322, %v2335
        %v2337 = vcombine.low %v2286, %v2310
        %v2338 = vcombine.high %v2286, %v2310
        %v2340 = vunpack.c.l.s4 1983009808
        %v2341 = vunpack.c.0.s8 %v2340
        %v2342 = vlaneseq
        %v2343 = vshrl.u32 %v2342, 7
        %v2344 = vsub.s32 %v2341, %v2343
        %v2345 = vrot.slane %v2337, %v2344
        %v2347 = vunpack.c.l.s4 1983009808
        %v2348 = vunpack.c.0.s8 %v2347
        %v2349 = vlaneseq
        %v2350 = vshrl.u32 %v2349, 7
        %v2351 = vsub.s32 %v2348, %v2350
        %v2352 = vrot.slane %v2338, %v2351
        %v2353 = vcombine.low %v2329, %v2345
        %v2354 = vcombine.high %v2329, %v2345
        %v2356 = vunpack.c.l.s4 1934713408
        %v2357 = vunpack.c.0.s8 %v2356
        %v2358 = vlaneseq
        %v2359 = vshrl.u32 %v2358, 7
        %v2360 = vsub.s32 %v2357, %v2359
        %v2361 = vrot.slane %v2353, %v2360
        %v2363 = vunpack.c.l.s4 1934713408
        %v2364 = vunpack.c.0.s8 %v2363
        %v2365 = vlaneseq
        %v2366 = vshrl.u32 %v2365, 7
        %v2367 = vsub.s32 %v2364, %v2366
        %v2368 = vrot.slane %v2354, %v2367
        %v2369 = vcombine.low %v2336, %v2352
        %v2370 = vcombine.high %v2336, %v2352
        %v2372 = vunpack.c.l.s4 1934713408
        %v2373 = vunpack.c.0.s8 %v2372
        %v2374 = vlaneseq
        %v2375 = vshrl.u32 %v2374, 7
        %v2376 = vsub.s32 %v2373, %v2375
        %v2377 = vrot.slane %v2369, %v2376
        %v2379 = vunpack.c.l.s4 1934713408
        %v2380 = vunpack.c.0.s8 %v2379
        %v2381 = vlaneseq
        %v2382 = vshrl.u32 %v2381, 7
        %v2383 = vsub.s32 %v2380, %v2382
        %v2384 = vrot.slane %v2370, %v2383
        %v2385 = vcombine.high %v2361, 0.0
        %v2386 = vcombine.high %v2368, 0.0
        %v2387 = vcombine.high %v2377, 0.0
        %v2388 = vcombine.high %v2384, 0.0
        %v2389 = vcombine.low %v2278, %v2300
        %v2390 = vcombine.high %v2278, %v2300
        %v2392 = vunpack.c.l.s4 1983009808
        %v2393 = vunpack.c.0.s8 %v2392
        %v2394 = vlaneseq
        %v2395 = vshrl.u32 %v2394, 7
        %v2396 = vsub.s32 %v2393, %v2395
        %v2397 = vrot.slane %v2389, %v2396
        %v2399 = vunpack.c.l.s4 1983009808
        %v2400 = vunpack.c.0.s8 %v2399
        %v2401 = vlaneseq
        %v2402 = vshrl.u32 %v2401, 7
        %v2403 = vsub.s32 %v2400, %v2402
        %v2404 = vrot.slane %v2390, %v2403
        %v2405 = vcombine.low %v2288, %v2312
        %v2406 = vcombine.high %v2288, %v2312
        %v2408 = vunpack.c.l.s4 1983009808
        %v2409 = vunpack.c.0.s8 %v2408
        %v2410 = vlaneseq
        %v2411 = vshrl.u32 %v2410, 7
        %v2412 = vsub.s32 %v2409, %v2411
        %v2413 = vrot.slane %v2405, %v2412
        %v2415 = vunpack.c.l.s4 1983009808
        %v2416 = vunpack.c.0.s8 %v2415
        %v2417 = vlaneseq
        %v2418 = vshrl.u32 %v2417, 7
        %v2419 = vsub.s32 %v2416, %v2418
        %v2420 = vrot.slane %v2406, %v2419
        %v2421 = vcombine.low %v2397, %v2413
        %v2422 = vcombine.high %v2397, %v2413
        %v2424 = vunpack.c.l.s4 1934713408
        %v2425 = vunpack.c.0.s8 %v2424
        %v2426 = vlaneseq
        %v2427 = vshrl.u32 %v2426, 7
        %v2428 = vsub.s32 %v2425, %v2427
        %v2429 = vrot.slane %v2421, %v2428
        %v2431 = vunpack.c.l.s4 1934713408
        %v2432 = vunpack.c.0.s8 %v2431
        %v2433 = vlaneseq
        %v2434 = vshrl.u32 %v2433, 7
        %v2435 = vsub.s32 %v2432, %v2434
        %v2436 = vrot.slane %v2422, %v2435
        %v2437 = vcombine.low %v2404, %v2420
        %v2438 = vcombine.high %v2404, %v2420
        %v2440 = vunpack.c.l.s4 1934713408
        %v2441 = vunpack.c.0.s8 %v2440
        %v2442 = vlaneseq
        %v2443 = vshrl.u32 %v2442, 7
        %v2444 = vsub.s32 %v2441, %v2443
        %v2445 = vrot.slane %v2437, %v2444
        %v2447 = vunpack.c.l.s4 1934713408
        %v2448 = vunpack.c.0.s8 %v2447
        %v2449 = vlaneseq
        %v2450 = vshrl.u32 %v2449, 7
        %v2451 = vsub.s32 %v2448, %v2450
        %v2452 = vrot.slane %v2438, %v2451
        %v2453 = vcombine.high %v2429, 0.0
        %v2454 = vcombine.high %v2436, 0.0
        %v2455 = vcombine.high %v2445, 0.0
        %v2456 = vcombine.high %v2452, 0.0
        %v2457 = vcombine.low %v2279, %v2302
        %v2458 = vcombine.high %v2279, %v2302
        %v2460 = vunpack.c.l.s4 1983009808
        %v2461 = vunpack.c.0.s8 %v2460
        %v2462 = vlaneseq
        %v2463 = vshrl.u32 %v2462, 7
        %v2464 = vsub.s32 %v2461, %v2463
        %v2465 = vrot.slane %v2457, %v2464
        %v2467 = vunpack.c.l.s4 1983009808
        %v2468 = vunpack.c.0.s8 %v2467
        %v2469 = vlaneseq
        %v2470 = vshrl.u32 %v2469, 7
        %v2471 = vsub.s32 %v2468, %v2470
        %v2472 = vrot.slane %v2458, %v2471
        %v2473 = vcombine.low %v2290, %v2314
        %v2474 = vcombine.high %v2290, %v2314
        %v2476 = vunpack.c.l.s4 1983009808
        %v2477 = vunpack.c.0.s8 %v2476
        %v2478 = vlaneseq
        %v2479 = vshrl.u32 %v2478, 7
        %v2480 = vsub.s32 %v2477, %v2479
        %v2481 = vrot.slane %v2473, %v2480
        %v2483 = vunpack.c.l.s4 1983009808
        %v2484 = vunpack.c.0.s8 %v2483
        %v2485 = vlaneseq
        %v2486 = vshrl.u32 %v2485, 7
        %v2487 = vsub.s32 %v2484, %v2486
        %v2488 = vrot.slane %v2474, %v2487
        %v2489 = vcombine.low %v2465, %v2481
        %v2490 = vcombine.high %v2465, %v2481
        %v2492 = vunpack.c.l.s4 1934713408
        %v2493 = vunpack.c.0.s8 %v2492
        %v2494 = vlaneseq
        %v2495 = vshrl.u32 %v2494, 7
        %v2496 = vsub.s32 %v2493, %v2495
        %v2497 = vrot.slane %v2489, %v2496
        %v2499 = vunpack.c.l.s4 1934713408
        %v2500 = vunpack.c.0.s8 %v2499
        %v2501 = vlaneseq
        %v2502 = vshrl.u32 %v2501, 7
        %v2503 = vsub.s32 %v2500, %v2502
        %v2504 = vrot.slane %v2490, %v2503
        %v2505 = vcombine.low %v2472, %v2488
        %v2506 = vcombine.high %v2472, %v2488
        %v2508 = vunpack.c.l.s4 1934713408
        %v2509 = vunpack.c.0.s8 %v2508
        %v2510 = vlaneseq
        %v2511 = vshrl.u32 %v2510, 7
        %v2512 = vsub.s32 %v2509, %v2511
        %v2513 = vrot.slane %v2505, %v2512
        %v2515 = vunpack.c.l.s4 1934713408
        %v2516 = vunpack.c.0.s8 %v2515
        %v2517 = vlaneseq
        %v2518 = vshrl.u32 %v2517, 7
        %v2519 = vsub.s32 %v2516, %v2518
        %v2520 = vrot.slane %v2506, %v2519
        %v2521 = vcombine.high %v2497, 0.0
        %v2522 = vcombine.high %v2504, 0.0
        %v2523 = vcombine.high %v2513, 0.0
        %v2524 = vcombine.high %v2520, 0.0
        %v2525 = vcombine.low %v2280, %v2304
        %v2526 = vcombine.high %v2280, %v2304
        %v2528 = vunpack.c.l.s4 1983009808
        %v2529 = vunpack.c.0.s8 %v2528
        %v2530 = vlaneseq
        %v2531 = vshrl.u32 %v2530, 7
        %v2532 = vsub.s32 %v2529, %v2531
        %v2533 = vrot.slane %v2525, %v2532
        %v2535 = vunpack.c.l.s4 1983009808
        %v2536 = vunpack.c.0.s8 %v2535
        %v2537 = vlaneseq
        %v2538 = vshrl.u32 %v2537, 7
        %v2539 = vsub.s32 %v2536, %v2538
        %v2540 = vrot.slane %v2526, %v2539
        %v2541 = vcombine.low %v2292, %v2316
        %v2542 = vcombine.high %v2292, %v2316
        %v2544 = vunpack.c.l.s4 1983009808
        %v2545 = vunpack.c.0.s8 %v2544
        %v2546 = vlaneseq
        %v2547 = vshrl.u32 %v2546, 7
        %v2548 = vsub.s32 %v2545, %v2547
        %v2549 = vrot.slane %v2541, %v2548
        %v2551 = vunpack.c.l.s4 1983009808
        %v2552 = vunpack.c.0.s8 %v2551
        %v2553 = vlaneseq
        %v2554 = vshrl.u32 %v2553, 7
        %v2555 = vsub.s32 %v2552, %v2554
        %v2556 = vrot.slane %v2542, %v2555
        %v2557 = vcombine.low %v2533, %v2549
        %v2558 = vcombine.high %v2533, %v2549
        %v2560 = vunpack.c.l.s4 1934713408
        %v2561 = vunpack.c.0.s8 %v2560
        %v2562 = vlaneseq
        %v2563 = vshrl.u32 %v2562, 7
        %v2564 = vsub.s32 %v2561, %v2563
        %v2565 = vrot.slane %v2557, %v2564
        %v2567 = vunpack.c.l.s4 1934713408
        %v2568 = vunpack.c.0.s8 %v2567
        %v2569 = vlaneseq
        %v2570 = vshrl.u32 %v2569, 7
        %v2571 = vsub.s32 %v2568, %v2570
        %v2572 = vrot.slane %v2558, %v2571
        %v2573 = vcombine.low %v2540, %v2556
        %v2574 = vcombine.high %v2540, %v2556
        %v2576 = vunpack.c.l.s4 1934713408
        %v2577 = vunpack.c.0.s8 %v2576
        %v2578 = vlaneseq
        %v2579 = vshrl.u32 %v2578, 7
        %v2580 = vsub.s32 %v2577, %v2579
        %v2581 = vrot.slane %v2573, %v2580
        %v2582 = vcombine.high %v2565, 0.0
        %v2583 = vcombine.high %v2572, 0.0
        %v2585 = vunpack.c.l.s4 1934713408
        %v2586 = vunpack.c.0.s8 %v2585
        %v2587 = vlaneseq
        %v2588 = vshrl.u32 %v2587, 7
        %v2589 = vsub.s32 %v2586, %v2588
        %v2590 = vrot.slane %v2574, %v2589
        %v2591 = vcombine.low %v2361, %v2368
        %v2593 = vunpack.c.l.s4 1983009808
        %v2594 = vunpack.c.0.s8 %v2593
        %v2595 = vlaneseq
        %v2596 = vshrl.u32 %v2595, 7
        %v2597 = vsub.s32 %v2594, %v2596
        %v2598 = vrot.slane %v2591, %v2597
        %v2599 = vcombine.low %v2385, %v2386
        %v2601 = vunpack.c.l.s4 1983009808
        %v2602 = vunpack.c.0.s8 %v2601
        %v2603 = vlaneseq
        %v2604 = vshrl.u32 %v2603, 7
        %v2605 = vsub.s32 %v2602, %v2604
        %v2606 = vrot.slane %v2599, %v2605
        %v2607 = vcombine.low %v2377, %v2384
        %v2609 = vunpack.c.l.s4 1983009808
        %v2610 = vunpack.c.0.s8 %v2609
        %v2611 = vlaneseq
        %v2612 = vshrl.u32 %v2611, 7
        %v2613 = vsub.s32 %v2610, %v2612
        %v2614 = vrot.slane %v2607, %v2613
        %v2615 = vcombine.low %v2387, %v2388
        %v2617 = vunpack.c.l.s4 1983009808
        %v2618 = vunpack.c.0.s8 %v2617
        %v2619 = vlaneseq
        %v2620 = vshrl.u32 %v2619, 7
        %v2621 = vsub.s32 %v2618, %v2620
        %v2622 = vrot.slane %v2615, %v2621
        %v2623 = vcombine.low %v2598, %v2606
        %v2624 = vcombine.high %v2598, %v2606
        %v2626 = vunpack.c.l.s4 1934713408
        %v2627 = vunpack.c.0.s8 %v2626
        %v2628 = vlaneseq
        %v2629 = vshrl.u32 %v2628, 7
        %v2630 = vsub.s32 %v2627, %v2629
        %v2631 = vrot.slane %v2623, %v2630
        %v2633 = vunpack.c.l.s4 1934713408
        %v2634 = vunpack.c.0.s8 %v2633
        %v2635 = vlaneseq
        %v2636 = vshrl.u32 %v2635, 7
        %v2637 = vsub.s32 %v2634, %v2636
        %v2638 = vrot.slane %v2624, %v2637
        %v2639 = vcombine.low %v2614, %v2622
        %v2640 = vcombine.high %v2614, %v2622
        %v2642 = vunpack.c.l.s4 1934713408
        %v2643 = vunpack.c.0.s8 %v2642
        %v2644 = vlaneseq
        %v2645 = vshrl.u32 %v2644, 7
        %v2646 = vsub.s32 %v2643, %v2645
        %v2647 = vrot.slane %v2639, %v2646
        %v2649 = vunpack.c.l.s4 1934713408
        %v2650 = vunpack.c.0.s8 %v2649
        %v2651 = vlaneseq
        %v2652 = vshrl.u32 %v2651, 7
        %v2653 = vsub.s32 %v2650, %v2652
        %v2654 = vrot.slane %v2640, %v2653
        %v2655 = vcombine.low %v2631, %v2647
        %v2656 = vcombine.high %v2631, %v2647
        %v2657 = vcombine.low %v2638, %v2654
        %v2658 = vcombine.high %v2638, %v2654
        %v2659 = vcombine.low %v2429, %v2436
        %v2661 = vunpack.c.l.s4 1983009808
        %v2662 = vunpack.c.0.s8 %v2661
        %v2663 = vlaneseq
        %v2664 = vshrl.u32 %v2663, 7
        %v2665 = vsub.s32 %v2662, %v2664
        %v2666 = vrot.slane %v2659, %v2665
        %v2667 = vcombine.low %v2453, %v2454
        %v2669 = vunpack.c.l.s4 1983009808
        %v2670 = vunpack.c.0.s8 %v2669
        %v2671 = vlaneseq
        %v2672 = vshrl.u32 %v2671, 7
        %v2673 = vsub.s32 %v2670, %v2672
        %v2674 = vrot.slane %v2667, %v2673
        %v2675 = vcombine.low %v2445, %v2452
        %v2677 = vunpack.c.l.s4 1983009808
        %v2678 = vunpack.c.0.s8 %v2677
        %v2679 = vlaneseq
        %v2680 = vshrl.u32 %v2679, 7
        %v2681 = vsub.s32 %v2678, %v2680
        %v2682 = vrot.slane %v2675, %v2681
        %v2683 = vcombine.low %v2455, %v2456
        %v2685 = vunpack.c.l.s4 1983009808
        %v2686 = vunpack.c.0.s8 %v2685
        %v2687 = vlaneseq
        %v2688 = vshrl.u32 %v2687, 7
        %v2689 = vsub.s32 %v2686, %v2688
        %v2690 = vrot.slane %v2683, %v2689
        %v2691 = vcombine.low %v2666, %v2674
        %v2692 = vcombine.high %v2666, %v2674
        %v2694 = vunpack.c.l.s4 1934713408
        %v2695 = vunpack.c.0.s8 %v2694
        %v2696 = vlaneseq
        %v2697 = vshrl.u32 %v2696, 7
        %v2698 = vsub.s32 %v2695, %v2697
        %v2699 = vrot.slane %v2691, %v2698
        %v2701 = vunpack.c.l.s4 1934713408
        %v2702 = vunpack.c.0.s8 %v2701
        %v2703 = vlaneseq
        %v2704 = vshrl.u32 %v2703, 7
        %v2705 = vsub.s32 %v2702, %v2704
        %v2706 = vrot.slane %v2692, %v2705
        %v2707 = vcombine.low %v2682, %v2690
        %v2708 = vcombine.high %v2682, %v2690
        %v2710 = vunpack.c.l.s4 1934713408
        %v2711 = vunpack.c.0.s8 %v2710
        %v2712 = vlaneseq
        %v2713 = vshrl.u32 %v2712, 7
        %v2714 = vsub.s32 %v2711, %v2713
        %v2715 = vrot.slane %v2707, %v2714
        %v2717 = vunpack.c.l.s4 1934713408
        %v2718 = vunpack.c.0.s8 %v2717
        %v2719 = vlaneseq
        %v2720 = vshrl.u32 %v2719, 7
        %v2721 = vsub.s32 %v2718, %v2720
        %v2722 = vrot.slane %v2708, %v2721
        %v2723 = vcombine.low %v2699, %v2715
        %v2724 = vcombine.high %v2699, %v2715
        %v2725 = vcombine.low %v2706, %v2722
        %v2726 = vcombine.high %v2706, %v2722
        %v2727 = vcombine.low %v2497, %v2504
        %v2729 = vunpack.c.l.s4 1983009808
        %v2730 = vunpack.c.0.s8 %v2729
        %v2731 = vlaneseq
        %v2732 = vshrl.u32 %v2731, 7
        %v2733 = vsub.s32 %v2730, %v2732
        %v2734 = vrot.slane %v2727, %v2733
        %v2735 = vcombine.low %v2521, %v2522
        %v2737 = vunpack.c.l.s4 1983009808
        %v2738 = vunpack.c.0.s8 %v2737
        %v2739 = vlaneseq
        %v2740 = vshrl.u32 %v2739, 7
        %v2741 = vsub.s32 %v2738, %v2740
        %v2742 = vrot.slane %v2735, %v2741
        %v2743 = vcombine.low %v2513, %v2520
        %v2745 = vunpack.c.l.s4 1983009808
        %v2746 = vunpack.c.0.s8 %v2745
        %v2747 = vlaneseq
        %v2748 = vshrl.u32 %v2747, 7
        %v2749 = vsub.s32 %v2746, %v2748
        %v2750 = vrot.slane %v2743, %v2749
        %v2751 = vcombine.low %v2523, %v2524
        %v2753 = vunpack.c.l.s4 1983009808
        %v2754 = vunpack.c.0.s8 %v2753
        %v2755 = vlaneseq
        %v2756 = vshrl.u32 %v2755, 7
        %v2757 = vsub.s32 %v2754, %v2756
        %v2758 = vrot.slane %v2751, %v2757
        %v2759 = vcombine.low %v2734, %v2742
        %v2760 = vcombine.high %v2734, %v2742
        %v2762 = vunpack.c.l.s4 1934713408
        %v2763 = vunpack.c.0.s8 %v2762
        %v2764 = vlaneseq
        %v2765 = vshrl.u32 %v2764, 7
        %v2766 = vsub.s32 %v2763, %v2765
        %v2767 = vrot.slane %v2759, %v2766
        %v2769 = vunpack.c.l.s4 1934713408
        %v2770 = vunpack.c.0.s8 %v2769
        %v2771 = vlaneseq
        %v2772 = vshrl.u32 %v2771, 7
        %v2773 = vsub.s32 %v2770, %v2772
        %v2774 = vrot.slane %v2760, %v2773
        %v2775 = vcombine.low %v2750, %v2758
        %v2776 = vcombine.high %v2750, %v2758
        %v2778 = vunpack.c.l.s4 1934713408
        %v2779 = vunpack.c.0.s8 %v2778
        %v2780 = vlaneseq
        %v2781 = vshrl.u32 %v2780, 7
        %v2782 = vsub.s32 %v2779, %v2781
        %v2783 = vrot.slane %v2775, %v2782
        %v2785 = vunpack.c.l.s4 1934713408
        %v2786 = vunpack.c.0.s8 %v2785
        %v2787 = vlaneseq
        %v2788 = vshrl.u32 %v2787, 7
        %v2789 = vsub.s32 %v2786, %v2788
        %v2790 = vrot.slane %v2776, %v2789
        %v2791 = vcombine.low %v2767, %v2783
        %v2792 = vcombine.high %v2767, %v2783
        %v2793 = vcombine.low %v2774, %v2790
        %v2794 = vcombine.high %v2774, %v2790
        %v2795 = vcombine.low %v2565, %v2572
        %v2797 = vunpack.c.l.s4 1983009808
        %v2798 = vunpack.c.0.s8 %v2797
        %v2799 = vlaneseq
        %v2800 = vshrl.u32 %v2799, 7
        %v2801 = vsub.s32 %v2798, %v2800
        %v2802 = vrot.slane %v2795, %v2801
        %v2803 = vcombine.low %v2582, %v2583
        %v2805 = vunpack.c.l.s4 1983009808
        %v2806 = vunpack.c.0.s8 %v2805
        %v2807 = vlaneseq
        %v2808 = vshrl.u32 %v2807, 7
        %v2809 = vsub.s32 %v2806, %v2808
        %v2810 = vrot.slane %v2803, %v2809
        %v2811 = vcombine.low %v2581, %v2590
        %v2813 = vunpack.c.l.s4 1983009808
        %v2814 = vunpack.c.0.s8 %v2813
        %v2815 = vlaneseq
        %v2816 = vshrl.u32 %v2815, 7
        %v2817 = vsub.s32 %v2814, %v2816
        %v2818 = vrot.slane %v2811, %v2817
        %v2819 = vcombine.high %v2581, 0.0
        %v2821 = vunpack.c.l.s4 1983009808
        %v2822 = vunpack.c.0.s8 %v2821
        %v2823 = vlaneseq
        %v2824 = vshrl.u32 %v2823, 7
        %v2825 = vsub.s32 %v2822, %v2824
        %v2826 = vrot.slane %v2819, %v2825
        %v2827 = vcombine.low %v2802, %v2810
        %v2828 = vcombine.high %v2802, %v2810
        %v2830 = vunpack.c.l.s4 1934713408
        %v2831 = vunpack.c.0.s8 %v2830
        %v2832 = vlaneseq
        %v2833 = vshrl.u32 %v2832, 7
        %v2834 = vsub.s32 %v2831, %v2833
        %v2835 = vrot.slane %v2827, %v2834
        %v2837 = vunpack.c.l.s4 1934713408
        %v2838 = vunpack.c.0.s8 %v2837
        %v2839 = vlaneseq
        %v2840 = vshrl.u32 %v2839, 7
        %v2841 = vsub.s32 %v2838, %v2840
        %v2842 = vrot.slane %v2828, %v2841
        %v2843 = vcombine.low %v2818, %v2826
        %v2844 = vcombine.high %v2818, %v2826
        %v2846 = vunpack.c.l.s4 1934713408
        %v2847 = vunpack.c.0.s8 %v2846
        %v2848 = vlaneseq
        %v2849 = vshrl.u32 %v2848, 7
        %v2850 = vsub.s32 %v2847, %v2849
        %v2851 = vrot.slane %v2843, %v2850
        %v2853 = vunpack.c.l.s4 1934713408
        %v2854 = vunpack.c.0.s8 %v2853
        %v2855 = vlaneseq
        %v2856 = vshrl.u32 %v2855, 7
        %v2857 = vsub.s32 %v2854, %v2856
        %v2858 = vrot.slane %v2844, %v2857
        %v2859 = vcombine.low %v2835, %v2851
        %v2860 = vcombine.high %v2835, %v2851
        %v2861 = vcombine.low %v2842, %v2858
        %v2862 = vcombine.high %v2842, %v2858
        %v2863 = vpack.c.bf16 %v2723, %v2655
        %v2864 = vpack.c.bf16 %v2859, %v2791
        %v2865 = vpack.c.bf16 %v2724, %v2656
        %v2866 = vpack.c.bf16 %v2860, %v2792
        %v2867 = vpack.c.bf16 %v2725, %v2657
        %v2868 = vpack.c.bf16 %v2861, %v2793
        %v2869 = vpack.c.bf16 %v2726, %v2658
        %v2870 = vpack.c.bf16 %v2862, %v2794
        %vm2871 = vcmask 261120
        %v2873 = vsel %vm2871, %v1383, 0
        %v2876 = vsel %vm2871, %v2269, 0
        %v2879 = vsel %vm2871, %v2270, 0
        %2881 = vmatprep.subr.bf16.mxu0 0
        %2882 = vmatpush1.bf16.xpose.msra.mxu0 %v2876
        %2883 = vmatprep.subr.bf16.mxu0 0
        %2884 = vmatpush1.bf16.xpose.msra.mxu0 %v2879
        %2885 = vmatprep.subr.bf16.mxu0 0
        %2886 = vmatpush1.bf16.xpose.msra.mxu0 0
        %2887 = vmatprep.subr.bf16.mxu0 0
        %2888 = vmatpush1.bf16.xpose.msra.mxu0 0
        %2889 = vmatprep.subr.bf16.mxu0 0
        %2890 = vmatpush1.bf16.xpose.msra.mxu0 0
        %2891 = vmatprep.subr.bf16.mxu0 0
        %2892 = vmatpush1.bf16.xpose.msra.mxu0 0
        %2893 = vmatprep.subr.bf16.mxu0 0
        %2894 = vmatpush1.bf16.xpose.msra.mxu0 0
        %2895 = vmatprep.subr.bf16.mxu0 0
        %2896 = vmatpush1.bf16.xpose.msra.mxu0 0
        %2897 = vmatprep.subr.bf16.mxu0 0
        %2898 = vmatpush1.bf16.xpose.msra.mxu0 0
        %2899 = vmatprep.subr.bf16.mxu0 0
        %2900 = vmatpush1.bf16.xpose.msra.mxu0 0
        %2901 = vmatprep.subr.bf16.mxu0 0
        %2902 = vmatpush1.bf16.xpose.msra.mxu0 0
        %2903 = vmatprep.subr.bf16.mxu0 0
        %2904 = vmatpush1.bf16.xpose.msra.mxu0 0
        %2905 = vmatprep.subr.bf16.mxu0 0
        %2906 = vmatpush1.bf16.xpose.msra.mxu0 0
        %2907 = vmatprep.subr.bf16.mxu0 0
        %2908 = vmatpush1.bf16.xpose.msra.mxu0 0
        %2909 = vmatprep.subr.bf16.mxu0 0
        %2910 = vmatpush1.bf16.xpose.msra.mxu0 0
        %2911 = vmatprep.subr.bf16.mxu0 0
        %2912 = vmatpush1.bf16.xpose.msra.mxu0 0
        %2913 = vmatprep.mubr.bf16.mxu0 0
        %2914 = vmatmul.mubr.bf16.gmra.mrb[0].mxu0 %v2873
        %v2915 = vpop.f32.mrb[0].mxu0
        %v2916 = vadd.f32 0.0, %v2915
        %v2917 = vpop.f32.mrb[0].mxu0
        %v2918 = vpop.f32.mrb[0].mxu0
        %v2919 = vpop.f32.mrb[0].mxu0
        %2920 = vdwg.mxu0
        %v2922 = vsel %vm2871, %v1384, 0
        %v2925 = vsel %vm2871, %v2271, 0
        %v2928 = vsel %vm2871, %v2272, 0
        %2930 = vmatprep.subr.bf16.mxu0 0
        %2931 = vmatpush1.bf16.xpose.msra.mxu0 %v2925
        %2932 = vmatprep.subr.bf16.mxu0 0
        %2933 = vmatpush1.bf16.xpose.msra.mxu0 %v2928
        %2934 = vmatprep.subr.bf16.mxu0 0
        %2935 = vmatpush1.bf16.xpose.msra.mxu0 0
        %2936 = vmatprep.subr.bf16.mxu0 0
        %2937 = vmatpush1.bf16.xpose.msra.mxu0 0
        %2938 = vmatprep.subr.bf16.mxu0 0
        %2939 = vmatpush1.bf16.xpose.msra.mxu0 0
        %2940 = vmatprep.subr.bf16.mxu0 0
        %2941 = vmatpush1.bf16.xpose.msra.mxu0 0
        %2942 = vmatprep.subr.bf16.mxu0 0
        %2943 = vmatpush1.bf16.xpose.msra.mxu0 0
        %2944 = vmatprep.subr.bf16.mxu0 0
        %2945 = vmatpush1.bf16.xpose.msra.mxu0 0
        %2946 = vmatprep.subr.bf16.mxu0 0
        %2947 = vmatpush1.bf16.xpose.msra.mxu0 0
        %2948 = vmatprep.subr.bf16.mxu0 0
        %2949 = vmatpush1.bf16.xpose.msra.mxu0 0
        %2950 = vmatprep.subr.bf16.mxu0 0
        %2951 = vmatpush1.bf16.xpose.msra.mxu0 0
        %2952 = vmatprep.subr.bf16.mxu0 0
        %2953 = vmatpush1.bf16.xpose.msra.mxu0 0
        %2954 = vmatprep.subr.bf16.mxu0 0
        %2955 = vmatpush1.bf16.xpose.msra.mxu0 0
        %2956 = vmatprep.subr.bf16.mxu0 0
        %2957 = vmatpush1.bf16.xpose.msra.mxu0 0
        %2958 = vmatprep.subr.bf16.mxu0 0
        %2959 = vmatpush1.bf16.xpose.msra.mxu0 0
        %2960 = vmatprep.subr.bf16.mxu0 0
        %2961 = vmatpush1.bf16.xpose.msra.mxu0 0
        %2962 = vmatprep.mubr.bf16.mxu0 0
        %2963 = vmatmul.mubr.bf16.gmra.mrb[0].mxu0 %v2922
        %v2964 = vpop.f32.mrb[0].mxu0
        %v2965 = vadd.f32 0.0, %v2964
        %v2966 = vpop.f32.mrb[0].mxu0
        %v2967 = vpop.f32.mrb[0].mxu0
        %v2968 = vpop.f32.mrb[0].mxu0
        %2969 = vdwg.mxu0
        %v2971 = vsel %vm2871, %v1385, 0
        %v2974 = vsel %vm2871, %v2273, 0
        %v2977 = vsel %vm2871, %v2274, 0
        %2979 = vmatprep.subr.bf16.mxu0 0
        %2980 = vmatpush1.bf16.xpose.msra.mxu0 %v2974
        %2981 = vmatprep.subr.bf16.mxu0 0
        %2982 = vmatpush1.bf16.xpose.msra.mxu0 %v2977
        %2983 = vmatprep.subr.bf16.mxu0 0
        %2984 = vmatpush1.bf16.xpose.msra.mxu0 0
        %2985 = vmatprep.subr.bf16.mxu0 0
        %2986 = vmatpush1.bf16.xpose.msra.mxu0 0
        %2987 = vmatprep.subr.bf16.mxu0 0
        %2988 = vmatpush1.bf16.xpose.msra.mxu0 0
        %2989 = vmatprep.subr.bf16.mxu0 0
        %2990 = vmatpush1.bf16.xpose.msra.mxu0 0
        %2991 = vmatprep.subr.bf16.mxu0 0
        %2992 = vmatpush1.bf16.xpose.msra.mxu0 0
        %2993 = vmatprep.subr.bf16.mxu0 0
        %2994 = vmatpush1.bf16.xpose.msra.mxu0 0
        %2995 = vmatprep.subr.bf16.mxu0 0
        %2996 = vmatpush1.bf16.xpose.msra.mxu0 0
        %2997 = vmatprep.subr.bf16.mxu0 0
        %2998 = vmatpush1.bf16.xpose.msra.mxu0 0
        %2999 = vmatprep.subr.bf16.mxu0 0
        %3000 = vmatpush1.bf16.xpose.msra.mxu0 0
        %3001 = vmatprep.subr.bf16.mxu0 0
        %3002 = vmatpush1.bf16.xpose.msra.mxu0 0
        %3003 = vmatprep.subr.bf16.mxu0 0
        %3004 = vmatpush1.bf16.xpose.msra.mxu0 0
        %3005 = vmatprep.subr.bf16.mxu0 0
        %3006 = vmatpush1.bf16.xpose.msra.mxu0 0
        %3007 = vmatprep.subr.bf16.mxu0 0
        %3008 = vmatpush1.bf16.xpose.msra.mxu0 0
        %3009 = vmatprep.subr.bf16.mxu0 0
        %3010 = vmatpush1.bf16.xpose.msra.mxu0 0
        %3011 = vmatprep.mubr.bf16.mxu0 0
        %3012 = vmatmul.mubr.bf16.gmra.mrb[0].mxu0 %v2971
        %v3013 = vpop.f32.mrb[0].mxu0
        %v3014 = vadd.f32 0.0, %v3013
        %v3015 = vpop.f32.mrb[0].mxu0
        %v3016 = vpop.f32.mrb[0].mxu0
        %v3017 = vpop.f32.mrb[0].mxu0
        %3018 = vdwg.mxu0
        %v3020 = vsel %vm2871, %v1386, 0
        %v3023 = vsel %vm2871, %v2275, 0
        %v3026 = vsel %vm2871, %v2276, 0
        %3028 = vmatprep.subr.bf16.mxu0 0
        %3029 = vmatpush1.bf16.xpose.msra.mxu0 %v3023
        %3030 = vmatprep.subr.bf16.mxu0 0
        %3031 = vmatpush1.bf16.xpose.msra.mxu0 %v3026
        %3032 = vmatprep.subr.bf16.mxu0 0
        %3033 = vmatpush1.bf16.xpose.msra.mxu0 0
        %3034 = vmatprep.subr.bf16.mxu0 0
        %3035 = vmatpush1.bf16.xpose.msra.mxu0 0
        %3036 = vmatprep.subr.bf16.mxu0 0
        %3037 = vmatpush1.bf16.xpose.msra.mxu0 0
        %3038 = vmatprep.subr.bf16.mxu0 0
        %3039 = vmatpush1.bf16.xpose.msra.mxu0 0
        %3040 = vmatprep.subr.bf16.mxu0 0
        %3041 = vmatpush1.bf16.xpose.msra.mxu0 0
        %3042 = vmatprep.subr.bf16.mxu0 0
        %3043 = vmatpush1.bf16.xpose.msra.mxu0 0
        %3044 = vmatprep.subr.bf16.mxu0 0
        %3045 = vmatpush1.bf16.xpose.msra.mxu0 0
        %3046 = vmatprep.subr.bf16.mxu0 0
        %3047 = vmatpush1.bf16.xpose.msra.mxu0 0
        %3048 = vmatprep.subr.bf16.mxu0 0
        %3049 = vmatpush1.bf16.xpose.msra.mxu0 0
        %3050 = vmatprep.subr.bf16.mxu0 0
        %3051 = vmatpush1.bf16.xpose.msra.mxu0 0
        %3052 = vmatprep.subr.bf16.mxu0 0
        %3053 = vmatpush1.bf16.xpose.msra.mxu0 0
        %3054 = vmatprep.subr.bf16.mxu0 0
        %3055 = vmatpush1.bf16.xpose.msra.mxu0 0
        %3056 = vmatprep.subr.bf16.mxu0 0
        %3057 = vmatpush1.bf16.xpose.msra.mxu0 0
        %3058 = vmatprep.subr.bf16.mxu0 0
        %3059 = vmatpush1.bf16.xpose.msra.mxu0 0
        %3060 = vmatprep.mubr.bf16.mxu0 0
        %3061 = vmatmul.mubr.bf16.gmra.mrb[0].mxu0 %v3020
        %v3062 = vpop.f32.mrb[0].mxu0
        %v3063 = vadd.f32 0.0, %v3062
        %v3064 = vpop.f32.mrb[0].mxu0
        %v3065 = vpop.f32.mrb[0].mxu0
        %v3066 = vpop.f32.mrb[0].mxu0
        %3067 = vdwg.mxu0
        %v3069 = vsel %vm2871, %v1533, 0
        %v3072 = vsel %vm2871, %v2863, 0
        %v3075 = vsel %vm2871, %v2864, 0
        %3077 = vmatprep.subr.bf16.mxu0 0
        %3078 = vmatpush1.bf16.xpose.msra.mxu0 %v3072
        %3079 = vmatprep.subr.bf16.mxu0 0
        %3080 = vmatpush1.bf16.xpose.msra.mxu0 %v3075
        %3081 = vmatprep.subr.bf16.mxu0 0
        %3082 = vmatpush1.bf16.xpose.msra.mxu0 0
        %3083 = vmatprep.subr.bf16.mxu0 0
        %3084 = vmatpush1.bf16.xpose.msra.mxu0 0
        %3085 = vmatprep.subr.bf16.mxu0 0
        %3086 = vmatpush1.bf16.xpose.msra.mxu0 0
        %3087 = vmatprep.subr.bf16.mxu0 0
        %3088 = vmatpush1.bf16.xpose.msra.mxu0 0
        %3089 = vmatprep.subr.bf16.mxu0 0
        %3090 = vmatpush1.bf16.xpose.msra.mxu0 0
        %3091 = vmatprep.subr.bf16.mxu0 0
        %3092 = vmatpush1.bf16.xpose.msra.mxu0 0
        %3093 = vmatprep.subr.bf16.mxu0 0
        %3094 = vmatpush1.bf16.xpose.msra.mxu0 0
        %3095 = vmatprep.subr.bf16.mxu0 0
        %3096 = vmatpush1.bf16.xpose.msra.mxu0 0
        %3097 = vmatprep.subr.bf16.mxu0 0
        %3098 = vmatpush1.bf16.xpose.msra.mxu0 0
        %3099 = vmatprep.subr.bf16.mxu0 0
        %3100 = vmatpush1.bf16.xpose.msra.mxu0 0
        %3101 = vmatprep.subr.bf16.mxu0 0
        %3102 = vmatpush1.bf16.xpose.msra.mxu0 0
        %3103 = vmatprep.subr.bf16.mxu0 0
        %3104 = vmatpush1.bf16.xpose.msra.mxu0 0
        %3105 = vmatprep.subr.bf16.mxu0 0
        %3106 = vmatpush1.bf16.xpose.msra.mxu0 0
        %3107 = vmatprep.subr.bf16.mxu0 0
        %3108 = vmatpush1.bf16.xpose.msra.mxu0 0
        %3109 = vmatprep.mubr.bf16.mxu0 0
        %3110 = vmatmul.mubr.bf16.gmra.mrb[0].mxu0 %v3069
        %v3111 = vpop.f32.mrb[0].mxu0
        %v3112 = vadd.f32 0.0, %v3111
        %v3113 = vpop.f32.mrb[0].mxu0
        %v3114 = vpop.f32.mrb[0].mxu0
        %v3115 = vpop.f32.mrb[0].mxu0
        %3116 = vdwg.mxu0
        %v3118 = vsel %vm2871, %v1534, 0
        %v3121 = vsel %vm2871, %v2865, 0
        %v3124 = vsel %vm2871, %v2866, 0
        %3126 = vmatprep.subr.bf16.mxu0 0
        %3127 = vmatpush1.bf16.xpose.msra.mxu0 %v3121
        %3128 = vmatprep.subr.bf16.mxu0 0
        %3129 = vmatpush1.bf16.xpose.msra.mxu0 %v3124
        %3130 = vmatprep.subr.bf16.mxu0 0
        %3131 = vmatpush1.bf16.xpose.msra.mxu0 0
        %3132 = vmatprep.subr.bf16.mxu0 0
        %3133 = vmatpush1.bf16.xpose.msra.mxu0 0
        %3134 = vmatprep.subr.bf16.mxu0 0
        %3135 = vmatpush1.bf16.xpose.msra.mxu0 0
        %3136 = vmatprep.subr.bf16.mxu0 0
        %3137 = vmatpush1.bf16.xpose.msra.mxu0 0
        %3138 = vmatprep.subr.bf16.mxu0 0
        %3139 = vmatpush1.bf16.xpose.msra.mxu0 0
        %3140 = vmatprep.subr.bf16.mxu0 0
        %3141 = vmatpush1.bf16.xpose.msra.mxu0 0
        %3142 = vmatprep.subr.bf16.mxu0 0
        %3143 = vmatpush1.bf16.xpose.msra.mxu0 0
        %3144 = vmatprep.subr.bf16.mxu0 0
        %3145 = vmatpush1.bf16.xpose.msra.mxu0 0
        %3146 = vmatprep.subr.bf16.mxu0 0
        %3147 = vmatpush1.bf16.xpose.msra.mxu0 0
        %3148 = vmatprep.subr.bf16.mxu0 0
        %3149 = vmatpush1.bf16.xpose.msra.mxu0 0
        %3150 = vmatprep.subr.bf16.mxu0 0
        %3151 = vmatpush1.bf16.xpose.msra.mxu0 0
        %3152 = vmatprep.subr.bf16.mxu0 0
        %3153 = vmatpush1.bf16.xpose.msra.mxu0 0
        %3154 = vmatprep.subr.bf16.mxu0 0
        %3155 = vmatpush1.bf16.xpose.msra.mxu0 0
        %3156 = vmatprep.subr.bf16.mxu0 0
        %3157 = vmatpush1.bf16.xpose.msra.mxu0 0
        %3158 = vmatprep.mubr.bf16.mxu0 0
        %3159 = vmatmul.mubr.bf16.gmra.mrb[0].mxu0 %v3118
        %v3160 = vpop.f32.mrb[0].mxu0
        %v3161 = vadd.f32 0.0, %v3160
        %v3162 = vpop.f32.mrb[0].mxu0
        %v3163 = vpop.f32.mrb[0].mxu0
        %v3164 = vpop.f32.mrb[0].mxu0
        %3165 = vdwg.mxu0
        %v3167 = vsel %vm2871, %v1535, 0
        %v3170 = vsel %vm2871, %v2867, 0
        %v3173 = vsel %vm2871, %v2868, 0
        %3175 = vmatprep.subr.bf16.mxu0 0
        %3176 = vmatpush1.bf16.xpose.msra.mxu0 %v3170
        %3177 = vmatprep.subr.bf16.mxu0 0
        %3178 = vmatpush1.bf16.xpose.msra.mxu0 %v3173
        %3179 = vmatprep.subr.bf16.mxu0 0
        %3180 = vmatpush1.bf16.xpose.msra.mxu0 0
        %3181 = vmatprep.subr.bf16.mxu0 0
        %3182 = vmatpush1.bf16.xpose.msra.mxu0 0
        %3183 = vmatprep.subr.bf16.mxu0 0
        %3184 = vmatpush1.bf16.xpose.msra.mxu0 0
        %3185 = vmatprep.subr.bf16.mxu0 0
        %3186 = vmatpush1.bf16.xpose.msra.mxu0 0
        %3187 = vmatprep.subr.bf16.mxu0 0
        %3188 = vmatpush1.bf16.xpose.msra.mxu0 0
        %3189 = vmatprep.subr.bf16.mxu0 0
        %3190 = vmatpush1.bf16.xpose.msra.mxu0 0
        %3191 = vmatprep.subr.bf16.mxu0 0
        %3192 = vmatpush1.bf16.xpose.msra.mxu0 0
        %3193 = vmatprep.subr.bf16.mxu0 0
        %3194 = vmatpush1.bf16.xpose.msra.mxu0 0
        %3195 = vmatprep.subr.bf16.mxu0 0
        %3196 = vmatpush1.bf16.xpose.msra.mxu0 0
        %3197 = vmatprep.subr.bf16.mxu0 0
        %3198 = vmatpush1.bf16.xpose.msra.mxu0 0
        %3199 = vmatprep.subr.bf16.mxu0 0
        %3200 = vmatpush1.bf16.xpose.msra.mxu0 0
        %3201 = vmatprep.subr.bf16.mxu0 0
        %3202 = vmatpush1.bf16.xpose.msra.mxu0 0
        %3203 = vmatprep.subr.bf16.mxu0 0
        %3204 = vmatpush1.bf16.xpose.msra.mxu0 0
        %3205 = vmatprep.subr.bf16.mxu0 0
        %3206 = vmatpush1.bf16.xpose.msra.mxu0 0
        %3207 = vmatprep.mubr.bf16.mxu0 0
        %3208 = vmatmul.mubr.bf16.gmra.mrb[0].mxu0 %v3167
        %v3209 = vpop.f32.mrb[0].mxu0
        %v3210 = vadd.f32 0.0, %v3209
        %v3211 = vpop.f32.mrb[0].mxu0
        %v3212 = vpop.f32.mrb[0].mxu0
        %v3213 = vpop.f32.mrb[0].mxu0
        %3214 = vdwg.mxu0
        %v3216 = vsel %vm2871, %v1536, 0
        %v3219 = vsel %vm2871, %v2869, 0
        %v3222 = vsel %vm2871, %v2870, 0
        %3224 = vmatprep.subr.bf16.mxu0 0
        %3225 = vmatpush1.bf16.xpose.msra.mxu0 %v3219
        %3226 = vmatprep.subr.bf16.mxu0 0
        %3227 = vmatpush1.bf16.xpose.msra.mxu0 %v3222
        %3228 = vmatprep.subr.bf16.mxu0 0
        %3229 = vmatpush1.bf16.xpose.msra.mxu0 0
        %3230 = vmatprep.subr.bf16.mxu0 0
        %3231 = vmatpush1.bf16.xpose.msra.mxu0 0
        %3232 = vmatprep.subr.bf16.mxu0 0
        %3233 = vmatpush1.bf16.xpose.msra.mxu0 0
        %3234 = vmatprep.subr.bf16.mxu0 0
        %3235 = vmatpush1.bf16.xpose.msra.mxu0 0
        %3236 = vmatprep.subr.bf16.mxu0 0
        %3237 = vmatpush1.bf16.xpose.msra.mxu0 0
        %3238 = vmatprep.subr.bf16.mxu0 0
        %3239 = vmatpush1.bf16.xpose.msra.mxu0 0
        %3240 = vmatprep.subr.bf16.mxu0 0
        %3241 = vmatpush1.bf16.xpose.msra.mxu0 0
        %3242 = vmatprep.subr.bf16.mxu0 0
        %3243 = vmatpush1.bf16.xpose.msra.mxu0 0
        %3244 = vmatprep.subr.bf16.mxu0 0
        %3245 = vmatpush1.bf16.xpose.msra.mxu0 0
        %3246 = vmatprep.subr.bf16.mxu0 0
        %3247 = vmatpush1.bf16.xpose.msra.mxu0 0
        %3248 = vmatprep.subr.bf16.mxu0 0
        %3249 = vmatpush1.bf16.xpose.msra.mxu0 0
        %3250 = vmatprep.subr.bf16.mxu0 0
        %3251 = vmatpush1.bf16.xpose.msra.mxu0 0
        %3252 = vmatprep.subr.bf16.mxu0 0
        %3253 = vmatpush1.bf16.xpose.msra.mxu0 0
        %3254 = vmatprep.subr.bf16.mxu0 0
        %3255 = vmatpush1.bf16.xpose.msra.mxu0 0
        %3256 = vmatprep.mubr.bf16.mxu0 0
        %3257 = vmatmul.mubr.bf16.gmra.mrb[0].mxu0 %v3216
        %v3258 = vpop.f32.mrb[0].mxu0
        %v3259 = vadd.f32 0.0, %v3258
        %v3260 = vpop.f32.mrb[0].mxu0
        %v3261 = vpop.f32.mrb[0].mxu0
        %v3262 = vpop.f32.mrb[0].mxu0
        %3263 = vdwg.mxu0
        %v3264 = vld [vmem:[%s2] sm:$0xff]
        %v3265 = vld [vmem:[%s2 + $0x8] sm:$0xff]
        %v3266 = vld [vmem:[%s2 + $0x10] sm:$0xff]
        %v3267 = vld [vmem:[%s2 + $0x18] sm:$0xff]
        %v3268 = vld [vmem:[%s2 + $0x20] sm:$0xff]
        %v3269 = vld [vmem:[%s2 + $0x28] sm:$0xff]
        %v3270 = vld [vmem:[%s2 + $0x30] sm:$0xff]
        %v3271 = vld [vmem:[%s2 + $0x38] sm:$0xff]
        %v3272 = vlaneseq
        %v3273 = vand.u32 %v3272, 127
        %3274 = vset.pattern.permute.xlu0 0
        %3275 = vperm.xlu0 %3274, %v3264
        %v3276 = vpop.permute.xlu0 %3275
        %3277 = vset.pattern.permute.xlu0 0
        %3278 = vperm.xlu0 %3277, %v3265
        %v3279 = vpop.permute.xlu0 %3278
        %3280 = vset.pattern.permute.xlu0 0
        %3281 = vperm.xlu0 %3280, %v3266
        %v3282 = vpop.permute.xlu0 %3281
        %3283 = vset.pattern.permute.xlu0 0
        %3284 = vperm.xlu0 %3283, %v3267
        %v3285 = vpop.permute.xlu0 %3284
        %3286 = vset.pattern.permute.xlu0 0
        %3287 = vperm.xlu0 %3286, %v3268
        %v3288 = vpop.permute.xlu0 %3287
        %3289 = vset.pattern.permute.xlu0 0
        %3290 = vperm.xlu0 %3289, %v3269
        %v3291 = vpop.permute.xlu0 %3290
        %3292 = vset.pattern.permute.xlu0 0
        %3293 = vperm.xlu0 %3292, %v3270
        %v3294 = vpop.permute.xlu0 %3293
        %3295 = vset.pattern.permute.xlu0 0
        %3296 = vperm.xlu0 %3295, %v3271
        %v3297 = vpop.permute.xlu0 %3296
        %vm3298 = vcmp.eq.s32.totalorder %v3276, %v3273
        %vm3299 = vcmp.eq.s32.totalorder %v3279, %v3273
        %vm3300 = vcmp.eq.s32.totalorder %v3282, %v3273
        %vm3301 = vcmp.eq.s32.totalorder %v3285, %v3273
        %vm3302 = vcmp.eq.s32.totalorder %v3288, %v3273
        %vm3303 = vcmp.eq.s32.totalorder %v3291, %v3273
        %vm3304 = vcmp.eq.s32.totalorder %v3294, %v3273
        %vm3305 = vcmp.eq.s32.totalorder %v3297, %v3273
        %v3306 = vsel %vm3298, 1, 0
        %v3307 = vsel %vm3299, 1, 0
        %v3308 = vsel %vm3300, 1, 0
        %v3309 = vsel %vm3301, 1, 0
        %v3310 = vsel %vm3302, 1, 0
        %v3311 = vsel %vm3303, 1, 0
        %v3312 = vsel %vm3304, 1, 0
        %v3313 = vsel %vm3305, 1, 0
        %v3314 = vcvt.s32.f32 %v3306
        %v3315 = vcvt.s32.f32 %v3307
        %v3316 = vcvt.s32.f32 %v3308
        %v3317 = vcvt.s32.f32 %v3309
        %v3318 = vcvt.s32.f32 %v3310
        %v3319 = vcvt.s32.f32 %v3311
        %v3320 = vcvt.s32.f32 %v3312
        %v3321 = vcvt.s32.f32 %v3313
        %v3326 = vcombine.high %v2916, %v2916
        %v3328 = vunpack.c.l.s4 1966171168
        %v3329 = vunpack.c.0.s8 %v3328
        %v3330 = vlaneseq
        %v3331 = vshrl.u32 %v3330, 7
        %v3332 = vsub.s32 %v3329, %v3331
        %v3333 = vrot.slane %v2916, %v3332
        %v3335 = vunpack.c.l.s4 1966171168
        %v3336 = vunpack.c.0.s8 %v3335
        %v3337 = vlaneseq
        %v3338 = vshrl.u32 %v3337, 7
        %v3339 = vsub.s32 %v3336, %v3338
        %v3340 = vrot.slane %v3326, %v3339
        %v3341 = vcombine.high %v3333, %v3333
        %v3342 = vcombine.high %v3340, %v3340
        %v3344 = vunpack.c.l.s4 1966171168
        %v3345 = vunpack.c.0.s8 %v3344
        %v3346 = vlaneseq
        %v3347 = vshrl.u32 %v3346, 7
        %v3348 = vsub.s32 %v3345, %v3347
        %v3349 = vrot.slane %v3333, %v3348
        %v3351 = vunpack.c.l.s4 1966171168
        %v3352 = vunpack.c.0.s8 %v3351
        %v3353 = vlaneseq
        %v3354 = vshrl.u32 %v3353, 7
        %v3355 = vsub.s32 %v3352, %v3354
        %v3356 = vrot.slane %v3340, %v3355
        %v3358 = vunpack.c.l.s4 1966171168
        %v3359 = vunpack.c.0.s8 %v3358
        %v3360 = vlaneseq
        %v3361 = vshrl.u32 %v3360, 7
        %v3362 = vsub.s32 %v3359, %v3361
        %v3363 = vrot.slane %v3341, %v3362
        %v3365 = vunpack.c.l.s4 1966171168
        %v3366 = vunpack.c.0.s8 %v3365
        %v3367 = vlaneseq
        %v3368 = vshrl.u32 %v3367, 7
        %v3369 = vsub.s32 %v3366, %v3368
        %v3370 = vrot.slane %v3342, %v3369
        %v3371 = vcombine.high %v3349, %v3349
        %v3372 = vcombine.high %v3356, %v3356
        %v3373 = vcombine.high %v3363, %v3363
        %v3374 = vcombine.high %v3370, %v3370
        %v3375 = vcombine.high %v2965, %v2965
        %v3377 = vunpack.c.l.s4 1966171168
        %v3378 = vunpack.c.0.s8 %v3377
        %v3379 = vlaneseq
        %v3380 = vshrl.u32 %v3379, 7
        %v3381 = vsub.s32 %v3378, %v3380
        %v3382 = vrot.slane %v2965, %v3381
        %v3384 = vunpack.c.l.s4 1966171168
        %v3385 = vunpack.c.0.s8 %v3384
        %v3386 = vlaneseq
        %v3387 = vshrl.u32 %v3386, 7
        %v3388 = vsub.s32 %v3385, %v3387
        %v3389 = vrot.slane %v3375, %v3388
        %v3390 = vcombine.high %v3382, %v3382
        %v3391 = vcombine.high %v3389, %v3389
        %v3393 = vunpack.c.l.s4 1966171168
        %v3394 = vunpack.c.0.s8 %v3393
        %v3395 = vlaneseq
        %v3396 = vshrl.u32 %v3395, 7
        %v3397 = vsub.s32 %v3394, %v3396
        %v3398 = vrot.slane %v3382, %v3397
        %v3400 = vunpack.c.l.s4 1966171168
        %v3401 = vunpack.c.0.s8 %v3400
        %v3402 = vlaneseq
        %v3403 = vshrl.u32 %v3402, 7
        %v3404 = vsub.s32 %v3401, %v3403
        %v3405 = vrot.slane %v3389, %v3404
        %v3407 = vunpack.c.l.s4 1966171168
        %v3408 = vunpack.c.0.s8 %v3407
        %v3409 = vlaneseq
        %v3410 = vshrl.u32 %v3409, 7
        %v3411 = vsub.s32 %v3408, %v3410
        %v3412 = vrot.slane %v3390, %v3411
        %v3414 = vunpack.c.l.s4 1966171168
        %v3415 = vunpack.c.0.s8 %v3414
        %v3416 = vlaneseq
        %v3417 = vshrl.u32 %v3416, 7
        %v3418 = vsub.s32 %v3415, %v3417
        %v3419 = vrot.slane %v3391, %v3418
        %v3420 = vcombine.high %v3398, %v3398
        %v3421 = vcombine.high %v3405, %v3405
        %v3422 = vcombine.high %v3412, %v3412
        %v3423 = vcombine.high %v3419, %v3419
        %v3424 = vcombine.high %v3014, %v3014
        %v3426 = vunpack.c.l.s4 1966171168
        %v3427 = vunpack.c.0.s8 %v3426
        %v3428 = vlaneseq
        %v3429 = vshrl.u32 %v3428, 7
        %v3430 = vsub.s32 %v3427, %v3429
        %v3431 = vrot.slane %v3014, %v3430
        %v3433 = vunpack.c.l.s4 1966171168
        %v3434 = vunpack.c.0.s8 %v3433
        %v3435 = vlaneseq
        %v3436 = vshrl.u32 %v3435, 7
        %v3437 = vsub.s32 %v3434, %v3436
        %v3438 = vrot.slane %v3424, %v3437
        %v3439 = vcombine.high %v3431, %v3431
        %v3440 = vcombine.high %v3438, %v3438
        %v3442 = vunpack.c.l.s4 1966171168
        %v3443 = vunpack.c.0.s8 %v3442
        %v3444 = vlaneseq
        %v3445 = vshrl.u32 %v3444, 7
        %v3446 = vsub.s32 %v3443, %v3445
        %v3447 = vrot.slane %v3431, %v3446
        %v3449 = vunpack.c.l.s4 1966171168
        %v3450 = vunpack.c.0.s8 %v3449
        %v3451 = vlaneseq
        %v3452 = vshrl.u32 %v3451, 7
        %v3453 = vsub.s32 %v3450, %v3452
        %v3454 = vrot.slane %v3438, %v3453
        %v3456 = vunpack.c.l.s4 1966171168
        %v3457 = vunpack.c.0.s8 %v3456
        %v3458 = vlaneseq
        %v3459 = vshrl.u32 %v3458, 7
        %v3460 = vsub.s32 %v3457, %v3459
        %v3461 = vrot.slane %v3439, %v3460
        %v3463 = vunpack.c.l.s4 1966171168
        %v3464 = vunpack.c.0.s8 %v3463
        %v3465 = vlaneseq
        %v3466 = vshrl.u32 %v3465, 7
        %v3467 = vsub.s32 %v3464, %v3466
        %v3468 = vrot.slane %v3440, %v3467
        %v3469 = vcombine.high %v3447, %v3447
        %v3470 = vcombine.high %v3454, %v3454
        %v3471 = vcombine.high %v3461, %v3461
        %v3472 = vcombine.high %v3468, %v3468
        %v3473 = vcombine.high %v3063, %v3063
        %v3475 = vunpack.c.l.s4 1966171168
        %v3476 = vunpack.c.0.s8 %v3475
        %v3477 = vlaneseq
        %v3478 = vshrl.u32 %v3477, 7
        %v3479 = vsub.s32 %v3476, %v3478
        %v3480 = vrot.slane %v3063, %v3479
        %v3482 = vunpack.c.l.s4 1966171168
        %v3483 = vunpack.c.0.s8 %v3482
        %v3484 = vlaneseq
        %v3485 = vshrl.u32 %v3484, 7
        %v3486 = vsub.s32 %v3483, %v3485
        %v3487 = vrot.slane %v3473, %v3486
        %v3488 = vcombine.high %v3480, %v3480
        %v3489 = vcombine.high %v3487, %v3487
        %v3491 = vunpack.c.l.s4 1966171168
        %v3492 = vunpack.c.0.s8 %v3491
        %v3493 = vlaneseq
        %v3494 = vshrl.u32 %v3493, 7
        %v3495 = vsub.s32 %v3492, %v3494
        %v3496 = vrot.slane %v3480, %v3495
        %v3498 = vunpack.c.l.s4 1966171168
        %v3499 = vunpack.c.0.s8 %v3498
        %v3500 = vlaneseq
        %v3501 = vshrl.u32 %v3500, 7
        %v3502 = vsub.s32 %v3499, %v3501
        %v3503 = vrot.slane %v3487, %v3502
        %v3505 = vunpack.c.l.s4 1966171168
        %v3506 = vunpack.c.0.s8 %v3505
        %v3507 = vlaneseq
        %v3508 = vshrl.u32 %v3507, 7
        %v3509 = vsub.s32 %v3506, %v3508
        %v3510 = vrot.slane %v3488, %v3509
        %v3512 = vunpack.c.l.s4 1966171168
        %v3513 = vunpack.c.0.s8 %v3512
        %v3514 = vlaneseq
        %v3515 = vshrl.u32 %v3514, 7
        %v3516 = vsub.s32 %v3513, %v3515
        %v3517 = vrot.slane %v3489, %v3516
        %v3518 = vcombine.high %v3496, %v3496
        %v3519 = vcombine.high %v3503, %v3503
        %v3520 = vcombine.high %v3510, %v3510
        %v3521 = vcombine.high %v3517, %v3517
        %v3522 = vlaneseq
        %v3523 = vshrl.u32 %v3522, 7
        %v3524 = vsub.s32 0, %v3523
        %v3525 = vrot.slane %v3349, %v3524
        %v3526 = vlaneseq
        %v3527 = vshrl.u32 %v3526, 7
        %v3528 = vsub.s32 0, %v3527
        %v3529 = vrot.slane %v3363, %v3528
        %v3530 = vlaneseq
        %v3531 = vshrl.u32 %v3530, 7
        %v3532 = vsub.s32 0, %v3531
        %v3533 = vrot.slane %v3371, %v3532
        %v3534 = vlaneseq
        %v3535 = vshrl.u32 %v3534, 7
        %v3536 = vsub.s32 0, %v3535
        %v3537 = vrot.slane %v3373, %v3536
        %v3538 = vlaneseq
        %v3539 = vshrl.u32 %v3538, 7
        %v3540 = vsub.s32 0, %v3539
        %v3541 = vrot.slane %v3356, %v3540
        %v3542 = vlaneseq
        %v3543 = vshrl.u32 %v3542, 7
        %v3544 = vsub.s32 0, %v3543
        %v3545 = vrot.slane %v3370, %v3544
        %v3546 = vlaneseq
        %v3547 = vshrl.u32 %v3546, 7
        %v3548 = vsub.s32 0, %v3547
        %v3549 = vrot.slane %v3372, %v3548
        %v3550 = vlaneseq
        %v3551 = vshrl.u32 %v3550, 7
        %v3552 = vsub.s32 0, %v3551
        %v3553 = vrot.slane %v3374, %v3552
        %v3554 = vlaneseq
        %v3555 = vshrl.u32 %v3554, 7
        %v3556 = vsub.s32 0, %v3555
        %v3557 = vrot.slane %v3398, %v3556
        %v3558 = vlaneseq
        %v3559 = vshrl.u32 %v3558, 7
        %v3560 = vsub.s32 0, %v3559
        %v3561 = vrot.slane %v3412, %v3560
        %v3562 = vlaneseq
        %v3563 = vshrl.u32 %v3562, 7
        %v3564 = vsub.s32 0, %v3563
        %v3565 = vrot.slane %v3420, %v3564
        %v3566 = vlaneseq
        %v3567 = vshrl.u32 %v3566, 7
        %v3568 = vsub.s32 0, %v3567
        %v3569 = vrot.slane %v3422, %v3568
        %v3570 = vlaneseq
        %v3571 = vshrl.u32 %v3570, 7
        %v3572 = vsub.s32 0, %v3571
        %v3573 = vrot.slane %v3405, %v3572
        %v3574 = vlaneseq
        %v3575 = vshrl.u32 %v3574, 7
        %v3576 = vsub.s32 0, %v3575
        %v3577 = vrot.slane %v3419, %v3576
        %v3578 = vlaneseq
        %v3579 = vshrl.u32 %v3578, 7
        %v3580 = vsub.s32 0, %v3579
        %v3581 = vrot.slane %v3421, %v3580
        %v3582 = vlaneseq
        %v3583 = vshrl.u32 %v3582, 7
        %v3584 = vsub.s32 0, %v3583
        %v3585 = vrot.slane %v3423, %v3584
        %v3586 = vlaneseq
        %v3587 = vshrl.u32 %v3586, 7
        %v3588 = vsub.s32 0, %v3587
        %v3589 = vrot.slane %v3447, %v3588
        %v3590 = vlaneseq
        %v3591 = vshrl.u32 %v3590, 7
        %v3592 = vsub.s32 0, %v3591
        %v3593 = vrot.slane %v3461, %v3592
        %v3594 = vlaneseq
        %v3595 = vshrl.u32 %v3594, 7
        %v3596 = vsub.s32 0, %v3595
        %v3597 = vrot.slane %v3469, %v3596
        %v3598 = vlaneseq
        %v3599 = vshrl.u32 %v3598, 7
        %v3600 = vsub.s32 0, %v3599
        %v3601 = vrot.slane %v3471, %v3600
        %v3602 = vlaneseq
        %v3603 = vshrl.u32 %v3602, 7
        %v3604 = vsub.s32 0, %v3603
        %v3605 = vrot.slane %v3454, %v3604
        %v3606 = vlaneseq
        %v3607 = vshrl.u32 %v3606, 7
        %v3608 = vsub.s32 0, %v3607
        %v3609 = vrot.slane %v3468, %v3608
        %v3610 = vlaneseq
        %v3611 = vshrl.u32 %v3610, 7
        %v3612 = vsub.s32 0, %v3611
        %v3613 = vrot.slane %v3470, %v3612
        %v3614 = vlaneseq
        %v3615 = vshrl.u32 %v3614, 7
        %v3616 = vsub.s32 0, %v3615
        %v3617 = vrot.slane %v3472, %v3616
        %v3618 = vlaneseq
        %v3619 = vshrl.u32 %v3618, 7
        %v3620 = vsub.s32 0, %v3619
        %v3621 = vrot.slane %v3496, %v3620
        %v3622 = vlaneseq
        %v3623 = vshrl.u32 %v3622, 7
        %v3624 = vsub.s32 0, %v3623
        %v3625 = vrot.slane %v3510, %v3624
        %v3626 = vlaneseq
        %v3627 = vshrl.u32 %v3626, 7
        %v3628 = vsub.s32 0, %v3627
        %v3629 = vrot.slane %v3518, %v3628
        %v3630 = vlaneseq
        %v3631 = vshrl.u32 %v3630, 7
        %v3632 = vsub.s32 0, %v3631
        %v3633 = vrot.slane %v3520, %v3632
        %v3634 = vlaneseq
        %v3635 = vshrl.u32 %v3634, 7
        %v3636 = vsub.s32 0, %v3635
        %v3637 = vrot.slane %v3503, %v3636
        %v3638 = vlaneseq
        %v3639 = vshrl.u32 %v3638, 7
        %v3640 = vsub.s32 0, %v3639
        %v3641 = vrot.slane %v3517, %v3640
        %v3642 = vlaneseq
        %v3643 = vshrl.u32 %v3642, 7
        %v3644 = vsub.s32 0, %v3643
        %v3645 = vrot.slane %v3519, %v3644
        %v3646 = vlaneseq
        %v3647 = vshrl.u32 %v3646, 7
        %v3648 = vsub.s32 0, %v3647
        %v3649 = vrot.slane %v3521, %v3648
        %v3682 = vmul.f32 %v3525, %v3314
        %v3683 = vmul.f32 %v3529, %v3315
        %v3684 = vmul.f32 %v3533, %v3316
        %v3685 = vmul.f32 %v3537, %v3317
        %v3686 = vmul.f32 %v3541, %v3318
        %v3687 = vmul.f32 %v3545, %v3319
        %v3688 = vmul.f32 %v3549, %v3320
        %v3689 = vmul.f32 %v3553, %v3321
        %v3690 = vmul.f32 %v3557, %v3314
        %v3691 = vmul.f32 %v3561, %v3315
        %v3692 = vmul.f32 %v3565, %v3316
        %v3693 = vmul.f32 %v3569, %v3317
        %v3694 = vmul.f32 %v3573, %v3318
        %v3695 = vmul.f32 %v3577, %v3319
        %v3696 = vmul.f32 %v3581, %v3320
        %v3697 = vmul.f32 %v3585, %v3321
        %v3698 = vmul.f32 %v3589, %v3314
        %v3699 = vmul.f32 %v3593, %v3315
        %v3700 = vmul.f32 %v3597, %v3316
        %v3701 = vmul.f32 %v3601, %v3317
        %v3702 = vmul.f32 %v3605, %v3318
        %v3703 = vmul.f32 %v3609, %v3319
        %v3704 = vmul.f32 %v3613, %v3320
        %v3705 = vmul.f32 %v3617, %v3321
        %v3706 = vmul.f32 %v3621, %v3314
        %v3707 = vmul.f32 %v3625, %v3315
        %v3708 = vmul.f32 %v3629, %v3316
        %v3709 = vmul.f32 %v3633, %v3317
        %v3710 = vmul.f32 %v3637, %v3318
        %v3711 = vmul.f32 %v3641, %v3319
        %v3712 = vmul.f32 %v3645, %v3320
        %v3713 = vmul.f32 %v3649, %v3321
        %vm3714 = vcmask 252928
        %v3715 = vsel %vm3714, %v3682, 0.0
        %3716 = vadd.xlane.f32.xlu0 %v3715
        %v3717 = vpop.xlane.xlu0 %3716
        %v3718 = vsel %vm3714, %v3683, 0.0
        %3719 = vadd.xlane.f32.xlu0 %v3718
        %v3720 = vpop.xlane.xlu0 %3719
        %v3721 = vsel %vm3714, %v3684, 0.0
        %3722 = vadd.xlane.f32.xlu0 %v3721
        %v3723 = vpop.xlane.xlu0 %3722
        %v3724 = vsel %vm3714, %v3685, 0.0
        %3725 = vadd.xlane.f32.xlu0 %v3724
        %v3726 = vpop.xlane.xlu0 %3725
        %v3727 = vsel %vm3714, %v3686, 0.0
        %3728 = vadd.xlane.f32.xlu0 %v3727
        %v3729 = vpop.xlane.xlu0 %3728
        %v3730 = vsel %vm3714, %v3687, 0.0
        %3731 = vadd.xlane.f32.xlu0 %v3730
        %v3732 = vpop.xlane.xlu0 %3731
        %v3733 = vsel %vm3714, %v3688, 0.0
        %3734 = vadd.xlane.f32.xlu0 %v3733
        %v3735 = vpop.xlane.xlu0 %3734
        %v3736 = vsel %vm3714, %v3689, 0.0
        %3737 = vadd.xlane.f32.xlu0 %v3736
        %v3738 = vpop.xlane.xlu0 %3737
        %v3739 = vsel %vm3714, %v3690, 0.0
        %3740 = vadd.xlane.f32.xlu0 %v3739
        %v3741 = vpop.xlane.xlu0 %3740
        %v3742 = vsel %vm3714, %v3691, 0.0
        %3743 = vadd.xlane.f32.xlu0 %v3742
        %v3744 = vpop.xlane.xlu0 %3743
        %v3745 = vsel %vm3714, %v3692, 0.0
        %3746 = vadd.xlane.f32.xlu0 %v3745
        %v3747 = vpop.xlane.xlu0 %3746
        %v3748 = vsel %vm3714, %v3693, 0.0
        %3749 = vadd.xlane.f32.xlu0 %v3748
        %v3750 = vpop.xlane.xlu0 %3749
        %v3751 = vsel %vm3714, %v3694, 0.0
        %3752 = vadd.xlane.f32.xlu0 %v3751
        %v3753 = vpop.xlane.xlu0 %3752
        %v3754 = vsel %vm3714, %v3695, 0.0
        %3755 = vadd.xlane.f32.xlu0 %v3754
        %v3756 = vpop.xlane.xlu0 %3755
        %v3757 = vsel %vm3714, %v3696, 0.0
        %3758 = vadd.xlane.f32.xlu0 %v3757
        %v3759 = vpop.xlane.xlu0 %3758
        %v3760 = vsel %vm3714, %v3697, 0.0
        %3761 = vadd.xlane.f32.xlu0 %v3760
        %v3762 = vpop.xlane.xlu0 %3761
        %v3763 = vsel %vm3714, %v3698, 0.0
        %3764 = vadd.xlane.f32.xlu0 %v3763
        %v3765 = vpop.xlane.xlu0 %3764
        %v3766 = vsel %vm3714, %v3699, 0.0
        %3767 = vadd.xlane.f32.xlu0 %v3766
        %v3768 = vpop.xlane.xlu0 %3767
        %v3769 = vsel %vm3714, %v3700, 0.0
        %3770 = vadd.xlane.f32.xlu0 %v3769
        %v3771 = vpop.xlane.xlu0 %3770
        %v3772 = vsel %vm3714, %v3701, 0.0
        %3773 = vadd.xlane.f32.xlu0 %v3772
        %v3774 = vpop.xlane.xlu0 %3773
        %v3775 = vsel %vm3714, %v3702, 0.0
        %3776 = vadd.xlane.f32.xlu0 %v3775
        %v3777 = vpop.xlane.xlu0 %3776
        %v3778 = vsel %vm3714, %v3703, 0.0
        %3779 = vadd.xlane.f32.xlu0 %v3778
        %v3780 = vpop.xlane.xlu0 %3779
        %v3781 = vsel %vm3714, %v3704, 0.0
        %3782 = vadd.xlane.f32.xlu0 %v3781
        %v3783 = vpop.xlane.xlu0 %3782
        %v3784 = vsel %vm3714, %v3705, 0.0
        %3785 = vadd.xlane.f32.xlu0 %v3784
        %v3786 = vpop.xlane.xlu0 %3785
        %v3787 = vsel %vm3714, %v3706, 0.0
        %3788 = vadd.xlane.f32.xlu0 %v3787
        %v3789 = vpop.xlane.xlu0 %3788
        %v3790 = vsel %vm3714, %v3707, 0.0
        %3791 = vadd.xlane.f32.xlu0 %v3790
        %v3792 = vpop.xlane.xlu0 %3791
        %v3793 = vsel %vm3714, %v3708, 0.0
        %3794 = vadd.xlane.f32.xlu0 %v3793
        %v3795 = vpop.xlane.xlu0 %3794
        %v3796 = vsel %vm3714, %v3709, 0.0
        %3797 = vadd.xlane.f32.xlu0 %v3796
        %v3798 = vpop.xlane.xlu0 %3797
        %v3799 = vsel %vm3714, %v3710, 0.0
        %3800 = vadd.xlane.f32.xlu0 %v3799
        %v3801 = vpop.xlane.xlu0 %3800
        %v3802 = vsel %vm3714, %v3711, 0.0
        %3803 = vadd.xlane.f32.xlu0 %v3802
        %v3804 = vpop.xlane.xlu0 %3803
        %v3805 = vsel %vm3714, %v3712, 0.0
        %3806 = vadd.xlane.f32.xlu0 %v3805
        %v3807 = vpop.xlane.xlu0 %3806
        %v3808 = vsel %vm3714, %v3713, 0.0
        %3809 = vadd.xlane.f32.xlu0 %v3808
        %v3810 = vpop.xlane.xlu0 %3809
        %v3811 = vmul.f32 %v3112, %v3314
        %v3812 = vmul.f32 %v3112, %v3315
        %v3813 = vmul.f32 %v3112, %v3316
        %v3814 = vmul.f32 %v3112, %v3317
        %v3815 = vmul.f32 %v3112, %v3318
        %v3816 = vmul.f32 %v3112, %v3319
        %v3817 = vmul.f32 %v3112, %v3320
        %v3818 = vmul.f32 %v3112, %v3321
        %v3819 = vmul.f32 %v3161, %v3314
        %v3820 = vmul.f32 %v3161, %v3315
        %v3821 = vmul.f32 %v3161, %v3316
        %v3822 = vmul.f32 %v3161, %v3317
        %v3823 = vmul.f32 %v3161, %v3318
        %v3824 = vmul.f32 %v3161, %v3319
        %v3825 = vmul.f32 %v3161, %v3320
        %v3826 = vmul.f32 %v3161, %v3321
        %v3827 = vmul.f32 %v3210, %v3314
        %v3828 = vmul.f32 %v3210, %v3315
        %v3829 = vmul.f32 %v3210, %v3316
        %v3830 = vmul.f32 %v3210, %v3317
        %v3831 = vmul.f32 %v3210, %v3318
        %v3832 = vmul.f32 %v3210, %v3319
        %v3833 = vmul.f32 %v3210, %v3320
        %v3834 = vmul.f32 %v3210, %v3321
        %v3835 = vmul.f32 %v3259, %v3314
        %v3836 = vmul.f32 %v3259, %v3315
        %v3837 = vmul.f32 %v3259, %v3316
        %v3838 = vmul.f32 %v3259, %v3317
        %v3839 = vmul.f32 %v3259, %v3318
        %v3840 = vmul.f32 %v3259, %v3319
        %v3841 = vmul.f32 %v3259, %v3320
        %v3842 = vmul.f32 %v3259, %v3321
        %v3843 = vsel %vm3714, %v3811, 0.0
        %3844 = vadd.xlane.f32.xlu0 %v3843
        %v3845 = vpop.xlane.xlu0 %3844
        %v3846 = vsel %vm3714, %v3812, 0.0
        %3847 = vadd.xlane.f32.xlu0 %v3846
        %v3848 = vpop.xlane.xlu0 %3847
        %v3849 = vsel %vm3714, %v3813, 0.0
        %3850 = vadd.xlane.f32.xlu0 %v3849
        %v3851 = vpop.xlane.xlu0 %3850
        %v3852 = vsel %vm3714, %v3814, 0.0
        %3853 = vadd.xlane.f32.xlu0 %v3852
        %v3854 = vpop.xlane.xlu0 %3853
        %v3855 = vsel %vm3714, %v3815, 0.0
        %3856 = vadd.xlane.f32.xlu0 %v3855
        %v3857 = vpop.xlane.xlu0 %3856
        %v3858 = vsel %vm3714, %v3816, 0.0
        %3859 = vadd.xlane.f32.xlu0 %v3858
        %v3860 = vpop.xlane.xlu0 %3859
        %v3861 = vsel %vm3714, %v3817, 0.0
        %3862 = vadd.xlane.f32.xlu0 %v3861
        %v3863 = vpop.xlane.xlu0 %3862
        %v3864 = vsel %vm3714, %v3818, 0.0
        %3865 = vadd.xlane.f32.xlu0 %v3864
        %v3866 = vpop.xlane.xlu0 %3865
        %v3867 = vsel %vm3714, %v3819, 0.0
        %3868 = vadd.xlane.f32.xlu0 %v3867
        %v3869 = vpop.xlane.xlu0 %3868
        %v3870 = vsel %vm3714, %v3820, 0.0
        %3871 = vadd.xlane.f32.xlu0 %v3870
        %v3872 = vpop.xlane.xlu0 %3871
        %v3873 = vsel %vm3714, %v3821, 0.0
        %3874 = vadd.xlane.f32.xlu0 %v3873
        %v3875 = vpop.xlane.xlu0 %3874
        %v3876 = vsel %vm3714, %v3822, 0.0
        %3877 = vadd.xlane.f32.xlu0 %v3876
        %v3878 = vpop.xlane.xlu0 %3877
        %v3879 = vsel %vm3714, %v3823, 0.0
        %3880 = vadd.xlane.f32.xlu0 %v3879
        %v3881 = vpop.xlane.xlu0 %3880
        %v3882 = vsel %vm3714, %v3824, 0.0
        %3883 = vadd.xlane.f32.xlu0 %v3882
        %v3884 = vpop.xlane.xlu0 %3883
        %v3885 = vsel %vm3714, %v3825, 0.0
        %3886 = vadd.xlane.f32.xlu0 %v3885
        %v3887 = vpop.xlane.xlu0 %3886
        %v3888 = vsel %vm3714, %v3826, 0.0
        %3889 = vadd.xlane.f32.xlu0 %v3888
        %v3890 = vpop.xlane.xlu0 %3889
        %v3891 = vsel %vm3714, %v3827, 0.0
        %3892 = vadd.xlane.f32.xlu0 %v3891
        %v3893 = vpop.xlane.xlu0 %3892
        %v3894 = vsel %vm3714, %v3828, 0.0
        %3895 = vadd.xlane.f32.xlu0 %v3894
        %v3896 = vpop.xlane.xlu0 %3895
        %v3897 = vsel %vm3714, %v3829, 0.0
        %3898 = vadd.xlane.f32.xlu0 %v3897
        %v3899 = vpop.xlane.xlu0 %3898
        %v3900 = vsel %vm3714, %v3830, 0.0
        %3901 = vadd.xlane.f32.xlu0 %v3900
        %v3902 = vpop.xlane.xlu0 %3901
        %v3903 = vsel %vm3714, %v3831, 0.0
        %3904 = vadd.xlane.f32.xlu0 %v3903
        %v3905 = vpop.xlane.xlu0 %3904
        %v3906 = vsel %vm3714, %v3832, 0.0
        %3907 = vadd.xlane.f32.xlu0 %v3906
        %v3908 = vpop.xlane.xlu0 %3907
        %v3909 = vsel %vm3714, %v3833, 0.0
        %3910 = vadd.xlane.f32.xlu0 %v3909
        %v3911 = vpop.xlane.xlu0 %3910
        %v3912 = vsel %vm3714, %v3834, 0.0
        %3913 = vadd.xlane.f32.xlu0 %v3912
        %v3914 = vpop.xlane.xlu0 %3913
        %v3915 = vsel %vm3714, %v3835, 0.0
        %3916 = vadd.xlane.f32.xlu0 %v3915
        %v3917 = vpop.xlane.xlu0 %3916
        %v3918 = vsel %vm3714, %v3836, 0.0
        %3919 = vadd.xlane.f32.xlu0 %v3918
        %v3920 = vpop.xlane.xlu0 %3919
        %v3921 = vsel %vm3714, %v3837, 0.0
        %3922 = vadd.xlane.f32.xlu0 %v3921
        %v3923 = vpop.xlane.xlu0 %3922
        %v3924 = vsel %vm3714, %v3838, 0.0
        %3925 = vadd.xlane.f32.xlu0 %v3924
        %v3926 = vpop.xlane.xlu0 %3925
        %v3927 = vsel %vm3714, %v3839, 0.0
        %3928 = vadd.xlane.f32.xlu0 %v3927
        %v3929 = vpop.xlane.xlu0 %3928
        %v3930 = vsel %vm3714, %v3840, 0.0
        %3931 = vadd.xlane.f32.xlu0 %v3930
        %v3932 = vpop.xlane.xlu0 %3931
        %v3933 = vsel %vm3714, %v3841, 0.0
        %3934 = vadd.xlane.f32.xlu0 %v3933
        %v3935 = vpop.xlane.xlu0 %3934
        %v3936 = vsel %vm3714, %v3842, 0.0
        %3937 = vadd.xlane.f32.xlu0 %v3936
        %v3938 = vpop.xlane.xlu0 %3937
        %v3947 = vlaneseq
        %v3948 = vshrl.u32 %v3947, 7
        %v3949 = vsub.s32 %v3273, %v3948
        %v3950 = vrot.slane %v3717, %v3949
        %v3951 = vlaneseq
        %v3952 = vshrl.u32 %v3951, 7
        %v3953 = vsub.s32 %v3273, %v3952
        %v3954 = vrot.slane %v3720, %v3953
        %v3955 = vlaneseq
        %v3956 = vshrl.u32 %v3955, 7
        %v3957 = vsub.s32 %v3273, %v3956
        %v3958 = vrot.slane %v3723, %v3957
        %v3959 = vlaneseq
        %v3960 = vshrl.u32 %v3959, 7
        %v3961 = vsub.s32 %v3273, %v3960
        %v3962 = vrot.slane %v3726, %v3961
        %v3963 = vlaneseq
        %v3964 = vshrl.u32 %v3963, 7
        %v3965 = vsub.s32 %v3273, %v3964
        %v3966 = vrot.slane %v3729, %v3965
        %v3967 = vlaneseq
        %v3968 = vshrl.u32 %v3967, 7
        %v3969 = vsub.s32 %v3273, %v3968
        %v3970 = vrot.slane %v3732, %v3969
        %v3971 = vlaneseq
        %v3972 = vshrl.u32 %v3971, 7
        %v3973 = vsub.s32 %v3273, %v3972
        %v3974 = vrot.slane %v3735, %v3973
        %v3975 = vlaneseq
        %v3976 = vshrl.u32 %v3975, 7
        %v3977 = vsub.s32 %v3273, %v3976
        %v3978 = vrot.slane %v3738, %v3977
        %vm3979 = vcmask 1041409
        %v3980 = vsel %vm3979, %v3954, %v3950
        %vm3981 = vcmask 1042434
        %v3982 = vsel %vm3981, %v3958, %v3980
        %vm3983 = vcmask 1043459
        %v3984 = vsel %vm3983, %v3962, %v3982
        %vm3985 = vcmask 1044484
        %v3986 = vsel %vm3985, %v3966, %v3984
        %vm3987 = vcmask 1045509
        %v3988 = vsel %vm3987, %v3970, %v3986
        %vm3989 = vcmask 1046534
        %v3990 = vsel %vm3989, %v3974, %v3988
        %vm3991 = vcmask 1047559
        %v3992 = vsel %vm3991, %v3978, %v3990
        %3994 = vmatprep.subr.bf16.mxu0 0
        %3995 = vmatpush1.bf16.xpose.msra.mxu0 %v3069
        %3996 = vmatprep.subr.bf16.mxu0 0
        %3997 = vmatpush1.bf16.xpose.msra.mxu0 0
        %3998 = vmatprep.subr.bf16.mxu0 0
        %3999 = vmatpush1.bf16.xpose.msra.mxu0 0
        %4000 = vmatprep.subr.bf16.mxu0 0
        %4001 = vmatpush1.bf16.xpose.msra.mxu0 0
        %4002 = vmatprep.subr.bf16.mxu0 0
        %4003 = vmatpush1.bf16.xpose.msra.mxu0 0
        %4004 = vmatprep.subr.bf16.mxu0 0
        %4005 = vmatpush1.bf16.xpose.msra.mxu0 0
        %4006 = vmatprep.subr.bf16.mxu0 0
        %4007 = vmatpush1.bf16.xpose.msra.mxu0 0
        %4008 = vmatprep.subr.bf16.mxu0 0
        %4009 = vmatpush1.bf16.xpose.msra.mxu0 0
        %4010 = vmatprep.subr.bf16.mxu0 0
        %4011 = vmatpush1.bf16.xpose.msra.mxu0 0
        %4012 = vmatprep.subr.bf16.mxu0 0
        %4013 = vmatpush1.bf16.xpose.msra.mxu0 0
        %4014 = vmatprep.subr.bf16.mxu0 0
        %4015 = vmatpush1.bf16.xpose.msra.mxu0 0
        %4016 = vmatprep.subr.bf16.mxu0 0
        %4017 = vmatpush1.bf16.xpose.msra.mxu0 0
        %4018 = vmatprep.subr.bf16.mxu0 0
        %4019 = vmatpush1.bf16.xpose.msra.mxu0 0
        %4020 = vmatprep.subr.bf16.mxu0 0
        %4021 = vmatpush1.bf16.xpose.msra.mxu0 0
        %4022 = vmatprep.subr.bf16.mxu0 0
        %4023 = vmatpush1.bf16.xpose.msra.mxu0 0
        %4024 = vmatprep.subr.bf16.mxu0 0
        %4025 = vmatpush1.bf16.xpose.msra.mxu0 0
        %4026 = vmatprep.mubr.bf16.mxu0 0
        %4027 = vmatmul.mubr.bf16.gmra.mrb[0].mxu0 %v2873
        %v4028 = vpop.f32.mrb[0].mxu0
        %v4029 = vadd.f32 %v3992, %v4028
        %v4030 = vpop.f32.mrb[0].mxu0
        %v4031 = vpop.f32.mrb[0].mxu0
        %v4032 = vpop.f32.mrb[0].mxu0
        %4033 = vdwg.mxu0
        %v4042 = vlaneseq
        %v4043 = vshrl.u32 %v4042, 7
        %v4044 = vsub.s32 %v3273, %v4043
        %v4045 = vrot.slane %v3741, %v4044
        %v4046 = vlaneseq
        %v4047 = vshrl.u32 %v4046, 7
        %v4048 = vsub.s32 %v3273, %v4047
        %v4049 = vrot.slane %v3744, %v4048
        %v4050 = vlaneseq
        %v4051 = vshrl.u32 %v4050, 7
        %v4052 = vsub.s32 %v3273, %v4051
        %v4053 = vrot.slane %v3747, %v4052
        %v4054 = vlaneseq
        %v4055 = vshrl.u32 %v4054, 7
        %v4056 = vsub.s32 %v3273, %v4055
        %v4057 = vrot.slane %v3750, %v4056
        %v4058 = vlaneseq
        %v4059 = vshrl.u32 %v4058, 7
        %v4060 = vsub.s32 %v3273, %v4059
        %v4061 = vrot.slane %v3753, %v4060
        %v4062 = vlaneseq
        %v4063 = vshrl.u32 %v4062, 7
        %v4064 = vsub.s32 %v3273, %v4063
        %v4065 = vrot.slane %v3756, %v4064
        %v4066 = vlaneseq
        %v4067 = vshrl.u32 %v4066, 7
        %v4068 = vsub.s32 %v3273, %v4067
        %v4069 = vrot.slane %v3759, %v4068
        %v4070 = vlaneseq
        %v4071 = vshrl.u32 %v4070, 7
        %v4072 = vsub.s32 %v3273, %v4071
        %v4073 = vrot.slane %v3762, %v4072
        %v4074 = vsel %vm3979, %v4049, %v4045
        %v4075 = vsel %vm3981, %v4053, %v4074
        %v4076 = vsel %vm3983, %v4057, %v4075
        %v4077 = vsel %vm3985, %v4061, %v4076
        %v4078 = vsel %vm3987, %v4065, %v4077
        %v4079 = vsel %vm3989, %v4069, %v4078
        %v4080 = vsel %vm3991, %v4073, %v4079
        %4082 = vmatprep.subr.bf16.mxu0 0
        %4083 = vmatpush1.bf16.xpose.msra.mxu0 %v3118
        %4084 = vmatprep.subr.bf16.mxu0 0
        %4085 = vmatpush1.bf16.xpose.msra.mxu0 0
        %4086 = vmatprep.subr.bf16.mxu0 0
        %4087 = vmatpush1.bf16.xpose.msra.mxu0 0
        %4088 = vmatprep.subr.bf16.mxu0 0
        %4089 = vmatpush1.bf16.xpose.msra.mxu0 0
        %4090 = vmatprep.subr.bf16.mxu0 0
        %4091 = vmatpush1.bf16.xpose.msra.mxu0 0
        %4092 = vmatprep.subr.bf16.mxu0 0
        %4093 = vmatpush1.bf16.xpose.msra.mxu0 0
        %4094 = vmatprep.subr.bf16.mxu0 0
        %4095 = vmatpush1.bf16.xpose.msra.mxu0 0
        %4096 = vmatprep.subr.bf16.mxu0 0
        %4097 = vmatpush1.bf16.xpose.msra.mxu0 0
        %4098 = vmatprep.subr.bf16.mxu0 0
        %4099 = vmatpush1.bf16.xpose.msra.mxu0 0
        %4100 = vmatprep.subr.bf16.mxu0 0
        %4101 = vmatpush1.bf16.xpose.msra.mxu0 0
        %4102 = vmatprep.subr.bf16.mxu0 0
        %4103 = vmatpush1.bf16.xpose.msra.mxu0 0
        %4104 = vmatprep.subr.bf16.mxu0 0
        %4105 = vmatpush1.bf16.xpose.msra.mxu0 0
        %4106 = vmatprep.subr.bf16.mxu0 0
        %4107 = vmatpush1.bf16.xpose.msra.mxu0 0
        %4108 = vmatprep.subr.bf16.mxu0 0
        %4109 = vmatpush1.bf16.xpose.msra.mxu0 0
        %4110 = vmatprep.subr.bf16.mxu0 0
        %4111 = vmatpush1.bf16.xpose.msra.mxu0 0
        %4112 = vmatprep.subr.bf16.mxu0 0
        %4113 = vmatpush1.bf16.xpose.msra.mxu0 0
        %4114 = vmatprep.mubr.bf16.mxu0 0
        %4115 = vmatmul.mubr.bf16.gmra.mrb[0].mxu0 %v2922
        %v4116 = vpop.f32.mrb[0].mxu0
        %v4117 = vadd.f32 %v4080, %v4116
        %v4118 = vpop.f32.mrb[0].mxu0
        %v4119 = vpop.f32.mrb[0].mxu0
        %v4120 = vpop.f32.mrb[0].mxu0
        %4121 = vdwg.mxu0
        %v4130 = vlaneseq
        %v4131 = vshrl.u32 %v4130, 7
        %v4132 = vsub.s32 %v3273, %v4131
        %v4133 = vrot.slane %v3765, %v4132
        %v4134 = vlaneseq
        %v4135 = vshrl.u32 %v4134, 7
        %v4136 = vsub.s32 %v3273, %v4135
        %v4137 = vrot.slane %v3768, %v4136
        %v4138 = vlaneseq
        %v4139 = vshrl.u32 %v4138, 7
        %v4140 = vsub.s32 %v3273, %v4139
        %v4141 = vrot.slane %v3771, %v4140
        %v4142 = vlaneseq
        %v4143 = vshrl.u32 %v4142, 7
        %v4144 = vsub.s32 %v3273, %v4143
        %v4145 = vrot.slane %v3774, %v4144
        %v4146 = vlaneseq
        %v4147 = vshrl.u32 %v4146, 7
        %v4148 = vsub.s32 %v3273, %v4147
        %v4149 = vrot.slane %v3777, %v4148
        %v4150 = vlaneseq
        %v4151 = vshrl.u32 %v4150, 7
        %v4152 = vsub.s32 %v3273, %v4151
        %v4153 = vrot.slane %v3780, %v4152
        %v4154 = vlaneseq
        %v4155 = vshrl.u32 %v4154, 7
        %v4156 = vsub.s32 %v3273, %v4155
        %v4157 = vrot.slane %v3783, %v4156
        %v4158 = vlaneseq
        %v4159 = vshrl.u32 %v4158, 7
        %v4160 = vsub.s32 %v3273, %v4159
        %v4161 = vrot.slane %v3786, %v4160
        %v4162 = vsel %vm3979, %v4137, %v4133
        %v4163 = vsel %vm3981, %v4141, %v4162
        %v4164 = vsel %vm3983, %v4145, %v4163
        %v4165 = vsel %vm3985, %v4149, %v4164
        %v4166 = vsel %vm3987, %v4153, %v4165
        %v4167 = vsel %vm3989, %v4157, %v4166
        %v4168 = vsel %vm3991, %v4161, %v4167
        %4170 = vmatprep.subr.bf16.mxu0 0
        %4171 = vmatpush1.bf16.xpose.msra.mxu0 %v3167
        %4172 = vmatprep.subr.bf16.mxu0 0
        %4173 = vmatpush1.bf16.xpose.msra.mxu0 0
        %4174 = vmatprep.subr.bf16.mxu0 0
        %4175 = vmatpush1.bf16.xpose.msra.mxu0 0
        %4176 = vmatprep.subr.bf16.mxu0 0
        %4177 = vmatpush1.bf16.xpose.msra.mxu0 0
        %4178 = vmatprep.subr.bf16.mxu0 0
        %4179 = vmatpush1.bf16.xpose.msra.mxu0 0
        %4180 = vmatprep.subr.bf16.mxu0 0
        %4181 = vmatpush1.bf16.xpose.msra.mxu0 0
        %4182 = vmatprep.subr.bf16.mxu0 0
        %4183 = vmatpush1.bf16.xpose.msra.mxu0 0
        %4184 = vmatprep.subr.bf16.mxu0 0
        %4185 = vmatpush1.bf16.xpose.msra.mxu0 0
        %4186 = vmatprep.subr.bf16.mxu0 0
        %4187 = vmatpush1.bf16.xpose.msra.mxu0 0
        %4188 = vmatprep.subr.bf16.mxu0 0
        %4189 = vmatpush1.bf16.xpose.msra.mxu0 0
        %4190 = vmatprep.subr.bf16.mxu0 0
        %4191 = vmatpush1.bf16.xpose.msra.mxu0 0
        %4192 = vmatprep.subr.bf16.mxu0 0
        %4193 = vmatpush1.bf16.xpose.msra.mxu0 0
        %4194 = vmatprep.subr.bf16.mxu0 0
        %4195 = vmatpush1.bf16.xpose.msra.mxu0 0
        %4196 = vmatprep.subr.bf16.mxu0 0
        %4197 = vmatpush1.bf16.xpose.msra.mxu0 0
        %4198 = vmatprep.subr.bf16.mxu0 0
        %4199 = vmatpush1.bf16.xpose.msra.mxu0 0
        %4200 = vmatprep.subr.bf16.mxu0 0
        %4201 = vmatpush1.bf16.xpose.msra.mxu0 0
        %4202 = vmatprep.mubr.bf16.mxu0 0
        %4203 = vmatmul.mubr.bf16.gmra.mrb[0].mxu0 %v2971
        %v4204 = vpop.f32.mrb[0].mxu0
        %v4205 = vadd.f32 %v4168, %v4204
        %v4206 = vpop.f32.mrb[0].mxu0
        %v4207 = vpop.f32.mrb[0].mxu0
        %v4208 = vpop.f32.mrb[0].mxu0
        %4209 = vdwg.mxu0
        %v4218 = vlaneseq
        %v4219 = vshrl.u32 %v4218, 7
        %v4220 = vsub.s32 %v3273, %v4219
        %v4221 = vrot.slane %v3789, %v4220
        %v4222 = vlaneseq
        %v4223 = vshrl.u32 %v4222, 7
        %v4224 = vsub.s32 %v3273, %v4223
        %v4225 = vrot.slane %v3792, %v4224
        %v4226 = vlaneseq
        %v4227 = vshrl.u32 %v4226, 7
        %v4228 = vsub.s32 %v3273, %v4227
        %v4229 = vrot.slane %v3795, %v4228
        %v4230 = vlaneseq
        %v4231 = vshrl.u32 %v4230, 7
        %v4232 = vsub.s32 %v3273, %v4231
        %v4233 = vrot.slane %v3798, %v4232
        %v4234 = vlaneseq
        %v4235 = vshrl.u32 %v4234, 7
        %v4236 = vsub.s32 %v3273, %v4235
        %v4237 = vrot.slane %v3801, %v4236
        %v4238 = vlaneseq
        %v4239 = vshrl.u32 %v4238, 7
        %v4240 = vsub.s32 %v3273, %v4239
        %v4241 = vrot.slane %v3804, %v4240
        %v4242 = vlaneseq
        %v4243 = vshrl.u32 %v4242, 7
        %v4244 = vsub.s32 %v3273, %v4243
        %v4245 = vrot.slane %v3807, %v4244
        %v4246 = vlaneseq
        %v4247 = vshrl.u32 %v4246, 7
        %v4248 = vsub.s32 %v3273, %v4247
        %v4249 = vrot.slane %v3810, %v4248
        %v4250 = vsel %vm3979, %v4225, %v4221
        %v4251 = vsel %vm3981, %v4229, %v4250
        %v4252 = vsel %vm3983, %v4233, %v4251
        %v4253 = vsel %vm3985, %v4237, %v4252
        %v4254 = vsel %vm3987, %v4241, %v4253
        %v4255 = vsel %vm3989, %v4245, %v4254
        %v4256 = vsel %vm3991, %v4249, %v4255
        %4258 = vmatprep.subr.bf16.mxu0 0
        %4259 = vmatpush1.bf16.xpose.msra.mxu0 %v3216
        %4260 = vmatprep.subr.bf16.mxu0 0
        %4261 = vmatpush1.bf16.xpose.msra.mxu0 0
        %4262 = vmatprep.subr.bf16.mxu0 0
        %4263 = vmatpush1.bf16.xpose.msra.mxu0 0
        %4264 = vmatprep.subr.bf16.mxu0 0
        %4265 = vmatpush1.bf16.xpose.msra.mxu0 0
        %4266 = vmatprep.subr.bf16.mxu0 0
        %4267 = vmatpush1.bf16.xpose.msra.mxu0 0
        %4268 = vmatprep.subr.bf16.mxu0 0
        %4269 = vmatpush1.bf16.xpose.msra.mxu0 0
        %4270 = vmatprep.subr.bf16.mxu0 0
        %4271 = vmatpush1.bf16.xpose.msra.mxu0 0
        %4272 = vmatprep.subr.bf16.mxu0 0
        %4273 = vmatpush1.bf16.xpose.msra.mxu0 0
        %4274 = vmatprep.subr.bf16.mxu0 0
        %4275 = vmatpush1.bf16.xpose.msra.mxu0 0
        %4276 = vmatprep.subr.bf16.mxu0 0
        %4277 = vmatpush1.bf16.xpose.msra.mxu0 0
        %4278 = vmatprep.subr.bf16.mxu0 0
        %4279 = vmatpush1.bf16.xpose.msra.mxu0 0
        %4280 = vmatprep.subr.bf16.mxu0 0
        %4281 = vmatpush1.bf16.xpose.msra.mxu0 0
        %4282 = vmatprep.subr.bf16.mxu0 0
        %4283 = vmatpush1.bf16.xpose.msra.mxu0 0
        %4284 = vmatprep.subr.bf16.mxu0 0
        %4285 = vmatpush1.bf16.xpose.msra.mxu0 0
        %4286 = vmatprep.subr.bf16.mxu0 0
        %4287 = vmatpush1.bf16.xpose.msra.mxu0 0
        %4288 = vmatprep.subr.bf16.mxu0 0
        %4289 = vmatpush1.bf16.xpose.msra.mxu0 0
        %4290 = vmatprep.mubr.bf16.mxu0 0
        %4291 = vmatmul.mubr.bf16.gmra.mrb[0].mxu0 %v3020
        %v4292 = vpop.f32.mrb[0].mxu0
        %v4293 = vadd.f32 %v4256, %v4292
        %v4294 = vpop.f32.mrb[0].mxu0
        %v4295 = vpop.f32.mrb[0].mxu0
        %v4296 = vpop.f32.mrb[0].mxu0
        %4297 = vdwg.mxu0
        %v4330 = vlaneseq
        %v4331 = vshrl.u32 %v4330, 7
        %v4332 = vsub.s32 %v3273, %v4331
        %v4333 = vrot.slane %v3845, %v4332
        %v4334 = vlaneseq
        %v4335 = vshrl.u32 %v4334, 7
        %v4336 = vsub.s32 %v3273, %v4335
        %v4337 = vrot.slane %v3848, %v4336
        %v4338 = vlaneseq
        %v4339 = vshrl.u32 %v4338, 7
        %v4340 = vsub.s32 %v3273, %v4339
        %v4341 = vrot.slane %v3851, %v4340
        %v4342 = vlaneseq
        %v4343 = vshrl.u32 %v4342, 7
        %v4344 = vsub.s32 %v3273, %v4343
        %v4345 = vrot.slane %v3854, %v4344
        %v4346 = vlaneseq
        %v4347 = vshrl.u32 %v4346, 7
        %v4348 = vsub.s32 %v3273, %v4347
        %v4349 = vrot.slane %v3857, %v4348
        %v4350 = vlaneseq
        %v4351 = vshrl.u32 %v4350, 7
        %v4352 = vsub.s32 %v3273, %v4351
        %v4353 = vrot.slane %v3860, %v4352
        %v4354 = vlaneseq
        %v4355 = vshrl.u32 %v4354, 7
        %v4356 = vsub.s32 %v3273, %v4355
        %v4357 = vrot.slane %v3863, %v4356
        %v4358 = vlaneseq
        %v4359 = vshrl.u32 %v4358, 7
        %v4360 = vsub.s32 %v3273, %v4359
        %v4361 = vrot.slane %v3866, %v4360
        %v4362 = vlaneseq
        %v4363 = vshrl.u32 %v4362, 7
        %v4364 = vsub.s32 %v3273, %v4363
        %v4365 = vrot.slane %v3869, %v4364
        %v4366 = vlaneseq
        %v4367 = vshrl.u32 %v4366, 7
        %v4368 = vsub.s32 %v3273, %v4367
        %v4369 = vrot.slane %v3872, %v4368
        %v4370 = vlaneseq
        %v4371 = vshrl.u32 %v4370, 7
        %v4372 = vsub.s32 %v3273, %v4371
        %v4373 = vrot.slane %v3875, %v4372
        %v4374 = vlaneseq
        %v4375 = vshrl.u32 %v4374, 7
        %v4376 = vsub.s32 %v3273, %v4375
        %v4377 = vrot.slane %v3878, %v4376
        %v4378 = vlaneseq
        %v4379 = vshrl.u32 %v4378, 7
        %v4380 = vsub.s32 %v3273, %v4379
        %v4381 = vrot.slane %v3881, %v4380
        %v4382 = vlaneseq
        %v4383 = vshrl.u32 %v4382, 7
        %v4384 = vsub.s32 %v3273, %v4383
        %v4385 = vrot.slane %v3884, %v4384
        %v4386 = vlaneseq
        %v4387 = vshrl.u32 %v4386, 7
        %v4388 = vsub.s32 %v3273, %v4387
        %v4389 = vrot.slane %v3887, %v4388
        %v4390 = vlaneseq
        %v4391 = vshrl.u32 %v4390, 7
        %v4392 = vsub.s32 %v3273, %v4391
        %v4393 = vrot.slane %v3890, %v4392
        %v4394 = vlaneseq
        %v4395 = vshrl.u32 %v4394, 7
        %v4396 = vsub.s32 %v3273, %v4395
        %v4397 = vrot.slane %v3893, %v4396
        %v4398 = vlaneseq
        %v4399 = vshrl.u32 %v4398, 7
        %v4400 = vsub.s32 %v3273, %v4399
        %v4401 = vrot.slane %v3896, %v4400
        %v4402 = vlaneseq
        %v4403 = vshrl.u32 %v4402, 7
        %v4404 = vsub.s32 %v3273, %v4403
        %v4405 = vrot.slane %v3899, %v4404
        %v4406 = vlaneseq
        %v4407 = vshrl.u32 %v4406, 7
        %v4408 = vsub.s32 %v3273, %v4407
        %v4409 = vrot.slane %v3902, %v4408
        %v4410 = vlaneseq
        %v4411 = vshrl.u32 %v4410, 7
        %v4412 = vsub.s32 %v3273, %v4411
        %v4413 = vrot.slane %v3905, %v4412
        %v4414 = vlaneseq
        %v4415 = vshrl.u32 %v4414, 7
        %v4416 = vsub.s32 %v3273, %v4415
        %v4417 = vrot.slane %v3908, %v4416
        %v4418 = vlaneseq
        %v4419 = vshrl.u32 %v4418, 7
        %v4420 = vsub.s32 %v3273, %v4419
        %v4421 = vrot.slane %v3911, %v4420
        %v4422 = vlaneseq
        %v4423 = vshrl.u32 %v4422, 7
        %v4424 = vsub.s32 %v3273, %v4423
        %v4425 = vrot.slane %v3914, %v4424
        %v4426 = vlaneseq
        %v4427 = vshrl.u32 %v4426, 7
        %v4428 = vsub.s32 %v3273, %v4427
        %v4429 = vrot.slane %v3917, %v4428
        %v4430 = vlaneseq
        %v4431 = vshrl.u32 %v4430, 7
        %v4432 = vsub.s32 %v3273, %v4431
        %v4433 = vrot.slane %v3920, %v4432
        %v4434 = vlaneseq
        %v4435 = vshrl.u32 %v4434, 7
        %v4436 = vsub.s32 %v3273, %v4435
        %v4437 = vrot.slane %v3923, %v4436
        %v4438 = vlaneseq
        %v4439 = vshrl.u32 %v4438, 7
        %v4440 = vsub.s32 %v3273, %v4439
        %v4441 = vrot.slane %v3926, %v4440
        %v4442 = vlaneseq
        %v4443 = vshrl.u32 %v4442, 7
        %v4444 = vsub.s32 %v3273, %v4443
        %v4445 = vrot.slane %v3929, %v4444
        %v4446 = vlaneseq
        %v4447 = vshrl.u32 %v4446, 7
        %v4448 = vsub.s32 %v3273, %v4447
        %v4449 = vrot.slane %v3932, %v4448
        %v4450 = vlaneseq
        %v4451 = vshrl.u32 %v4450, 7
        %v4452 = vsub.s32 %v3273, %v4451
        %v4453 = vrot.slane %v3935, %v4452
        %v4454 = vlaneseq
        %v4455 = vshrl.u32 %v4454, 7
        %v4456 = vsub.s32 %v3273, %v4455
        %v4457 = vrot.slane %v3938, %v4456
        %v4458 = vsel %vm3979, %v4337, %v4333
        %v4459 = vsel %vm3981, %v4341, %v4458
        %v4460 = vsel %vm3983, %v4345, %v4459
        %v4461 = vsel %vm3985, %v4349, %v4460
        %v4462 = vsel %vm3987, %v4353, %v4461
        %v4463 = vsel %vm3989, %v4357, %v4462
        %v4464 = vsel %vm3991, %v4361, %v4463
        %v4465 = vsel %vm3979, %v4369, %v4365
        %v4466 = vsel %vm3981, %v4373, %v4465
        %v4467 = vsel %vm3983, %v4377, %v4466
        %v4468 = vsel %vm3985, %v4381, %v4467
        %v4469 = vsel %vm3987, %v4385, %v4468
        %v4470 = vsel %vm3989, %v4389, %v4469
        %v4471 = vsel %vm3991, %v4393, %v4470
        %v4472 = vsel %vm3979, %v4401, %v4397
        %v4473 = vsel %vm3981, %v4405, %v4472
        %v4474 = vsel %vm3983, %v4409, %v4473
        %v4475 = vsel %vm3985, %v4413, %v4474
        %v4476 = vsel %vm3987, %v4417, %v4475
        %v4477 = vsel %vm3989, %v4421, %v4476
        %v4478 = vsel %vm3991, %v4425, %v4477
        %v4479 = vsel %vm3979, %v4433, %v4429
        %v4480 = vsel %vm3981, %v4437, %v4479
        %v4481 = vsel %vm3983, %v4441, %v4480
        %v4482 = vsel %vm3985, %v4445, %v4481
        %v4483 = vsel %vm3987, %v4449, %v4482
        %v4484 = vsel %vm3989, %v4453, %v4483
        %v4485 = vsel %vm3991, %v4457, %v4484
        %v4490 = vadd.f32 %v4029, %v4464
        %v4491 = vadd.f32 %v4117, %v4471
        %v4492 = vadd.f32 %v4205, %v4478
        %v4493 = vadd.f32 %v4293, %v4485
        %v4494 = vld [vmem:[%s667] sm:$0x1]
        %v4495 = vmul.f32 %v4494, 1e+30
        %v4497 = vlaneseq
        %v4498 = vshrl.u32 %v4497, 7
        %v4499 = vsub.s32 0, %v4498
        %v4500 = vrot.slane %v4495, %v4499
        %v4502 = vsub.f32 %v4490, %v4500
        %v4503 = vsub.f32 %v4491, %v4500
        %v4504 = vsub.f32 %v4492, %v4500
        %v4505 = vsub.f32 %v4493, %v4500
        %vm4506 = vcmask 64512
        %v4507 = vsel %vm4506, %v4502, -inf
        %4508 = vmax.xlane.f32.xlu0 %v4507
        %v4509 = vpop.xlane.xlu0 %4508
        %v4510 = vsel %vm4506, %v4503, -inf
        %4511 = vmax.xlane.f32.xlu0 %v4510
        %v4512 = vpop.xlane.xlu0 %4511
        %v4513 = vsel %vm4506, %v4504, -inf
        %4514 = vmax.xlane.f32.xlu0 %v4513
        %v4515 = vpop.xlane.xlu0 %4514
        %v4516 = vsel %vm4506, %v4505, -inf
        %4517 = vmax.xlane.f32.xlu0 %v4516
        %v4518 = vpop.xlane.xlu0 %4517
        %v4519 = vsub.f32 %v4502, %v4509
        %v4520 = vsub.f32 %v4503, %v4512
        %v4521 = vsub.f32 %v4504, %v4515
        %v4522 = vsub.f32 %v4505, %v4518
        %v4523 = vmul.f32 %v4519, 1.442695
        %v4524 = vpow.pop %v4523
        %v4525 = vmul.f32 %v4520, 1.442695
        %v4526 = vpow.pop %v4525
        %v4527 = vmul.f32 %v4521, 1.442695
        %v4528 = vpow.pop %v4527
        %v4529 = vmul.f32 %v4522, 1.442695
        %v4530 = vpow.pop %v4529
        %v4531 = vsel %vm4506, %v4524, 0.0
        %4532 = vadd.xlane.f32.xlu0 %v4531
        %v4533 = vpop.xlane.xlu0 %4532
        %v4534 = vsel %vm4506, %v4526, 0.0
        %4535 = vadd.xlane.f32.xlu0 %v4534
        %v4536 = vpop.xlane.xlu0 %4535
        %v4537 = vsel %vm4506, %v4528, 0.0
        %4538 = vadd.xlane.f32.xlu0 %v4537
        %v4539 = vpop.xlane.xlu0 %4538
        %v4540 = vsel %vm4506, %v4530, 0.0
        %4541 = vadd.xlane.f32.xlu0 %v4540
        %v4542 = vpop.xlane.xlu0 %4541
        %v4543 = vrcp.pop %v4533
        %v4544 = vrcp.pop %v4536
        %v4545 = vrcp.pop %v4539
        %v4546 = vrcp.pop %v4542
        %v4547 = vmul.f32 %v4524, %v4543
        %v4548 = vmul.f32 %v4526, %v4544
        %v4549 = vmul.f32 %v4528, %v4545
        %v4550 = vmul.f32 %v4530, %v4546
        %v4551 = vsub.f32 1.0, %v4494
        %v4553 = vlaneseq
        %v4554 = vshrl.u32 %v4553, 7
        %v4555 = vsub.s32 0, %v4554
        %v4556 = vrot.slane %v4551, %v4555
        %v4558 = vmul.f32 %v4547, %v4556
        %v4559 = vmul.f32 %v4548, %v4556
        %v4560 = vmul.f32 %v4549, %v4556
        %v4561 = vmul.f32 %v4550, %v4556
        %v4562 = vpack.c.bf16 %v4558, %v4558
        %v4563 = vpack.c.bf16 %v4559, %v4559
        %v4564 = vpack.c.bf16 %v4560, %v4560
        %v4565 = vpack.c.bf16 %v4561, %v4561
        %v4567 = vsel %vm4506, %v4562, 0
        %vm4569 = vcmask 1043456
        %v4571 = vsel %vm4569, %v1683, 0
        %4573 = vmatprep.subr.bf16.mxu0 0
        %4574 = vmatpush1.bf16.msra.mxu0 %v4571
        %4575 = vmatprep.subr.bf16.mxu0 0
        %4576 = vmatpush1.bf16.msra.mxu0 0
        %4577 = vmatprep.subr.bf16.mxu0 0
        %4578 = vmatpush1.bf16.msra.mxu0 0
        %4579 = vmatprep.subr.bf16.mxu0 0
        %4580 = vmatpush1.bf16.msra.mxu0 0
        %4581 = vmatprep.subr.bf16.mxu0 0
        %4582 = vmatpush1.bf16.msra.mxu0 0
        %4583 = vmatprep.subr.bf16.mxu0 0
        %4584 = vmatpush1.bf16.msra.mxu0 0
        %4585 = vmatprep.subr.bf16.mxu0 0
        %4586 = vmatpush1.bf16.msra.mxu0 0
        %4587 = vmatprep.subr.bf16.mxu0 0
        %4588 = vmatpush1.bf16.msra.mxu0 0
        %4589 = vmatprep.subr.bf16.mxu0 0
        %4590 = vmatpush1.bf16.msra.mxu0 0
        %4591 = vmatprep.subr.bf16.mxu0 0
        %4592 = vmatpush1.bf16.msra.mxu0 0
        %4593 = vmatprep.subr.bf16.mxu0 0
        %4594 = vmatpush1.bf16.msra.mxu0 0
        %4595 = vmatprep.subr.bf16.mxu0 0
        %4596 = vmatpush1.bf16.msra.mxu0 0
        %4597 = vmatprep.subr.bf16.mxu0 0
        %4598 = vmatpush1.bf16.msra.mxu0 0
        %4599 = vmatprep.subr.bf16.mxu0 0
        %4600 = vmatpush1.bf16.msra.mxu0 0
        %4601 = vmatprep.subr.bf16.mxu0 0
        %4602 = vmatpush1.bf16.msra.mxu0 0
        %4603 = vmatprep.subr.bf16.mxu0 0
        %4604 = vmatpush1.bf16.msra.mxu0 0
        %4605 = vmatprep.mubr.bf16.mxu0 0
        %4606 = vmatmul.mubr.bf16.gmra.mrb[0].mxu0 %v4567
        %v4607 = vpop.f32.mrb[0].mxu0
        %v4608 = vadd.f32 0.0, %v4607
        %v4609 = vpop.f32.mrb[0].mxu0
        %v4610 = vpop.f32.mrb[0].mxu0
        %v4611 = vpop.f32.mrb[0].mxu0
        %4612 = vdwg.mxu0
        %v4614 = vsel %vm4506, %v4563, 0
        %v4617 = vsel %vm4569, %v1684, 0
        %4619 = vmatprep.subr.bf16.mxu0 0
        %4620 = vmatpush1.bf16.msra.mxu0 %v4617
        %4621 = vmatprep.subr.bf16.mxu0 0
        %4622 = vmatpush1.bf16.msra.mxu0 0
        %4623 = vmatprep.subr.bf16.mxu0 0
        %4624 = vmatpush1.bf16.msra.mxu0 0
        %4625 = vmatprep.subr.bf16.mxu0 0
        %4626 = vmatpush1.bf16.msra.mxu0 0
        %4627 = vmatprep.subr.bf16.mxu0 0
        %4628 = vmatpush1.bf16.msra.mxu0 0
        %4629 = vmatprep.subr.bf16.mxu0 0
        %4630 = vmatpush1.bf16.msra.mxu0 0
        %4631 = vmatprep.subr.bf16.mxu0 0
        %4632 = vmatpush1.bf16.msra.mxu0 0
        %4633 = vmatprep.subr.bf16.mxu0 0
        %4634 = vmatpush1.bf16.msra.mxu0 0
        %4635 = vmatprep.subr.bf16.mxu0 0
        %4636 = vmatpush1.bf16.msra.mxu0 0
        %4637 = vmatprep.subr.bf16.mxu0 0
        %4638 = vmatpush1.bf16.msra.mxu0 0
        %4639 = vmatprep.subr.bf16.mxu0 0
        %4640 = vmatpush1.bf16.msra.mxu0 0
        %4641 = vmatprep.subr.bf16.mxu0 0
        %4642 = vmatpush1.bf16.msra.mxu0 0
        %4643 = vmatprep.subr.bf16.mxu0 0
        %4644 = vmatpush1.bf16.msra.mxu0 0
        %4645 = vmatprep.subr.bf16.mxu0 0
        %4646 = vmatpush1.bf16.msra.mxu0 0
        %4647 = vmatprep.subr.bf16.mxu0 0
        %4648 = vmatpush1.bf16.msra.mxu0 0
        %4649 = vmatprep.subr.bf16.mxu0 0
        %4650 = vmatpush1.bf16.msra.mxu0 0
        %4651 = vmatprep.mubr.bf16.mxu0 0
        %4652 = vmatmul.mubr.bf16.gmra.mrb[0].mxu0 %v4614
        %v4653 = vpop.f32.mrb[0].mxu0
        %v4654 = vadd.f32 0.0, %v4653
        %v4655 = vpop.f32.mrb[0].mxu0
        %v4656 = vpop.f32.mrb[0].mxu0
        %v4657 = vpop.f32.mrb[0].mxu0
        %4658 = vdwg.mxu0
        %v4660 = vsel %vm4506, %v4564, 0
        %v4663 = vsel %vm4569, %v1685, 0
        %4665 = vmatprep.subr.bf16.mxu0 0
        %4666 = vmatpush1.bf16.msra.mxu0 %v4663
        %4667 = vmatprep.subr.bf16.mxu0 0
        %4668 = vmatpush1.bf16.msra.mxu0 0
        %4669 = vmatprep.subr.bf16.mxu0 0
        %4670 = vmatpush1.bf16.msra.mxu0 0
        %4671 = vmatprep.subr.bf16.mxu0 0
        %4672 = vmatpush1.bf16.msra.mxu0 0
        %4673 = vmatprep.subr.bf16.mxu0 0
        %4674 = vmatpush1.bf16.msra.mxu0 0
        %4675 = vmatprep.subr.bf16.mxu0 0
        %4676 = vmatpush1.bf16.msra.mxu0 0
        %4677 = vmatprep.subr.bf16.mxu0 0
        %4678 = vmatpush1.bf16.msra.mxu0 0
        %4679 = vmatprep.subr.bf16.mxu0 0
        %4680 = vmatpush1.bf16.msra.mxu0 0
        %4681 = vmatprep.subr.bf16.mxu0 0
        %4682 = vmatpush1.bf16.msra.mxu0 0
        %4683 = vmatprep.subr.bf16.mxu0 0
        %4684 = vmatpush1.bf16.msra.mxu0 0
        %4685 = vmatprep.subr.bf16.mxu0 0
        %4686 = vmatpush1.bf16.msra.mxu0 0
        %4687 = vmatprep.subr.bf16.mxu0 0
        %4688 = vmatpush1.bf16.msra.mxu0 0
        %4689 = vmatprep.subr.bf16.mxu0 0
        %4690 = vmatpush1.bf16.msra.mxu0 0
        %4691 = vmatprep.subr.bf16.mxu0 0
        %4692 = vmatpush1.bf16.msra.mxu0 0
        %4693 = vmatprep.subr.bf16.mxu0 0
        %4694 = vmatpush1.bf16.msra.mxu0 0
        %4695 = vmatprep.subr.bf16.mxu0 0
        %4696 = vmatpush1.bf16.msra.mxu0 0
        %4697 = vmatprep.mubr.bf16.mxu0 0
        %4698 = vmatmul.mubr.bf16.gmra.mrb[0].mxu0 %v4660
        %v4699 = vpop.f32.mrb[0].mxu0
        %v4700 = vadd.f32 0.0, %v4699
        %v4701 = vpop.f32.mrb[0].mxu0
        %v4702 = vpop.f32.mrb[0].mxu0
        %v4703 = vpop.f32.mrb[0].mxu0
        %4704 = vdwg.mxu0
        %v4706 = vsel %vm4506, %v4565, 0
        %v4709 = vsel %vm4569, %v1686, 0
        %4711 = vmatprep.subr.bf16.mxu0 0
        %4712 = vmatpush1.bf16.msra.mxu0 %v4709
        %4713 = vmatprep.subr.bf16.mxu0 0
        %4714 = vmatpush1.bf16.msra.mxu0 0
        %4715 = vmatprep.subr.bf16.mxu0 0
        %4716 = vmatpush1.bf16.msra.mxu0 0
        %4717 = vmatprep.subr.bf16.mxu0 0
        %4718 = vmatpush1.bf16.msra.mxu0 0
        %4719 = vmatprep.subr.bf16.mxu0 0
        %4720 = vmatpush1.bf16.msra.mxu0 0
        %4721 = vmatprep.subr.bf16.mxu0 0
        %4722 = vmatpush1.bf16.msra.mxu0 0
        %4723 = vmatprep.subr.bf16.mxu0 0
        %4724 = vmatpush1.bf16.msra.mxu0 0
        %4725 = vmatprep.subr.bf16.mxu0 0
        %4726 = vmatpush1.bf16.msra.mxu0 0
        %4727 = vmatprep.subr.bf16.mxu0 0
        %4728 = vmatpush1.bf16.msra.mxu0 0
        %4729 = vmatprep.subr.bf16.mxu0 0
        %4730 = vmatpush1.bf16.msra.mxu0 0
        %4731 = vmatprep.subr.bf16.mxu0 0
        %4732 = vmatpush1.bf16.msra.mxu0 0
        %4733 = vmatprep.subr.bf16.mxu0 0
        %4734 = vmatpush1.bf16.msra.mxu0 0
        %4735 = vmatprep.subr.bf16.mxu0 0
        %4736 = vmatpush1.bf16.msra.mxu0 0
        %4737 = vmatprep.subr.bf16.mxu0 0
        %4738 = vmatpush1.bf16.msra.mxu0 0
        %4739 = vmatprep.subr.bf16.mxu0 0
        %4740 = vmatpush1.bf16.msra.mxu0 0
        %4741 = vmatprep.subr.bf16.mxu0 0
        %4742 = vmatpush1.bf16.msra.mxu0 0
        %4743 = vmatprep.mubr.bf16.mxu0 0
        %4744 = vmatmul.mubr.bf16.gmra.mrb[0].mxu0 %v4706
        %v4745 = vpop.f32.mrb[0].mxu0
        %v4746 = vadd.f32 0.0, %v4745
        %v4747 = vpop.f32.mrb[0].mxu0
        %v4748 = vpop.f32.mrb[0].mxu0
        %v4749 = vpop.f32.mrb[0].mxu0
        %4750 = vdwg.mxu0
        %v4751 = vcombine.low %v4608, %v4700
        %v4752 = vcombine.high %v4608, %v4700
        %v4754 = vunpack.c.l.s4 1983009808
        %v4755 = vunpack.c.0.s8 %v4754
        %v4756 = vlaneseq
        %v4757 = vshrl.u32 %v4756, 7
        %v4758 = vsub.s32 %v4755, %v4757
        %v4759 = vrot.slane %v4751, %v4758
        %v4761 = vunpack.c.l.s4 1983009808
        %v4762 = vunpack.c.0.s8 %v4761
        %v4763 = vlaneseq
        %v4764 = vshrl.u32 %v4763, 7
        %v4765 = vsub.s32 %v4762, %v4764
        %v4766 = vrot.slane %v4752, %v4765
        %v4767 = vcombine.low %v4654, %v4746
        %v4768 = vcombine.high %v4654, %v4746
        %v4770 = vunpack.c.l.s4 1983009808
        %v4771 = vunpack.c.0.s8 %v4770
        %v4772 = vlaneseq
        %v4773 = vshrl.u32 %v4772, 7
        %v4774 = vsub.s32 %v4771, %v4773
        %v4775 = vrot.slane %v4767, %v4774
        %v4777 = vunpack.c.l.s4 1983009808
        %v4778 = vunpack.c.0.s8 %v4777
        %v4779 = vlaneseq
        %v4780 = vshrl.u32 %v4779, 7
        %v4781 = vsub.s32 %v4778, %v4780
        %v4782 = vrot.slane %v4768, %v4781
        %v4783 = vcombine.low %v4759, %v4775
        %v4784 = vcombine.high %v4759, %v4775
        %v4786 = vunpack.c.l.s4 1934713408
        %v4787 = vunpack.c.0.s8 %v4786
        %v4788 = vlaneseq
        %v4789 = vshrl.u32 %v4788, 7
        %v4790 = vsub.s32 %v4787, %v4789
        %v4791 = vrot.slane %v4783, %v4790
        %v4793 = vunpack.c.l.s4 1934713408
        %v4794 = vunpack.c.0.s8 %v4793
        %v4795 = vlaneseq
        %v4796 = vshrl.u32 %v4795, 7
        %v4797 = vsub.s32 %v4794, %v4796
        %v4798 = vrot.slane %v4784, %v4797
        %v4799 = vcombine.low %v4766, %v4782
        %v4800 = vcombine.high %v4766, %v4782
        %v4802 = vunpack.c.l.s4 1934713408
        %v4803 = vunpack.c.0.s8 %v4802
        %v4804 = vlaneseq
        %v4805 = vshrl.u32 %v4804, 7
        %v4806 = vsub.s32 %v4803, %v4805
        %v4807 = vrot.slane %v4799, %v4806
        %v4809 = vunpack.c.l.s4 1934713408
        %v4810 = vunpack.c.0.s8 %v4809
        %v4811 = vlaneseq
        %v4812 = vshrl.u32 %v4811, 7
        %v4813 = vsub.s32 %v4810, %v4812
        %v4814 = vrot.slane %v4800, %v4813
        %v4815 = vcombine.high %v4791, 0.0
        %v4816 = vcombine.high %v4798, 0.0
        %v4817 = vcombine.high %v4807, 0.0
        %v4818 = vcombine.high %v4814, 0.0
        %v4819 = vcombine.low %v4791, %v4798
        %v4821 = vunpack.c.l.s4 1983009808
        %v4822 = vunpack.c.0.s8 %v4821
        %v4823 = vlaneseq
        %v4824 = vshrl.u32 %v4823, 7
        %v4825 = vsub.s32 %v4822, %v4824
        %v4826 = vrot.slane %v4819, %v4825
        %v4827 = vcombine.low %v4815, %v4816
        %v4829 = vunpack.c.l.s4 1983009808
        %v4830 = vunpack.c.0.s8 %v4829
        %v4831 = vlaneseq
        %v4832 = vshrl.u32 %v4831, 7
        %v4833 = vsub.s32 %v4830, %v4832
        %v4834 = vrot.slane %v4827, %v4833
        %v4835 = vcombine.low %v4807, %v4814
        %v4837 = vunpack.c.l.s4 1983009808
        %v4838 = vunpack.c.0.s8 %v4837
        %v4839 = vlaneseq
        %v4840 = vshrl.u32 %v4839, 7
        %v4841 = vsub.s32 %v4838, %v4840
        %v4842 = vrot.slane %v4835, %v4841
        %v4843 = vcombine.low %v4817, %v4818
        %v4845 = vunpack.c.l.s4 1983009808
        %v4846 = vunpack.c.0.s8 %v4845
        %v4847 = vlaneseq
        %v4848 = vshrl.u32 %v4847, 7
        %v4849 = vsub.s32 %v4846, %v4848
        %v4850 = vrot.slane %v4843, %v4849
        %v4851 = vcombine.low %v4826, %v4834
        %v4852 = vcombine.high %v4826, %v4834
        %v4854 = vunpack.c.l.s4 1934713408
        %v4855 = vunpack.c.0.s8 %v4854
        %v4856 = vlaneseq
        %v4857 = vshrl.u32 %v4856, 7
        %v4858 = vsub.s32 %v4855, %v4857
        %v4859 = vrot.slane %v4851, %v4858
        %v4861 = vunpack.c.l.s4 1934713408
        %v4862 = vunpack.c.0.s8 %v4861
        %v4863 = vlaneseq
        %v4864 = vshrl.u32 %v4863, 7
        %v4865 = vsub.s32 %v4862, %v4864
        %v4866 = vrot.slane %v4852, %v4865
        %v4867 = vcombine.low %v4842, %v4850
        %v4868 = vcombine.high %v4842, %v4850
        %v4870 = vunpack.c.l.s4 1934713408
        %v4871 = vunpack.c.0.s8 %v4870
        %v4872 = vlaneseq
        %v4873 = vshrl.u32 %v4872, 7
        %v4874 = vsub.s32 %v4871, %v4873
        %v4875 = vrot.slane %v4867, %v4874
        %v4877 = vunpack.c.l.s4 1934713408
        %v4878 = vunpack.c.0.s8 %v4877
        %v4879 = vlaneseq
        %v4880 = vshrl.u32 %v4879, 7
        %v4881 = vsub.s32 %v4878, %v4880
        %v4882 = vrot.slane %v4868, %v4881
        %v4883 = vcombine.low %v4859, %v4875
        %v4884 = vcombine.high %v4859, %v4875
        %v4885 = vcombine.low %v4866, %v4882
        %v4886 = vcombine.high %v4866, %v4882
        %4888 = vrot.lane.b32.xlu0 %v4884, 32
        %v4889 = vpop.permute.xlu0 %4888
        %4892 = vrot.lane.b32.xlu0 %v4885, 64
        %v4893 = vpop.permute.xlu0 %4892
        %4896 = vrot.lane.b32.xlu0 %v4886, 96
        %v4897 = vpop.permute.xlu0 %4896
        %v4899 = vsel %vm2871, %v4883, %v4889
        %vm4900 = vcmask 523264
        %v4901 = vsel %vm4900, %v4899, %v4893
        %vm4902 = vcmask 785408
        %v4903 = vsel %vm4902, %v4901, %v4897
        %v4904 = vpack.c.bf16 %v4903, %v4903
        %v4905 = vld [vmem:[#allocation17] sm:$0xf]
        %v4906 = vld [vmem:[#allocation17 + $0x4] sm:$0xf]
        %v4907 = vld [vmem:[#allocation17 + $0x8] sm:$0xf]
        %v4908 = vld [vmem:[#allocation17 + $0xc] sm:$0xf]
        %v4909 = vld [vmem:[#allocation17 + $0x10] sm:$0xf]
        %v4910 = vld [vmem:[#allocation17 + $0x14] sm:$0xf]
        %v4911 = vld [vmem:[#allocation17 + $0x18] sm:$0xf]
        %v4912 = vld [vmem:[#allocation17 + $0x1c] sm:$0xf]
        %v4913 = vld [vmem:[#allocation17 + $0x20] sm:$0xf]
        %v4914 = vld [vmem:[#allocation17 + $0x24] sm:$0xf]
        %v4915 = vld [vmem:[#allocation17 + $0x28] sm:$0xf]
        %v4916 = vld [vmem:[#allocation17 + $0x2c] sm:$0xf]
        %v4917 = vld [vmem:[#allocation17 + $0x30] sm:$0xf]
        %v4918 = vld [vmem:[#allocation17 + $0x34] sm:$0xf]
        %v4919 = vld [vmem:[#allocation17 + $0x38] sm:$0xf]
        %v4920 = vld [vmem:[#allocation17 + $0x3c] sm:$0xf]
        %v4921 = vld [vmem:[#allocation19] sm:$0x1]
        %v4923 = vlaneseq
        %v4924 = vshrl.u32 %v4923, 7
        %v4925 = vsub.s32 0, %v4924
        %v4926 = vrot.slane %v4921, %v4925
        %v4944 = vunpack.c.l.b16 %v4905
        %v4945 = vunpack.c.l.b16 %v4906
        %v4946 = vunpack.c.l.b16 %v4907
        %v4947 = vunpack.c.l.b16 %v4908
        %v4948 = vunpack.c.l.b16 %v4909
        %v4949 = vunpack.c.l.b16 %v4910
        %v4950 = vunpack.c.l.b16 %v4911
        %v4951 = vunpack.c.l.b16 %v4912
        %v4952 = vunpack.c.l.b16 %v4913
        %v4953 = vunpack.c.l.b16 %v4914
        %v4954 = vunpack.c.l.b16 %v4915
        %v4955 = vunpack.c.l.b16 %v4916
        %v4956 = vunpack.c.l.b16 %v4917
        %v4957 = vunpack.c.l.b16 %v4918
        %v4958 = vunpack.c.l.b16 %v4919
        %v4959 = vunpack.c.l.b16 %v4920
        %v4960 = vpack.c.b16 %v4945, %v4944
        %v4961 = vpack.c.b16 %v4947, %v4946
        %v4962 = vpack.c.b16 %v4949, %v4948
        %v4963 = vpack.c.b16 %v4951, %v4950
        %v4964 = vpack.c.b16 %v4953, %v4952
        %v4965 = vpack.c.b16 %v4955, %v4954
        %v4966 = vpack.c.b16 %v4957, %v4956
        %v4967 = vpack.c.b16 %v4959, %v4958
        %4976 = vmatprep.subr.bf16.mxu0 0
        %4977 = vmatpush1.bf16.msra.mxu0 %v4960
        %4978 = vmatprep.subr.bf16.mxu0 0
        %4979 = vmatpush1.bf16.msra.mxu0 %v4961
        %4980 = vmatprep.subr.bf16.mxu0 0
        %4981 = vmatpush1.bf16.msra.mxu0 %v4962
        %4982 = vmatprep.subr.bf16.mxu0 0
        %4983 = vmatpush1.bf16.msra.mxu0 %v4963
        %4984 = vmatprep.subr.bf16.mxu0 0
        %4985 = vmatpush1.bf16.msra.mxu0 %v4964
        %4986 = vmatprep.subr.bf16.mxu0 0
        %4987 = vmatpush1.bf16.msra.mxu0 %v4965
        %4988 = vmatprep.subr.bf16.mxu0 0
        %4989 = vmatpush1.bf16.msra.mxu0 %v4966
        %4990 = vmatprep.subr.bf16.mxu0 0
        %4991 = vmatpush1.bf16.msra.mxu0 %v4967
        %4992 = vmatprep.subr.bf16.mxu0 0
        %4993 = vmatpush1.bf16.msra.mxu0 0
        %4994 = vmatprep.subr.bf16.mxu0 0
        %4995 = vmatpush1.bf16.msra.mxu0 0
        %4996 = vmatprep.subr.bf16.mxu0 0
        %4997 = vmatpush1.bf16.msra.mxu0 0
        %4998 = vmatprep.subr.bf16.mxu0 0
        %4999 = vmatpush1.bf16.msra.mxu0 0
        %5000 = vmatprep.subr.bf16.mxu0 0
        %5001 = vmatpush1.bf16.msra.mxu0 0
        %5002 = vmatprep.subr.bf16.mxu0 0
        %5003 = vmatpush1.bf16.msra.mxu0 0
        %5004 = vmatprep.subr.bf16.mxu0 0
        %5005 = vmatpush1.bf16.msra.mxu0 0
        %5006 = vmatprep.subr.bf16.mxu0 0
        %5007 = vmatpush1.bf16.msra.mxu0 0
        %5008 = vmatprep.mubr.bf16.mxu0 0
        %5009 = vmatmul.mubr.bf16.gmra.mrb[0].mxu0 %v4904
        %v5010 = vpop.f32.mrb[0].mxu0
        %v5011 = vadd.f32 %v4926, %v5010
        %v5012 = vpop.f32.mrb[0].mxu0
        %v5013 = vpop.f32.mrb[0].mxu0
        %v5014 = vpop.f32.mrb[0].mxu0
        %5015 = vdwg.mxu0
        %5016 = vadd.xlane.f32.xlu0 %v5011
        %v5017 = vpop.xlane.xlu0 %5016
        %v5018 = vmul.f32 %v5017, %v778
        %v5019 = vsub.f32 %v5011, %v5018
        %v5020 = vmul.f32 %v5019, %v5019
        %5021 = vadd.xlane.f32.xlu0 %v5020
        %v5022 = vpop.xlane.xlu0 %5021
        %v5023 = vmul.f32 %v5022, %v778
        %v5024 = vadd.f32 %v5023, 1e-07
        %v5025 = vrsqrt.pop %v5024
        %v5026 = vmul.f32 %v5019, %v5025
        %v5027 = vld [vmem:[#allocation20] sm:$0x1]
        %v5029 = vlaneseq
        %v5030 = vshrl.u32 %v5029, 7
        %v5031 = vsub.s32 0, %v5030
        %v5032 = vrot.slane %v5027, %v5031
        %v5034 = vmul.f32 %v5026, %v5032
        %v5035 = vld [vmem:[#allocation22] sm:$0x1]
        %v5037 = vlaneseq
        %v5038 = vshrl.u32 %v5037, 7
        %v5039 = vsub.s32 0, %v5038
        %v5040 = vrot.slane %v5035, %v5039
        %v5042 = vadd.f32 %v5034, %v5040
        %v5043 = vadd.f32 %v775, %v5042
        %5044 = vadd.xlane.f32.xlu0 %v5043
        %v5045 = vpop.xlane.xlu0 %5044
        %v5046 = vmul.f32 %v5045, %v778
        %v5047 = vsub.f32 %v5043, %v5046
        %v5048 = vmul.f32 %v5047, %v5047
        %5049 = vadd.xlane.f32.xlu0 %v5048
        %v5050 = vpop.xlane.xlu0 %5049
        %v5051 = vmul.f32 %v5050, %v778
        %v5052 = vadd.f32 %v5051, 1e-07
        %v5053 = vrsqrt.pop %v5052
        %v5054 = vmul.f32 %v5047, %v5053
        %v5055 = vpack.c.bf16 %v5054, %v5054
        %v5056 = vld [vmem:[#allocation23] sm:$0xff]
        %v5057 = vld [vmem:[#allocation23 + $0x8] sm:$0xff]
        %v5058 = vld [vmem:[#allocation23 + $0x10] sm:$0xff]
        %v5059 = vld [vmem:[#allocation23 + $0x18] sm:$0xff]
        %v5060 = vld [vmem:[#allocation23 + $0x20] sm:$0xff]
        %v5061 = vld [vmem:[#allocation23 + $0x28] sm:$0xff]
        %v5062 = vld [vmem:[#allocation23 + $0x30] sm:$0xff]
        %v5063 = vld [vmem:[#allocation23 + $0x38] sm:$0xff]
        %v5064 = vld [vmem:[#allocation23 + $0x40] sm:$0xff]
        %v5065 = vld [vmem:[#allocation23 + $0x48] sm:$0xff]
        %v5066 = vld [vmem:[#allocation23 + $0x50] sm:$0xff]
        %v5067 = vld [vmem:[#allocation23 + $0x58] sm:$0xff]
        %v5068 = vld [vmem:[#allocation23 + $0x60] sm:$0xff]
        %v5069 = vld [vmem:[#allocation23 + $0x68] sm:$0xff]
        %v5070 = vld [vmem:[#allocation23 + $0x70] sm:$0xff]
        %v5071 = vld [vmem:[#allocation23 + $0x78] sm:$0xff]
        %v5088 = vunpack.c.l.b16 %v5056
        %v5089 = vunpack.c.h.b16 %v5056
        %v5090 = vunpack.c.l.b16 %v5057
        %v5091 = vunpack.c.h.b16 %v5057
        %v5092 = vunpack.c.l.b16 %v5058
        %v5093 = vunpack.c.h.b16 %v5058
        %v5094 = vunpack.c.l.b16 %v5059
        %v5095 = vunpack.c.h.b16 %v5059
        %v5096 = vunpack.c.l.b16 %v5060
        %v5097 = vunpack.c.h.b16 %v5060
        %v5098 = vunpack.c.l.b16 %v5061
        %v5099 = vunpack.c.h.b16 %v5061
        %v5100 = vunpack.c.l.b16 %v5062
        %v5101 = vunpack.c.h.b16 %v5062
        %v5102 = vunpack.c.l.b16 %v5063
        %v5103 = vunpack.c.h.b16 %v5063
        %v5104 = vunpack.c.l.b16 %v5064
        %v5105 = vunpack.c.h.b16 %v5064
        %v5106 = vunpack.c.l.b16 %v5065
        %v5107 = vunpack.c.h.b16 %v5065
        %v5108 = vunpack.c.l.b16 %v5066
        %v5109 = vunpack.c.h.b16 %v5066
        %v5110 = vunpack.c.l.b16 %v5067
        %v5111 = vunpack.c.h.b16 %v5067
        %v5112 = vunpack.c.l.b16 %v5068
        %v5113 = vunpack.c.h.b16 %v5068
        %v5114 = vunpack.c.l.b16 %v5069
        %v5115 = vunpack.c.h.b16 %v5069
        %v5116 = vunpack.c.l.b16 %v5070
        %v5117 = vunpack.c.h.b16 %v5070
        %v5118 = vunpack.c.l.b16 %v5071
        %v5119 = vunpack.c.h.b16 %v5071
        %v5120 = vpack.c.b16 %v5090, %v5088
        %v5121 = vpack.c.b16 %v5091, %v5089
        %v5122 = vpack.c.b16 %v5094, %v5092
        %v5123 = vpack.c.b16 %v5095, %v5093
        %v5124 = vpack.c.b16 %v5098, %v5096
        %v5125 = vpack.c.b16 %v5099, %v5097
        %v5126 = vpack.c.b16 %v5102, %v5100
        %v5127 = vpack.c.b16 %v5103, %v5101
        %v5128 = vpack.c.b16 %v5106, %v5104
        %v5129 = vpack.c.b16 %v5107, %v5105
        %v5130 = vpack.c.b16 %v5110, %v5108
        %v5131 = vpack.c.b16 %v5111, %v5109
        %v5132 = vpack.c.b16 %v5114, %v5112
        %v5133 = vpack.c.b16 %v5115, %v5113
        %v5134 = vpack.c.b16 %v5118, %v5116
        %v5135 = vpack.c.b16 %v5119, %v5117
        %5152 = vmatprep.subr.bf16.mxu0 %v5121
        %5153 = vmatpush1.bf16.msra.mxu0 %v5120
        %5154 = vmatprep.subr.bf16.mxu0 %v5123
        %5155 = vmatpush1.bf16.msra.mxu0 %v5122
        %5156 = vmatprep.subr.bf16.mxu0 %v5125
        %5157 = vmatpush1.bf16.msra.mxu0 %v5124
        %5158 = vmatprep.subr.bf16.mxu0 %v5127
        %5159 = vmatpush1.bf16.msra.mxu0 %v5126
        %5160 = vmatprep.subr.bf16.mxu0 %v5129
        %5161 = vmatpush1.bf16.msra.mxu0 %v5128
        %5162 = vmatprep.subr.bf16.mxu0 %v5131
        %5163 = vmatpush1.bf16.msra.mxu0 %v5130
        %5164 = vmatprep.subr.bf16.mxu0 %v5133
        %5165 = vmatpush1.bf16.msra.mxu0 %v5132
        %5166 = vmatprep.subr.bf16.mxu0 %v5135
        %5167 = vmatpush1.bf16.msra.mxu0 %v5134
        %5168 = vmatprep.subr.bf16.mxu0 0
        %5169 = vmatpush1.bf16.msra.mxu0 0
        %5170 = vmatprep.subr.bf16.mxu0 0
        %5171 = vmatpush1.bf16.msra.mxu0 0
        %5172 = vmatprep.subr.bf16.mxu0 0
        %5173 = vmatpush1.bf16.msra.mxu0 0
        %5174 = vmatprep.subr.bf16.mxu0 0
        %5175 = vmatpush1.bf16.msra.mxu0 0
        %5176 = vmatprep.subr.bf16.mxu0 0
        %5177 = vmatpush1.bf16.msra.mxu0 0
        %5178 = vmatprep.subr.bf16.mxu0 0
        %5179 = vmatpush1.bf16.msra.mxu0 0
        %5180 = vmatprep.subr.bf16.mxu0 0
        %5181 = vmatpush1.bf16.msra.mxu0 0
        %5182 = vmatprep.subr.bf16.mxu0 0
        %5183 = vmatpush1.bf16.msra.mxu0 0
        %5184 = vmatprep.mubr.bf16.mxu0 0
        %5185 = vmatmul.mubr.bf16.gmra.mrb[0].mxu0 %v5055
        %v5186 = vpop.f32.mrb[0].mxu0
        %v5187 = vadd.f32 0.0, %v5186
        %v5188 = vpop.f32.mrb[0].mxu0
        %v5189 = vadd.f32 0.0, %v5188
        %v5190 = vpop.f32.mrb[0].mxu0
        %v5191 = vpop.f32.mrb[0].mxu0
        %5192 = vdwg.mxu0
        %v5193 = vld [vmem:[%s15] sm:$0xff]
        %v5194 = vld [vmem:[%s15 + $0x8] sm:$0xff]
        %v5195 = vld [vmem:[%s15 + $0x10] sm:$0xff]
        %v5196 = vld [vmem:[%s15 + $0x18] sm:$0xff]
        %v5197 = vld [vmem:[%s15 + $0x20] sm:$0xff]
        %v5198 = vld [vmem:[%s15 + $0x28] sm:$0xff]
        %v5199 = vld [vmem:[%s15 + $0x30] sm:$0xff]
        %v5200 = vld [vmem:[%s15 + $0x38] sm:$0xff]
        %v5201 = vld [vmem:[%s15 + $0x40] sm:$0xff]
        %v5202 = vld [vmem:[%s15 + $0x48] sm:$0xff]
        %v5203 = vld [vmem:[%s15 + $0x50] sm:$0xff]
        %v5204 = vld [vmem:[%s15 + $0x58] sm:$0xff]
        %v5205 = vld [vmem:[%s15 + $0x60] sm:$0xff]
        %v5206 = vld [vmem:[%s15 + $0x68] sm:$0xff]
        %v5207 = vld [vmem:[%s15 + $0x70] sm:$0xff]
        %v5208 = vld [vmem:[%s15 + $0x78] sm:$0xff]
        %v5225 = vunpack.c.l.b16 %v5193
        %v5226 = vunpack.c.h.b16 %v5193
        %v5227 = vunpack.c.l.b16 %v5194
        %v5228 = vunpack.c.h.b16 %v5194
        %v5229 = vunpack.c.l.b16 %v5195
        %v5230 = vunpack.c.h.b16 %v5195
        %v5231 = vunpack.c.l.b16 %v5196
        %v5232 = vunpack.c.h.b16 %v5196
        %v5233 = vunpack.c.l.b16 %v5197
        %v5234 = vunpack.c.h.b16 %v5197
        %v5235 = vunpack.c.l.b16 %v5198
        %v5236 = vunpack.c.h.b16 %v5198
        %v5237 = vunpack.c.l.b16 %v5199
        %v5238 = vunpack.c.h.b16 %v5199
        %v5239 = vunpack.c.l.b16 %v5200
        %v5240 = vunpack.c.h.b16 %v5200
        %v5241 = vunpack.c.l.b16 %v5201
        %v5242 = vunpack.c.h.b16 %v5201
        %v5243 = vunpack.c.l.b16 %v5202
        %v5244 = vunpack.c.h.b16 %v5202
        %v5245 = vunpack.c.l.b16 %v5203
        %v5246 = vunpack.c.h.b16 %v5203
        %v5247 = vunpack.c.l.b16 %v5204
        %v5248 = vunpack.c.h.b16 %v5204
        %v5249 = vunpack.c.l.b16 %v5205
        %v5250 = vunpack.c.h.b16 %v5205
        %v5251 = vunpack.c.l.b16 %v5206
        %v5252 = vunpack.c.h.b16 %v5206
        %v5253 = vunpack.c.l.b16 %v5207
        %v5254 = vunpack.c.h.b16 %v5207
        %v5255 = vunpack.c.l.b16 %v5208
        %v5256 = vunpack.c.h.b16 %v5208
        %v5257 = vpack.c.b16 %v5227, %v5225
        %v5258 = vpack.c.b16 %v5228, %v5226
        %v5259 = vpack.c.b16 %v5231, %v5229
        %v5260 = vpack.c.b16 %v5232, %v5230
        %v5261 = vpack.c.b16 %v5235, %v5233
        %v5262 = vpack.c.b16 %v5236, %v5234
        %v5263 = vpack.c.b16 %v5239, %v5237
        %v5264 = vpack.c.b16 %v5240, %v5238
        %v5265 = vpack.c.b16 %v5243, %v5241
        %v5266 = vpack.c.b16 %v5244, %v5242
        %v5267 = vpack.c.b16 %v5247, %v5245
        %v5268 = vpack.c.b16 %v5248, %v5246
        %v5269 = vpack.c.b16 %v5251, %v5249
        %v5270 = vpack.c.b16 %v5252, %v5250
        %v5271 = vpack.c.b16 %v5255, %v5253
        %v5272 = vpack.c.b16 %v5256, %v5254
        %5289 = vmatprep.subr.bf16.mxu0 %v5258
        %5290 = vmatpush1.bf16.msra.mxu0 %v5257
        %5291 = vmatprep.subr.bf16.mxu0 %v5260
        %5292 = vmatpush1.bf16.msra.mxu0 %v5259
        %5293 = vmatprep.subr.bf16.mxu0 %v5262
        %5294 = vmatpush1.bf16.msra.mxu0 %v5261
        %5295 = vmatprep.subr.bf16.mxu0 %v5264
        %5296 = vmatpush1.bf16.msra.mxu0 %v5263
        %5297 = vmatprep.subr.bf16.mxu0 %v5266
        %5298 = vmatpush1.bf16.msra.mxu0 %v5265
        %5299 = vmatprep.subr.bf16.mxu0 %v5268
        %5300 = vmatpush1.bf16.msra.mxu0 %v5267
        %5301 = vmatprep.subr.bf16.mxu0 %v5270
        %5302 = vmatpush1.bf16.msra.mxu0 %v5269
        %5303 = vmatprep.subr.bf16.mxu0 %v5272
        %5304 = vmatpush1.bf16.msra.mxu0 %v5271
        %5305 = vmatprep.subr.bf16.mxu0 0
        %5306 = vmatpush1.bf16.msra.mxu0 0
        %5307 = vmatprep.subr.bf16.mxu0 0
        %5308 = vmatpush1.bf16.msra.mxu0 0
        %5309 = vmatprep.subr.bf16.mxu0 0
        %5310 = vmatpush1.bf16.msra.mxu0 0
        %5311 = vmatprep.subr.bf16.mxu0 0
        %5312 = vmatpush1.bf16.msra.mxu0 0
        %5313 = vmatprep.subr.bf16.mxu0 0
        %5314 = vmatpush1.bf16.msra.mxu0 0
        %5315 = vmatprep.subr.bf16.mxu0 0
        %5316 = vmatpush1.bf16.msra.mxu0 0
        %5317 = vmatprep.subr.bf16.mxu0 0
        %5318 = vmatpush1.bf16.msra.mxu0 0
        %5319 = vmatprep.subr.bf16.mxu0 0
        %5320 = vmatpush1.bf16.msra.mxu0 0
        %5321 = vmatprep.mubr.bf16.mxu0 0
        %5322 = vmatmul.mubr.bf16.gmra.mrb[0].mxu0 %v5055
        %v5323 = vpop.f32.mrb[0].mxu0
        %v5324 = vadd.f32 0.0, %v5323
        %v5325 = vpop.f32.mrb[0].mxu0
        %v5326 = vadd.f32 0.0, %v5325
        %v5327 = vpop.f32.mrb[0].mxu0
        %v5328 = vpop.f32.mrb[0].mxu0
        %5329 = vdwg.mxu0
        %v5330 = vmul.f32 %v5324, 0.5
        %v5331 = vmul.f32 %v5326, 0.5
        %v5332 = vmul.f32 %v5324, 0.044715
        %v5333 = vmul.f32 %v5326, 0.044715
        %v5334 = vmul.f32 %v5332, %v5324
        %v5335 = vmul.f32 %v5333, %v5326
        %v5336 = vmul.f32 %v5334, %v5324
        %v5337 = vmul.f32 %v5335, %v5326
        %v5338 = vadd.f32 %v5324, %v5336
        %v5339 = vadd.f32 %v5326, %v5337
        %v5340 = vmul.f32 %v5338, 0.7978846
        %v5341 = vmul.f32 %v5339, 0.7978846
        %v5342 = vtanh.pop %v5340
        %v5343 = vtanh.pop %v5341
        %v5344 = vadd.f32 %v5342, 1.0
        %v5345 = vadd.f32 %v5343, 1.0
        %v5346 = vmul.f32 %v5330, %v5344
        %v5347 = vmul.f32 %v5331, %v5345
        %v5348 = vmul.f32 %v5187, %v5346
        %v5349 = vmul.f32 %v5189, %v5347
        %v5350 = vadd.f32 %v5348, %v5349
        %5351 = vadd.xlane.f32.xlu0 %v5350
        %v5352 = vpop.xlane.xlu0 %5351
        %v5353 = vrcp.pop 256.0
        %v5354 = vmul.f32 %v5352, %v5353
        %v5355 = vsub.f32 %v5348, %v5354
        %v5356 = vsub.f32 %v5349, %v5354
        %v5357 = vmul.f32 %v5355, %v5355
        %v5358 = vmul.f32 %v5356, %v5356
        %v5359 = vadd.f32 %v5357, %v5358
        %5360 = vadd.xlane.f32.xlu0 %v5359
        %v5361 = vpop.xlane.xlu0 %5360
        %v5362 = vmul.f32 %v5361, %v5353
        %v5363 = vadd.f32 %v5362, 1e-07
        %v5364 = vrsqrt.pop %v5363
        %v5365 = vmul.f32 %v5355, %v5364
        %v5366 = vmul.f32 %v5356, %v5364
        %v5367 = vpack.c.bf16 %v5365, %v5365
        %v5368 = vpack.c.bf16 %v5366, %v5366
        %v5369 = vld [vmem:[#allocation25] sm:$0xf]
        %v5370 = vld [vmem:[#allocation25 + $0x4] sm:$0xf]
        %v5371 = vld [vmem:[#allocation25 + $0x8] sm:$0xf]
        %v5372 = vld [vmem:[#allocation25 + $0xc] sm:$0xf]
        %v5373 = vld [vmem:[#allocation25 + $0x10] sm:$0xf]
        %v5374 = vld [vmem:[#allocation25 + $0x14] sm:$0xf]
        %v5375 = vld [vmem:[#allocation25 + $0x18] sm:$0xf]
        %v5376 = vld [vmem:[#allocation25 + $0x1c] sm:$0xf]
        %v5377 = vld [vmem:[#allocation25 + $0x20] sm:$0xf]
        %v5378 = vld [vmem:[#allocation25 + $0x24] sm:$0xf]
        %v5379 = vld [vmem:[#allocation25 + $0x28] sm:$0xf]
        %v5380 = vld [vmem:[#allocation25 + $0x2c] sm:$0xf]
        %v5381 = vld [vmem:[#allocation25 + $0x30] sm:$0xf]
        %v5382 = vld [vmem:[#allocation25 + $0x34] sm:$0xf]
        %v5383 = vld [vmem:[#allocation25 + $0x38] sm:$0xf]
        %v5384 = vld [vmem:[#allocation25 + $0x3c] sm:$0xf]
        %v5385 = vld [vmem:[#allocation25 + $0x40] sm:$0xf]
        %v5386 = vld [vmem:[#allocation25 + $0x44] sm:$0xf]
        %v5387 = vld [vmem:[#allocation25 + $0x48] sm:$0xf]
        %v5388 = vld [vmem:[#allocation25 + $0x4c] sm:$0xf]
        %v5389 = vld [vmem:[#allocation25 + $0x50] sm:$0xf]
        %v5390 = vld [vmem:[#allocation25 + $0x54] sm:$0xf]
        %v5391 = vld [vmem:[#allocation25 + $0x58] sm:$0xf]
        %v5392 = vld [vmem:[#allocation25 + $0x5c] sm:$0xf]
        %v5393 = vld [vmem:[#allocation25 + $0x60] sm:$0xf]
        %v5394 = vld [vmem:[#allocation25 + $0x64] sm:$0xf]
        %v5395 = vld [vmem:[#allocation25 + $0x68] sm:$0xf]
        %v5396 = vld [vmem:[#allocation25 + $0x6c] sm:$0xf]
        %v5397 = vld [vmem:[#allocation25 + $0x70] sm:$0xf]
        %v5398 = vld [vmem:[#allocation25 + $0x74] sm:$0xf]
        %v5399 = vld [vmem:[#allocation25 + $0x78] sm:$0xf]
        %v5400 = vld [vmem:[#allocation25 + $0x7c] sm:$0xf]
        %v5433 = vunpack.c.l.b16 %v5369
        %v5434 = vunpack.c.l.b16 %v5370
        %v5435 = vunpack.c.l.b16 %v5371
        %v5436 = vunpack.c.l.b16 %v5372
        %v5437 = vunpack.c.l.b16 %v5373
        %v5438 = vunpack.c.l.b16 %v5374
        %v5439 = vunpack.c.l.b16 %v5375
        %v5440 = vunpack.c.l.b16 %v5376
        %v5441 = vunpack.c.l.b16 %v5377
        %v5442 = vunpack.c.l.b16 %v5378
        %v5443 = vunpack.c.l.b16 %v5379
        %v5444 = vunpack.c.l.b16 %v5380
        %v5445 = vunpack.c.l.b16 %v5381
        %v5446 = vunpack.c.l.b16 %v5382
        %v5447 = vunpack.c.l.b16 %v5383
        %v5448 = vunpack.c.l.b16 %v5384
        %v5449 = vunpack.c.l.b16 %v5385
        %v5450 = vunpack.c.l.b16 %v5386
        %v5451 = vunpack.c.l.b16 %v5387
        %v5452 = vunpack.c.l.b16 %v5388
        %v5453 = vunpack.c.l.b16 %v5389
        %v5454 = vunpack.c.l.b16 %v5390
        %v5455 = vunpack.c.l.b16 %v5391
        %v5456 = vunpack.c.l.b16 %v5392
        %v5457 = vunpack.c.l.b16 %v5393
        %v5458 = vunpack.c.l.b16 %v5394
        %v5459 = vunpack.c.l.b16 %v5395
        %v5460 = vunpack.c.l.b16 %v5396
        %v5461 = vunpack.c.l.b16 %v5397
        %v5462 = vunpack.c.l.b16 %v5398
        %v5463 = vunpack.c.l.b16 %v5399
        %v5464 = vunpack.c.l.b16 %v5400
        %v5465 = vpack.c.b16 %v5434, %v5433
        %v5466 = vpack.c.b16 %v5436, %v5435
        %v5467 = vpack.c.b16 %v5438, %v5437
        %v5468 = vpack.c.b16 %v5440, %v5439
        %v5469 = vpack.c.b16 %v5442, %v5441
        %v5470 = vpack.c.b16 %v5444, %v5443
        %v5471 = vpack.c.b16 %v5446, %v5445
        %v5472 = vpack.c.b16 %v5448, %v5447
        %v5473 = vpack.c.b16 %v5450, %v5449
        %v5474 = vpack.c.b16 %v5452, %v5451
        %v5475 = vpack.c.b16 %v5454, %v5453
        %v5476 = vpack.c.b16 %v5456, %v5455
        %v5477 = vpack.c.b16 %v5458, %v5457
        %v5478 = vpack.c.b16 %v5460, %v5459
        %v5479 = vpack.c.b16 %v5462, %v5461
        %v5480 = vpack.c.b16 %v5464, %v5463
        %5497 = vmatprep.subr.bf16.mxu0 0
        %5498 = vmatpush1.bf16.msra.mxu0 %v5465
        %5499 = vmatprep.subr.bf16.mxu0 0
        %5500 = vmatpush1.bf16.msra.mxu0 %v5466
        %5501 = vmatprep.subr.bf16.mxu0 0
        %5502 = vmatpush1.bf16.msra.mxu0 %v5467
        %5503 = vmatprep.subr.bf16.mxu0 0
        %5504 = vmatpush1.bf16.msra.mxu0 %v5468
        %5505 = vmatprep.subr.bf16.mxu0 0
        %5506 = vmatpush1.bf16.msra.mxu0 %v5469
        %5507 = vmatprep.subr.bf16.mxu0 0
        %5508 = vmatpush1.bf16.msra.mxu0 %v5470
        %5509 = vmatprep.subr.bf16.mxu0 0
        %5510 = vmatpush1.bf16.msra.mxu0 %v5471
        %5511 = vmatprep.subr.bf16.mxu0 0
        %5512 = vmatpush1.bf16.msra.mxu0 %v5472
        %5513 = vmatprep.subr.bf16.mxu0 0
        %5514 = vmatpush1.bf16.msra.mxu0 %v5473
        %5515 = vmatprep.subr.bf16.mxu0 0
        %5516 = vmatpush1.bf16.msra.mxu0 %v5474
        %5517 = vmatprep.subr.bf16.mxu0 0
        %5518 = vmatpush1.bf16.msra.mxu0 %v5475
        %5519 = vmatprep.subr.bf16.mxu0 0
        %5520 = vmatpush1.bf16.msra.mxu0 %v5476
        %5521 = vmatprep.subr.bf16.mxu0 0
        %5522 = vmatpush1.bf16.msra.mxu0 %v5477
        %5523 = vmatprep.subr.bf16.mxu0 0
        %5524 = vmatpush1.bf16.msra.mxu0 %v5478
        %5525 = vmatprep.subr.bf16.mxu0 0
        %5526 = vmatpush1.bf16.msra.mxu0 %v5479
        %5527 = vmatprep.subr.bf16.mxu0 0
        %5528 = vmatpush1.bf16.msra.mxu0 %v5480
        %5529 = vmatprep.mubr.bf16.mxu0 %v5368
        %5530 = vmatmul.mubr.bf16.gmra.mrb[0].mxu0 %v5367
        %v5531 = vpop.f32.mrb[0].mxu0
        %v5532 = vadd.f32 0.0, %v5531
        %v5533 = vpop.f32.mrb[0].mxu0
        %v5534 = vpop.f32.mrb[0].mxu0
        %v5535 = vpop.f32.mrb[0].mxu0
        %5536 = vdwg.mxu0
        %v5537 = vadd.f32 %v5043, %v5532
        %5538 = vst [vmem:[%s773] sm:$0xff] %v5537
        %s5539 = sand.u32 %s418, 1
        %s5540 = scalar_lea.sflag [#allocation4], %s5539
        %s5541 = sand.u32 %s418, 1
        %s5542 = smul.addr %s5541, 8
        %s5543 = scalar_lea.vmem [#allocation26], %s5542
        // Predicated region
        $region149: #{tpu_custom_call.1} parent=87 // pred_check
          %p5544 = pneg %p428
        $region150: #{tpu_custom_call.1} parent=87 // pred_check_branch
          %5546 = sbr.rel (%p5544) target = $region152
        $region151: #{tpu_custom_call.1} parent=87 // pred_region
          %s5548 = ssub.s32 128, 128
          %5549 = vsyncadd %s5540, %s5548
          %s5550 = smul.addr %s43, 128
          %s5551 = scalar_lea.hbm %s17, %s5550
          %s5553 = sshll.u32 %s5543, 4
          %s5554 = int_to_ptr.vmem [resolvable:$true] %s5553
          %5556 = dma.vmem_to_hbm [thread:$0]  %s5554, 128, %s5551, %s5540
        $region152: #{tpu_custom_call.1} parent=87 // pred_fallthru
          _
      $region88: #{tpu_custom_call.1} parent=5 // pred_fallthru
        _
      %p5557 = scmp.le.s32.totalorder 2, %s38
      // Predicated region
      $region153: #{tpu_custom_call.1} parent=5 // pred_check
        %p5558 = pneg %p5557
      $region154: #{tpu_custom_call.1} parent=5 // pred_check_branch
        %5560 = sbr.rel (%p5558) target = $region156
      $region155: #{tpu_custom_call.1} parent=5 // pred_region
        %s5561 = ssub.s32 %s38, 2
        // Predicated region
        $region157: #{tpu_custom_call.1} parent=155 // pred_check
          %p5562 = pneg %p434
        $region158: #{tpu_custom_call.1} parent=155 // pred_check_branch
          %5564 = sbr.rel (%p5562) target = $region160
        $region159: #{tpu_custom_call.1} parent=155 // pred_region
          %s5565 = sand.u32 %s419, 1
          %s5566 = scalar_lea.sflag [#allocation4], %s5565
          %s5567 = sand.u32 %s419, 1
          %s5568 = smul.addr %s5567, 8
          %s5569 = scalar_lea.vmem [#allocation26], %s5568
          %5570 = dma.done %s5566, 128
        $region160: #{tpu_custom_call.1} parent=155 // pred_fallthru
          _
      $region156: #{tpu_custom_call.1} parent=5 // pred_fallthru
        _
    $region6: #{tpu_custom_call.1} parent=1 // loop_footer
      %s42 = sadd.s32 1, %s38
    $region7: #{tpu_custom_call.1} parent=1 // loop_footer_branch
      %37 = sbr.rel target = $region3
    $region8: #{tpu_custom_call.1} parent=1 // loop_exit
      _
    %5571 = vsyncpa [#allocation3], 1
    %s5572 = scalar_lea.sflag [#allocation3], 1
    %5573 = vsyncpa %s5572, 1
    %5574 = vsyncpa [#allocation6], 1
    %s5575 = scalar_lea.sflag [#allocation6], 1
    %5576 = vsyncpa %s5575, 1
    %5577 = vsyncpa [#allocation9], 1
    %5578 = vsyncpa [#allocation12], 1
    %5579 = vsyncpa [#allocation15], 1
    %5580 = vsyncpa [#allocation18], 1
    %5581 = vsyncpa [#allocation21], 1
    %5582 = vsyncpa [#allocation24], 1
    %5583 = vsyncpa [#allocation4], 1
    %s5584 = scalar_lea.sflag [#allocation4], 1
    %5585 = vsyncpa %s5584, 1

</llo_original>
